<compile_context>
chip_gen: v7x
topology: tpu7x:2x2x1
jax: 0.10.0
libtpu: 0.0.40
codegen_flags: <defaults>
</compile_context>

<pallas_src>
import functools
import math

import jax
import jax.numpy as jnp
from jax import lax
from jax.experimental import pallas as pl
from jax.experimental.pallas import tpu as pltpu


# --------------------------- generation-aware caps ---------------------------

def _tpu_generation():
    try:
        kind = jax.devices()[0].device_kind.lower()
    except Exception:
        return 6
    for ver in (7, 6, 5, 4):
        if f"v{ver}" in kind:
            return ver
    return 6


_GEN = _tpu_generation()
if _GEN >= 7:                       # v7x: 64 MiB VMEM per TC -> moderate tiles
    _TM_CAP, _TK_CAP, _TN_CAP = 256, 512, 512
    _VMEM_LIMIT = 40 * 1024 * 1024
else:                               # v5e / v6e: 128 MiB VMEM -> bigger tiles
    _TM_CAP, _TK_CAP, _TN_CAP = 512, 1024, 1024
    _VMEM_LIMIT = 64 * 1024 * 1024

_TSQ_CAP, _TSK_CAP = 256, 512       # attention tile caps
_LN_FUSE_MAX_N = 4096               # fuse add+LN into matmul epilogue if N <= this


# ------------------------------ small helpers --------------------------------

def _round_up(x, m):
    return (x + m - 1) // m * m


def _pad2(a, rows, cols):
    pr, pc = rows - a.shape[0], cols - a.shape[1]
    if pr == 0 and pc == 0:
        return a
    return jnp.pad(a, ((0, pr), (0, pc)))


def _div_tile(dim, base, cap):
    """Largest multiple of `base` <= cap that divides dim; falls back to full dim."""
    if dim <= cap or dim % base != 0:
        return dim
    t = (cap // base) * base
    while t > base and dim % t != 0:
        t -= base
    return t


# ----------------------------- matmul kernel ---------------------------------
# Tiled, software-pipelined bf16 MXU matmul with f32 VMEM accumulator.
# Optional epilogues: bias, ReLU, fused residual-add + LayerNorm (tn == N).

def _matmul_kernel(*refs, relu, has_bias, fuse_ln):
    i = 2
    x_ref, w_ref = refs[0], refs[1]
    b_ref = None
    if has_bias:
        b_ref = refs[i]
        i += 1
    if fuse_ln:
        r_ref, g_ref, be_ref = refs[i], refs[i + 1], refs[i + 2]
        i += 3
    o_ref, acc_ref = refs[i], refs[i + 1]

    @pl.when(pl.program_id(2) == 0)
    def _():
        acc_ref[...] = jnp.zeros_like(acc_ref)

    acc_ref[...] += jnp.dot(x_ref[...], w_ref[...],
                            preferred_element_type=jnp.float32)

    @pl.when(pl.program_id(2) == pl.num_programs(2) - 1)
    def _():
        y = acc_ref[...]                              # f32 epilogue (v5e-safe)
        if has_bias:
            y = y + b_ref[...].astype(jnp.float32)
        if relu:
            y = jnp.maximum(y, 0.0)
        if fuse_ln:
            y = y + r_ref[...].astype(jnp.float32)
            mu = jnp.mean(y, axis=-1, keepdims=True)
            var = jnp.mean(jnp.square(y - mu), axis=-1, keepdims=True)
            y = (y - mu) * lax.rsqrt(var + 1e-5)      # eps=1e-5, biased var (PyTorch)
            y = y * g_ref[...].astype(jnp.float32) + be_ref[...].astype(jnp.float32)
        o_ref[...] = y.astype(o_ref.dtype)


def linear(x2d, w, b=None, relu=False, residual=None, gamma=None, beta=None,
           out_dtype=jnp.bfloat16):
    """(M,K) @ (K,N) [+bias] [ReLU] [(+residual, LayerNorm)].

    M/K/N are padded to lane/sublane aligned tile multiples (robust for awkward
    dims such as vocab sizes) and the result is sliced back to (M, N)."""
    M, K = x2d.shape
    Kw, N = w.shape
    assert K == Kw
    fuse_ln = residual is not None
    has_bias = b is not None

    tm = min(_TM_CAP, _round_up(M, 8))
    tk = min(_TK_CAP, _round_up(K, 128))
    Mp, Kp = _round_up(M, tm), _round_up(K, tk)
    if fuse_ln:
        tn, Np = N, N                   # LayerNorm needs the full feature row
    else:
        tn = min(_TN_CAP, _round_up(N, 128))
        Np = _round_up(N, tn)

    x_p = _pad2(x2d, Mp, Kp)
    w_p = _pad2(w, Kp, Np)

    in_specs = [pl.BlockSpec((tm, tk), lambda i, j, k: (i, k)),
                pl.BlockSpec((tk, tn), lambda i, j, k: (k, j))]
    args = [x_p, w_p]
    if has_bias:
        args.append(_pad2(b, 1, Np))
        in_specs.append(pl.BlockSpec((1, tn), lambda i, j, k: (0, j)))
    if fuse_ln:
        args.extend([_pad2(residual, Mp, N), gamma, beta])
        in_specs.extend([pl.BlockSpec((tm, N), lambda i, j, k: (i, 0)),
                         pl.BlockSpec((1, N), lambda i, j, k: (0, 0)),
                         pl.BlockSpec((1, N), lambda i, j, k: (0, 0))])

    out = pl.pallas_call(
        functools.partial(_matmul_kernel, relu=relu, has_bias=has_bias,
                          fuse_ln=fuse_ln),
        out_shape=jax.ShapeDtypeStruct((Mp, Np), out_dtype),
        grid=(Mp // tm, Np // tn, Kp // tk),
        in_specs=in_specs,
        out_specs=pl.BlockSpec((tm, tn), lambda i, j, k: (i, j)),
        scratch_shapes=[pltpu.VMEM((tm, tn), jnp.float32)],
        compiler_params=pltpu.CompilerParams(
            dimension_semantics=("parallel", "parallel", "arbitrary"),
            vmem_limit_bytes=_VMEM_LIMIT),
    )(*args)
    if Mp != M or Np != N:
        out = out[:M, :N]
    return out


# -------------------- standalone residual + LayerNorm (fallback) -------------

def _add_ln_kernel(x_ref, r_ref, g_ref, b_ref, o_ref):
    x = x_ref[...].astype(jnp.float32) + r_ref[...].astype(jnp.float32)
    mu = jnp.mean(x, axis=-1, keepdims=True)
    var = jnp.mean(jnp.square(x - mu), axis=-1, keepdims=True)
    y = (x - mu) * lax.rsqrt(var + 1e-5)
    o_ref[...] = (y * g_ref[...] + b_ref[...]).astype(o_ref.dtype)


def add_layernorm(x2d, res2d, gamma, beta, out_dtype=jnp.bfloat16):
    M, D = x2d.shape
    tm = min(512, _round_up(M, 8))
    Mp = _round_up(M, tm)
    out = pl.pallas_call(
        _add_ln_kernel,
        out_shape=jax.ShapeDtypeStruct((Mp, D), out_dtype),
        grid=(Mp // tm,),
        in_specs=[pl.BlockSpec((tm, D), lambda i: (i, 0)),
                  pl.BlockSpec((tm, D), lambda i: (i, 0)),
                  pl.BlockSpec((1, D), lambda i: (0, 0)),
                  pl.BlockSpec((1, D), lambda i: (0, 0))],
        out_specs=pl.BlockSpec((tm, D), lambda i: (i, 0)),
        compiler_params=pltpu.CompilerParams(
            dimension_semantics=("parallel",), vmem_limit_bytes=_VMEM_LIMIT),
    )(_pad2(x2d, Mp, D), _pad2(res2d, Mp, D), gamma, beta)
    return out[:M] if Mp != M else out


def linear_add_ln(x2d, w, b, residual, gamma, beta, out_dtype=jnp.bfloat16):
    """Projection whose output dim == d_model, fused with residual + LayerNorm
    when the full row fits a single tile; otherwise falls back to two kernels."""
    if w.shape[1] <= _LN_FUSE_MAX_N:
        return linear(x2d, w, b, residual=residual, gamma=gamma, beta=beta,
                      out_dtype=out_dtype)
    y = linear(x2d, w, b, out_dtype=jnp.bfloat16)
    return add_layernorm(y, residual, gamma, beta, out_dtype=out_dtype)


# --------------------------- flash attention kernel ---------------------------
# grid = (B*H, q_tiles, kv_tiles); online softmax with VMEM scratch.

def _flash_kernel(*refs, scale, has_mask):
    if has_mask:
        q_ref, k_ref, v_ref, m_ref, o_ref, m_sc, l_sc, acc_sc = refs
    else:
        q_ref, k_ref, v_ref, o_ref, m_sc, l_sc, acc_sc = refs
        m_ref = None
    ki = pl.program_id(2)

    @pl.when(ki == 0)
    def _():
        m_sc[...] = jnp.full_like(m_sc, -1e30)
        l_sc[...] = jnp.zeros_like(l_sc)
        acc_sc[...] = jnp.zeros_like(acc_sc)

    q = q_ref[0, 0]                                   # (tSq, Dh) bf16
    k = k_ref[0, 0]                                   # (tSk, Dh) bf16
    v = v_ref[0, 0]                                   # (tSk, Dh) bf16
    # q @ k^T without materializing a transpose (contract dim 1 with dim 1).
    s = lax.dot_general(q, k, (((1,), (1,)), ((), ())),
                        preferred_element_type=jnp.float32) * scale
    if has_mask:
        s = s + m_ref[0].astype(jnp.float32)

    m_prev = m_sc[...]
    m_new = jnp.maximum(m_prev, jnp.max(s, axis=-1, keepdims=True))
    alpha = jnp.exp(m_prev - m_new)
    p = jnp.exp(s - m_new)
    l_sc[...] = alpha * l_sc[...] + jnp.sum(p, axis=-1, keepdims=True)
    acc_sc[...] = alpha * acc_sc[...] + jnp.dot(p.astype(v.dtype), v,
                                                preferred_element_type=jnp.float32)
    m_sc[...] = m_new

    @pl.when(ki == pl.num_programs(2) - 1)
    def _():
        l = l_sc[...]
        inv = jnp.where(l > 0.0, pl.reciprocal(l, approx=True), 0.0)
        o_ref[0] = (acc_sc[...] * inv).astype(o_ref.dtype)


def flash_attention(q_src, q_idx, k_src, k_idx, v_src, v_idx, mask=None,
                    out_dtype=jnp.bfloat16):
    """q_src: (Pq, B*H, Sq, Dh); k_src/v_src: (Pk, B*H, Sk, Dh).  The leading
    index selects the Q/K/V plane inside a fused projection output, so no XLA
    slice copies are needed.  Optional `mask` is a shared additive (Sq, Sk)."""
    _, BH, Sq, Dh = q_src.shape
    Sk = k_src.shape[2]
    scale = 1.0 / math.sqrt(Dh)
    has_mask = mask is not None

    # TODO(synk): awkward (non 8/128-multiple) very long S falls back to a full
    #             KV tile; padded+masked KV tiling would remove that cliff.
    tsq = _div_tile(Sq, 8, _TSQ_CAP)
    tsk = _div_tile(Sk, 128 if has_mask else 8, _TSK_CAP)

    in_specs = [
        pl.BlockSpec((1, 1, tsq, Dh), lambda bh, qi, ki, p=q_idx: (p, bh, qi, 0)),
        pl.BlockSpec((1, 1, tsk, Dh), lambda bh, qi, ki, p=k_idx: (p, bh, ki, 0)),
        pl.BlockSpec((1, 1, tsk, Dh), lambda bh, qi, ki, p=v_idx: (p, bh, ki, 0)),
    ]
    args = [q_src, k_src, v_src]
    if has_mask:
        # TODO(synk): only a single shared additive (Sq,Sk) mask is supported
        #             (no key_padding_mask / per-batch / per-head masks).
        if mask.dtype == jnp.bool_:
            mask = jnp.where(mask, jnp.float32(-1e9), jnp.float32(0.0))
        args.append(jnp.asarray(mask, jnp.bfloat16).reshape(1, Sq, Sk))
        in_specs.append(pl.BlockSpec((1, tsq, tsk), lambda bh, qi, ki: (0, qi, ki)))

    return pl.pallas_call(
        functools.partial(_flash_kernel, scale=scale, has_mask=has_mask),
        out_shape=jax.ShapeDtypeStruct((BH, Sq, Dh), out_dtype),
        grid=(BH, Sq // tsq, Sk // tsk),
        in_specs=in_specs,
        out_specs=pl.BlockSpec((1, tsq, Dh), lambda bh, qi, ki: (bh, qi, 0)),
        scratch_shapes=[pltpu.VMEM((tsq, 1), jnp.float32),
                        pltpu.VMEM((tsq, 1), jnp.float32),
                        pltpu.VMEM((tsq, Dh), jnp.float32)],
        compiler_params=pltpu.CompilerParams(
            dimension_semantics=("parallel", "parallel", "arbitrary"),
            vmem_limit_bytes=_VMEM_LIMIT),
    )(*args)


# ----------------------------- attention blocks -------------------------------

def mha_self(x, p, n_heads, mask):
    """Self-attention context, returned as (B*S, D) ready for the out-proj."""
    B, S, D = x.shape
    H, Dh = n_heads, D // n_heads
    qkv = linear(x.reshape(B * S, D), p["wqkv"])                 # fused QKV, no bias
    qkv = qkv.reshape(B, S, 3, H, Dh).transpose(2, 0, 3, 1, 4).reshape(3, B * H, S, Dh)
    ctx = flash_attention(qkv, 0, qkv, 1, qkv, 2, mask=mask)     # (B*H, S, Dh)
    return ctx.reshape(B, H, S, Dh).transpose(0, 2, 1, 3).reshape(B * S, D)


def mha_cross(x_q, memory, p, n_heads, mask):
    B, Sq, D = x_q.shape
    Sk = memory.shape[1]
    H, Dh = n_heads, D // n_heads
    q = linear(x_q.reshape(B * Sq, D), p["wq"])
    q = q.reshape(B, Sq, H, Dh).transpose(0, 2, 1, 3).reshape(1, B * H, Sq, Dh)
    kv = linear(memory.reshape(B * Sk, D), p["wkv"])             # fused KV, no bias
    kv = kv.reshape(B, Sk, 2, H, Dh).transpose(2, 0, 3, 1, 4).reshape(2, B * H, Sk, Dh)
    ctx = flash_attention(q, 0, kv, 0, kv, 1, mask=mask)         # (B*H, Sq, Dh)
    return ctx.reshape(B, H, Sq, Dh).transpose(0, 2, 1, 3).reshape(B * Sq, D)


# ----------------------------- transformer layers -----------------------------
# TODO(synk): Encoder/Decoder internals are not given in the spec; standard
#             post-LN (attn -> add&norm -> FFN -> add&norm) layers are assumed.

def encoder_layer(x, p, n_heads, src_mask):
    B, S, D = x.shape
    x2d = x.reshape(B * S, D)
    ctx = mha_self(x, p["self_attn"], n_heads, src_mask)
    x1 = linear_add_ln(ctx, p["self_attn"]["wo"], None, x2d,
                       p["ln1_g"], p["ln1_b"])                   # out-proj + add + LN
    ff = linear(x1, p["w1"], p["b1"], relu=True)
    x2 = linear_add_ln(ff, p["w2"], p["b2"], x1, p["ln2_g"], p["ln2_b"])
    return x2.reshape(B, S, D)


def decoder_layer(y, memory, p, n_heads, src_mask, tgt_mask):
    B, S, D = y.shape
    y2d = y.reshape(B * S, D)
    sa = mha_self(y, p["self_attn"], n_heads, tgt_mask)
    y1 = linear_add_ln(sa, p["self_attn"]["wo"], None, y2d,
                       p["ln1_g"], p["ln1_b"])
    ca = mha_cross(y1.reshape(B, S, D), memory, p["cross_attn"], n_heads, src_mask)
    y2 = linear_add_ln(ca, p["cross_attn"]["wo"], None, y1,
                       p["ln2_g"], p["ln2_b"])
    ff = linear(y2, p["w1"], p["b1"], relu=True)
    y3 = linear_add_ln(ff, p["w2"], p["b2"], y2, p["ln3_g"], p["ln3_b"])
    return y3.reshape(B, S, D)


# ------------------------------- embeddings -----------------------------------

def sinusoidal_pe(max_len, d_model):
    pos = jnp.arange(max_len, dtype=jnp.float32)[:, None]
    i = jnp.arange(0, d_model, 2, dtype=jnp.float32)[None, :]
    angle = pos / jnp.power(10000.0, i / d_model)
    pe = jnp.zeros((max_len, d_model), jnp.float32)
    pe = pe.at[:, 0::2].set(jnp.sin(angle))
    pe = pe.at[:, 1::2].set(jnp.cos(angle))
    return pe


def embed(ids, tok_emb, pos_enc, d_model):
    # TODO(synk): TransformerEmbedding internals not given; assuming
    #             token_emb(ids) * sqrt(d_model) + sinusoidal PE.  The gather
    #             stays in plain JAX (no clean Pallas equivalent without a
    #             dedicated DMA-gather kernel).
    S = ids.shape[1]
    e = tok_emb[ids] * jnp.float32(math.sqrt(d_model)) + pos_enc[None, :S, :]
    return e.astype(jnp.bfloat16)


# ------------------------------- full forward ----------------------------------

def transformer_forward(params, cfg, src, tgt, src_mask=None, tgt_mask=None):
    d_model, n_heads, vocab = cfg["d_model"], cfg["n_heads"], cfg["vocab_size"]
    # dropout = 0.0 -> identity (eval semantics)
    x = embed(src, params["tok_emb"], params["pos_enc"], d_model)
    for p in params["enc_layers"]:
        x = encoder_layer(x, p, n_heads, src_mask)
    memory = x
    y = embed(tgt, params["tok_emb"], params["pos_enc"], d_model)
    for p in params["dec_layers"]:
        y = decoder_layer(y, memory, p, n_heads, src_mask, tgt_mask)
    B, St, D = y.shape
    # tied output head (bias=False, weight = token embedding), pre-transposed once
    logits = linear(y.reshape(B * St, D), params["out_w"], b=None,
                    out_dtype=jnp.float32)
    return logits.reshape(B, St, vocab)


# ----------------------------- deterministic init ------------------------------
# Attention projection biases are identically zero -> dropped entirely.

def _init_attn_self(key, d_model):
    ks = jax.random.split(key, 4)
    s = 0.02
    wq, wk, wv, wo = (s * jax.random.normal(k, (d_model, d_model), jnp.float32)
                      for k in ks)
    return {
        "wqkv": jnp.concatenate([wq, wk, wv], axis=1).astype(jnp.bfloat16),
        "wo": wo.astype(jnp.bfloat16),
    }


def _init_attn_cross(key, d_model):
    ks = jax.random.split(key, 4)
    s = 0.02
    wq, wk, wv, wo = (s * jax.random.normal(k, (d_model, d_model), jnp.float32)
                      for k in ks)
    return {
        "wq": wq.astype(jnp.bfloat16),
        "wkv": jnp.concatenate([wk, wv], axis=1).astype(jnp.bfloat16),
        "wo": wo.astype(jnp.bfloat16),
    }


def _ffn_ln(keys, d_model, d_ff, n_ln):
    s = 0.02
    p = {
        "w1": (s * jax.random.normal(keys[0], (d_model, d_ff), jnp.float32)).astype(jnp.bfloat16),
        "b1": jnp.zeros((1, d_ff), jnp.float32),
        "w2": (s * jax.random.normal(keys[1], (d_ff, d_model), jnp.float32)).astype(jnp.bfloat16),
        "b2": jnp.zeros((1, d_model), jnp.float32),
    }
    for i in range(1, n_ln + 1):
        p[f"ln{i}_g"] = jnp.ones((1, d_model), jnp.float32)
        p[f"ln{i}_b"] = jnp.zeros((1, d_model), jnp.float32)
    return p


def _init_enc_layer(key, d_model, d_ff):
    ks = jax.random.split(key, 3)
    p = {"self_attn": _init_attn_self(ks[0], d_model)}
    p.update(_ffn_ln(ks[1:], d_model, d_ff, n_ln=2))
    return p


def _init_dec_layer(key, d_model, d_ff):
    ks = jax.random.split(key, 4)
    p = {"self_attn": _init_attn_self(ks[0], d_model),
         "cross_attn": _init_attn_cross(ks[1], d_model)}
    p.update(_ffn_ln(ks[2:], d_model, d_ff, n_ln=3))
    return p


def init_params(key, cfg):
    n_enc, n_dec = cfg["num_encoder_layers"], cfg["num_decoder_layers"]
    keys = jax.random.split(key, 1 + n_enc + n_dec)
    tok_emb = 0.02 * jax.random.normal(
        keys[0], (cfg["vocab_size"], cfg["d_model"]), jnp.float32)
    return {
        "tok_emb": tok_emb,                               # f32 gather table (tied)
        "out_w": tok_emb.T.astype(jnp.bfloat16),          # tied head, transposed once
        "pos_enc": sinusoidal_pe(cfg["max_len"], cfg["d_model"]),
        "enc_layers": [_init_enc_layer(keys[1 + i], cfg["d_model"],
                                       cfg["dim_feedforward"]) for i in range(n_enc)],
        "dec_layers": [_init_dec_layer(keys[1 + n_enc + i], cfg["d_model"],
                                       cfg["dim_feedforward"]) for i in range(n_dec)],
    }


# ----------------------------------- main --------------------------------------

if __name__ == "__main__":
    cfg = dict(vocab_size=64, d_model=32, n_heads=4,
               num_encoder_layers=2, num_decoder_layers=2,
               dim_feedforward=64, dropout=0.0, max_len=16)

    key = jax.random.PRNGKey(0)
    k_param, k_src, k_tgt = jax.random.split(key, 3)
    params = init_params(k_param, cfg)

    B, S_src, S_tgt = 2, 8, 8
    src = jax.random.randint(k_src, (B, S_src), 0, cfg["vocab_size"], dtype=jnp.int32)
    tgt = jax.random.randint(k_tgt, (B, S_tgt), 0, cfg["vocab_size"], dtype=jnp.int32)

    fwd = jax.jit(lambda prm, s, t: transformer_forward(prm, cfg, s, t,
                                                        src_mask=None, tgt_mask=None))
    logits = jax.block_until_ready(fwd(params, src, tgt))

    assert logits.shape == (B, S_tgt, cfg["vocab_size"])
    assert bool(jnp.all(jnp.isfinite(logits)))
    print("KERNEL_OK")
</pallas_src>

<mosaic_0001>
module attributes {stable_mosaic.version = 11 : i64} {
  func.func @_matmul_kernel(%arg0: i32, %arg1: i32, %arg2: i32, %arg3: memref<16x128xbf16, #tpu.memory_space<vmem>>, %arg4: memref<128x128xbf16, #tpu.memory_space<vmem>>, %arg5: memref<16x128xbf16, #tpu.memory_space<vmem>>, %arg6: memref<16x128xf32, #tpu.memory_space<vmem>>) attributes {dimension_semantics = [#tpu.dimension_semantics<parallel>, #tpu.dimension_semantics<parallel>, #tpu.dimension_semantics<arbitrary>], iteration_bounds = array<i64: 1, 1, 1>, scalar_prefetch = 0 : i64, scratch_operands = 1 : i64, tpu.core_type = #tpu.core_type<tc>, window_params = [{transform_indices = @transform_0, window_bounds = array<i64: 16, 128>}, {transform_indices = @transform_1, window_bounds = array<i64: 128, 128>}, {transform_indices = @transform_2, window_bounds = array<i64: 16, 128>}]} {
    %c0_i32 = arith.constant 0 : i32
    %0 = arith.cmpi eq, %arg2, %c0_i32 : i32
    %1 = arith.extui %0 : i1 to i32
    %c0_i32_0 = arith.constant 0 : i32
    %2 = arith.cmpi ne, %1, %c0_i32_0 : i32
    scf.if %2 {
      %cst_10 = arith.constant 0.000000e+00 : f32
      %12 = vector.broadcast %cst_10 : f32 to vector<16x128xf32>
      %c0_11 = arith.constant 0 : index
      %c0_12 = arith.constant 0 : index
      %13 = vector.load %arg6[%c0_11, %c0_12] : memref<16x128xf32, #tpu.memory_space<vmem>>, vector<16x128xf32>
      tpu.vector_store %arg6[%c0_11, %c0_12], %12 {strides = array<i32>} : memref<16x128xf32, #tpu.memory_space<vmem>>, vector<16x128xf32>,
    } else {
    }
    %c0 = arith.constant 0 : index
    %c0_1 = arith.constant 0 : index
    %3 = vector.load %arg6[%c0, %c0_1] : memref<16x128xf32, #tpu.memory_space<vmem>>, vector<16x128xf32>
    %c0_2 = arith.constant 0 : index
    %c0_3 = arith.constant 0 : index
    %4 = vector.load %arg3[%c0_2, %c0_3] : memref<16x128xbf16, #tpu.memory_space<vmem>>, vector<16x128xbf16>
    %c0_4 = arith.constant 0 : index
    %c0_5 = arith.constant 0 : index
    %5 = vector.load %arg4[%c0_4, %c0_5] : memref<128x128xbf16, #tpu.memory_space<vmem>>, vector<128x128xbf16>
    %cst = arith.constant dense<0.000000e+00> : vector<16x128xf32>
    %6 = tpu.matmul %4, %5, %cst {dimension_numbers = #tpu.dot_dimension_numbers<[1], [0], [0], [1], [0, 0, 1, 1], [], []>} : vector<16x128xbf16>, vector<128x128xbf16>, vector<16x128xf32> -> vector<16x128xf32>
    %7 = arith.addf %3, %6 : vector<16x128xf32>
    %c0_6 = arith.constant 0 : index
    %c0_7 = arith.constant 0 : index
    %8 = vector.load %arg6[%c0_6, %c0_7] : memref<16x128xf32, #tpu.memory_space<vmem>>, vector<16x128xf32>
    tpu.vector_store %arg6[%c0_6, %c0_7], %7 {strides = array<i32>} : memref<16x128xf32, #tpu.memory_space<vmem>>, vector<16x128xf32>,
    %c0_i32_8 = arith.constant 0 : i32
    %9 = arith.cmpi eq, %arg2, %c0_i32_8 : i32
    %10 = arith.extui %9 : i1 to i32
    %c0_i32_9 = arith.constant 0 : i32
    %11 = arith.cmpi ne, %10, %c0_i32_9 : i32
    scf.if %11 {
      %c0_10 = arith.constant 0 : index
      %c0_11 = arith.constant 0 : index
      %12 = vector.load %arg6[%c0_10, %c0_11] : memref<16x128xf32, #tpu.memory_space<vmem>>, vector<16x128xf32>
      %13 = arith.truncf %12 : vector<16x128xf32> to vector<16x128xbf16>
      %c0_12 = arith.constant 0 : index
      %c0_13 = arith.constant 0 : index
      %14 = vector.load %arg5[%c0_12, %c0_13] : memref<16x128xbf16, #tpu.memory_space<vmem>>, vector<16x128xbf16>
      tpu.vector_store %arg5[%c0_12, %c0_13], %13 {strides = array<i32>} : memref<16x128xbf16, #tpu.memory_space<vmem>>, vector<16x128xbf16>,
    } else {
    }
    return
  }
  func.func @transform_0(%arg0: i32, %arg1: i32, %arg2: i32) -> (i32, i32) {
    %c0_i32 = arith.constant 0 : i32
    return %arg0, %arg2 : i32, i32
  }
  func.func @transform_1(%arg0: i32, %arg1: i32, %arg2: i32) -> (i32, i32) {
    %c0_i32 = arith.constant 0 : i32
    return %arg2, %arg1 : i32, i32
  }
  func.func @transform_2(%arg0: i32, %arg1: i32, %arg2: i32) -> (i32, i32) {
    %c0_i32 = arith.constant 0 : i32
    return %arg0, %arg1 : i32, i32
  }
}

module attributes {stable_mosaic.version = 11 : i64} {
  func.func @_flash_kernel(%arg0: i32, %arg1: i32, %arg2: i32, %arg3: memref<1x1x8x8xbf16, #tpu.memory_space<vmem>>, %arg4: memref<1x1x8x8xbf16, #tpu.memory_space<vmem>>, %arg5: memref<1x1x8x8xbf16, #tpu.memory_space<vmem>>, %arg6: memref<1x8x8xbf16, #tpu.memory_space<vmem>>, %arg7: memref<8x1xf32, #tpu.memory_space<vmem>>, %arg8: memref<8x1xf32, #tpu.memory_space<vmem>>, %arg9: memref<8x8xf32, #tpu.memory_space<vmem>>) attributes {dimension_semantics = [#tpu.dimension_semantics<parallel>, #tpu.dimension_semantics<parallel>, #tpu.dimension_semantics<arbitrary>], iteration_bounds = array<i64: 8, 1, 1>, scalar_prefetch = 0 : i64, scratch_operands = 3 : i64, tpu.core_type = #tpu.core_type<tc>, window_params = [{transform_indices = @transform_0, window_bounds = array<i64: 1, 1, 8, 8>}, {transform_indices = @transform_1, window_bounds = array<i64: 1, 1, 8, 8>}, {transform_indices = @transform_2, window_bounds = array<i64: 1, 1, 8, 8>}, {transform_indices = @transform_3, window_bounds = array<i64: 1, 8, 8>}]} {
    %c0_i32 = arith.constant 0 : i32
    %0 = arith.cmpi eq, %arg2, %c0_i32 : i32
    %1 = arith.extui %0 : i1 to i32
    %c0_i32_0 = arith.constant 0 : i32
    %2 = arith.cmpi ne, %1, %c0_i32_0 : i32
    scf.if %2 {
      %cst_30 = arith.constant -1.000000e+30 : f32
      %38 = vector.broadcast %cst_30 : f32 to vector<8x1xf32>
      %c0_31 = arith.constant 0 : index
      %c0_32 = arith.constant 0 : index
      %39 = vector.load %arg7[%c0_31, %c0_32] : memref<8x1xf32, #tpu.memory_space<vmem>>, vector<8x1xf32>
      tpu.vector_store %arg7[%c0_31, %c0_32], %38 {strides = array<i32>} : memref<8x1xf32, #tpu.memory_space<vmem>>, vector<8x1xf32>,
      %cst_33 = arith.constant 0.000000e+00 : f32
      %40 = vector.broadcast %cst_33 : f32 to vector<8x1xf32>
      %c0_34 = arith.constant 0 : index
      %c0_35 = arith.constant 0 : index
      %41 = vector.load %arg8[%c0_34, %c0_35] : memref<8x1xf32, #tpu.memory_space<vmem>>, vector<8x1xf32>
      tpu.vector_store %arg8[%c0_34, %c0_35], %40 {strides = array<i32>} : memref<8x1xf32, #tpu.memory_space<vmem>>, vector<8x1xf32>,
      %cst_36 = arith.constant 0.000000e+00 : f32
      %42 = vector.broadcast %cst_36 : f32 to vector<8x8xf32>
      %c0_37 = arith.constant 0 : index
      %c0_38 = arith.constant 0 : index
      %43 = vector.load %arg9[%c0_37, %c0_38] : memref<8x8xf32, #tpu.memory_space<vmem>>, vector<8x8xf32>
      tpu.vector_store %arg9[%c0_37, %c0_38], %42 {strides = array<i32>} : memref<8x8xf32, #tpu.memory_space<vmem>>, vector<8x8xf32>,
    } else {
    }
    %c0 = arith.constant 0 : index
    %c0_1 = arith.constant 0 : index
    %c0_2 = arith.constant 0 : index
    %c0_3 = arith.constant 0 : index
    %3 = vector.load %arg3[%c0, %c0_1, %c0_2, %c0_3] : memref<1x1x8x8xbf16, #tpu.memory_space<vmem>>, vector<1x1x8x8xbf16>
    %4 = vector.shape_cast %3 : vector<1x1x8x8xbf16> to vector<8x8xbf16>
    %c0_4 = arith.constant 0 : index
    %c0_5 = arith.constant 0 : index
    %c0_6 = arith.constant 0 : index
    %c0_7 = arith.constant 0 : index
    %5 = vector.load %arg4[%c0_4, %c0_5, %c0_6, %c0_7] : memref<1x1x8x8xbf16, #tpu.memory_space<vmem>>, vector<1x1x8x8xbf16>
    %6 = vector.shape_cast %5 : vector<1x1x8x8xbf16> to vector<8x8xbf16>
    %c0_8 = arith.constant 0 : index
    %c0_9 = arith.constant 0 : index
    %c0_10 = arith.constant 0 : index
    %c0_11 = arith.constant 0 : index
    %7 = vector.load %arg5[%c0_8, %c0_9, %c0_10, %c0_11] : memref<1x1x8x8xbf16, #tpu.memory_space<vmem>>, vector<1x1x8x8xbf16>
    %8 = vector.shape_cast %7 : vector<1x1x8x8xbf16> to vector<8x8xbf16>
    %cst = arith.constant dense<0.000000e+00> : vector<8x8xf32>
    %9 = tpu.matmul %4, %6, %cst {dimension_numbers = #tpu.dot_dimension_numbers<[1], [1], [0], [0], [0, 0, 1, 0], [], []>} : vector<8x8xbf16>, vector<8x8xbf16>, vector<8x8xf32> -> vector<8x8xf32>
    %cst_12 = arith.constant 0.353553385 : f32
    %10 = vector.broadcast %cst_12 : f32 to vector<8x8xf32>
    %11 = arith.mulf %9, %10 : vector<8x8xf32>
    %c0_13 = arith.constant 0 : index
    %c0_14 = arith.constant 0 : index
    %12 = vector.load %arg7[%c0_13, %c0_14] : memref<8x1xf32, #tpu.memory_space<vmem>>, vector<8x1xf32>
    %cst_15 = arith.constant dense<0xFF800000> : vector<8xf32>
    %13 = vector.multi_reduction <maximumf>, %11, %cst_15 [1] : vector<8x8xf32> to vector<8xf32>
    %14 = vector.shape_cast %13 : vector<8xf32> to vector<8x1xf32>
    %15 = arith.maximumf %12, %14 : vector<8x1xf32>
    %16 = arith.subf %12, %15 : vector<8x1xf32>
    %17 = math.exp %16 : vector<8x1xf32>
    %18 = vector.broadcast %15 : vector<8x1xf32> to vector<8x8xf32>
    %19 = arith.subf %11, %18 : vector<8x8xf32>
    %20 = math.exp %19 : vector<8x8xf32>
    %c0_16 = arith.constant 0 : index
    %c0_17 = arith.constant 0 : index
    %21 = vector.load %arg8[%c0_16, %c0_17] : memref<8x1xf32, #tpu.memory_space<vmem>>, vector<8x1xf32>
    %22 = arith.mulf %17, %21 : vector<8x1xf32>
    %cst_18 = arith.constant dense<0.000000e+00> : vector<8xf32>
    %23 = vector.multi_reduction <add>, %20, %cst_18 [1] : vector<8x8xf32> to vector<8xf32>
    %24 = vector.shape_cast %23 : vector<8xf32> to vector<8x1xf32>
    %25 = arith.addf %22, %24 : vector<8x1xf32>
    %c0_19 = arith.constant 0 : index
    %c0_20 = arith.constant 0 : index
    %26 = vector.load %arg8[%c0_19, %c0_20] : memref<8x1xf32, #tpu.memory_space<vmem>>, vector<8x1xf32>
    tpu.vector_store %arg8[%c0_19, %c0_20], %25 {strides = array<i32>} : memref<8x1xf32, #tpu.memory_space<vmem>>, vector<8x1xf32>,
    %c0_21 = arith.constant 0 : index
    %c0_22 = arith.constant 0 : index
    %27 = vector.load %arg9[%c0_21, %c0_22] : memref<8x8xf32, #tpu.memory_space<vmem>>, vector<8x8xf32>
    %28 = vector.broadcast %17 : vector<8x1xf32> to vector<8x8xf32>
    %29 = arith.mulf %28, %27 : vector<8x8xf32>
    %30 = arith.truncf %20 : vector<8x8xf32> to vector<8x8xbf16>
    %cst_23 = arith.constant dense<0.000000e+00> : vector<8x8xf32>
    %31 = tpu.matmul %30, %8, %cst_23 {dimension_numbers = #tpu.dot_dimension_numbers<[1], [0], [0], [1], [0, 0, 1, 1], [], []>} : vector<8x8xbf16>, vector<8x8xbf16>, vector<8x8xf32> -> vector<8x8xf32>
    %32 = arith.addf %29, %31 : vector<8x8xf32>
    %c0_24 = arith.constant 0 : index
    %c0_25 = arith.constant 0 : index
    %33 = vector.load %arg9[%c0_24, %c0_25] : memref<8x8xf32, #tpu.memory_space<vmem>>, vector<8x8xf32>
    tpu.vector_store %arg9[%c0_24, %c0_25], %32 {strides = array<i32>} : memref<8x8xf32, #tpu.memory_space<vmem>>, vector<8x8xf32>,
    %c0_26 = arith.constant 0 : index
    %c0_27 = arith.constant 0 : index
    %34 = vector.load %arg7[%c0_26, %c0_27] : memref<8x1xf32, #tpu.memory_space<vmem>>, vector<8x1xf32>
    tpu.vector_store %arg7[%c0_26, %c0_27], %15 {strides = array<i32>} : memref<8x1xf32, #tpu.memory_space<vmem>>, vector<8x1xf32>,
    %c0_i32_28 = arith.constant 0 : i32
    %35 = arith.cmpi eq, %arg2, %c0_i32_28 : i32
    %36 = arith.extui %35 : i1 to i32
    %c0_i32_29 = arith.constant 0 : i32
    %37 = arith.cmpi ne, %36, %c0_i32_29 : i32
    scf.if %37 {
      %c0_30 = arith.constant 0 : index
      %c0_31 = arith.constant 0 : index
      %38 = vector.load %arg8[%c0_30, %c0_31] : memref<8x1xf32, #tpu.memory_space<vmem>>, vector<8x1xf32>
      %cst_32 = arith.constant 0.000000e+00 : f32
      %39 = vector.broadcast %cst_32 : f32 to vector<8x1xf32>
      %40 = arith.cmpf ogt, %38, %39 : vector<8x1xf32>
      %41 = tpu.reciprocal %38 {approx = true} : vector<8x1xf32> -> vector<8x1xf32>
      %cst_33 = arith.constant 0.000000e+00 : f32
      %42 = vector.broadcast %cst_33 : f32 to vector<8x1xf32>
      %43 = arith.select %40, %41, %42 : vector<8x1xi1>, vector<8x1xf32>
      %c0_34 = arith.constant 0 : index
      %c0_35 = arith.constant 0 : index
      %44 = vector.load %arg9[%c0_34, %c0_35] : memref<8x8xf32, #tpu.memory_space<vmem>>, vector<8x8xf32>
      %45 = vector.broadcast %43 : vector<8x1xf32> to vector<8x8xf32>
      %46 = arith.mulf %44, %45 : vector<8x8xf32>
      %47 = arith.truncf %46 : vector<8x8xf32> to vector<8x8xbf16>
      %c0_36 = arith.constant 0 : index
      %c0_37 = arith.constant 0 : index
      %c0_38 = arith.constant 0 : index
      %48 = vector.load %arg6[%c0_36, %c0_37, %c0_38] : memref<1x8x8xbf16, #tpu.memory_space<vmem>>, vector<1x8x8xbf16>
      %49 = vector.shape_cast %48 : vector<1x8x8xbf16> to vector<8x8xbf16>
      %50 = vector.shape_cast %47 : vector<8x8xbf16> to vector<1x8x8xbf16>
      tpu.vector_store %arg6[%c0_36, %c0_37, %c0_38], %50 {strides = array<i32>} : memref<1x8x8xbf16, #tpu.memory_space<vmem>>, vector<1x8x8xbf16>,
    } else {
    }
    return
  }
  func.func @transform_0(%arg0: i32, %arg1: i32, %arg2: i32) -> (i32, i32, i32, i32) {
    %c0_i32 = arith.constant 0 : i32
    %c0_i32_0 = arith.constant 0 : i32
    %c0_i32_1 = arith.constant 0 : i32
    return %c0_i32, %arg0, %arg1, %c0_i32_0 : i32, i32, i32, i32
  }
  func.func @transform_1(%arg0: i32, %arg1: i32, %arg2: i32) -> (i32, i32, i32, i32) {
    %c1_i32 = arith.constant 1 : i32
    %c0_i32 = arith.constant 0 : i32
    %c0_i32_0 = arith.constant 0 : i32
    return %c1_i32, %arg0, %arg2, %c0_i32 : i32, i32, i32, i32
  }
  func.func @transform_2(%arg0: i32, %arg1: i32, %arg2: i32) -> (i32, i32, i32, i32) {
    %c2_i32 = arith.constant 2 : i32
    %c0_i32 = arith.constant 0 : i32
    %c0_i32_0 = arith.constant 0 : i32
    return %c2_i32, %arg0, %arg2, %c0_i32 : i32, i32, i32, i32
  }
  func.func @transform_3(%arg0: i32, %arg1: i32, %arg2: i32) -> (i32, i32, i32) {
    %c0_i32 = arith.constant 0 : i32
    %c0_i32_0 = arith.constant 0 : i32
    return %arg0, %arg1, %c0_i32 : i32, i32, i32
  }
}

module attributes {stable_mosaic.version = 11 : i64} {
  func.func @_matmul_kernel(%arg0: i32, %arg1: i32, %arg2: i32, %arg3: memref<16x128xbf16, #tpu.memory_space<vmem>>, %arg4: memref<128x32xbf16, #tpu.memory_space<vmem>>, %arg5: memref<16x32xbf16, #tpu.memory_space<vmem>>, %arg6: memref<1x32xf32, #tpu.memory_space<vmem>>, %arg7: memref<1x32xf32, #tpu.memory_space<vmem>>, %arg8: memref<16x32xbf16, #tpu.memory_space<vmem>>, %arg9: memref<16x32xf32, #tpu.memory_space<vmem>>) attributes {dimension_semantics = [#tpu.dimension_semantics<parallel>, #tpu.dimension_semantics<parallel>, #tpu.dimension_semantics<arbitrary>], iteration_bounds = array<i64: 1, 1, 1>, scalar_prefetch = 0 : i64, scratch_operands = 1 : i64, tpu.core_type = #tpu.core_type<tc>, window_params = [{transform_indices = @transform_0, window_bounds = array<i64: 16, 128>}, {transform_indices = @transform_1, window_bounds = array<i64: 128, 32>}, {transform_indices = @transform_2, window_bounds = array<i64: 16, 32>}, {pipeline_mode = #tpu.pipeline_mode<synchronous>, transform_indices = @transform_3, window_bounds = array<i64: 1, 32>}, {pipeline_mode = #tpu.pipeline_mode<synchronous>, transform_indices = @transform_4, window_bounds = array<i64: 1, 32>}, {transform_indices = @transform_5, window_bounds = array<i64: 16, 32>}]} {
    %c0_i32 = arith.constant 0 : i32
    %0 = arith.cmpi eq, %arg2, %c0_i32 : i32
    %1 = arith.extui %0 : i1 to i32
    %c0_i32_0 = arith.constant 0 : i32
    %2 = arith.cmpi ne, %1, %c0_i32_0 : i32
    scf.if %2 {
      %cst_10 = arith.constant 0.000000e+00 : f32
      %12 = vector.broadcast %cst_10 : f32 to vector<16x32xf32>
      %c0_11 = arith.constant 0 : index
      %c0_12 = arith.constant 0 : index
      %13 = vector.load %arg9[%c0_11, %c0_12] : memref<16x32xf32, #tpu.memory_space<vmem>>, vector<16x32xf32>
      tpu.vector_store %arg9[%c0_11, %c0_12], %12 {strides = array<i32>} : memref<16x32xf32, #tpu.memory_space<vmem>>, vector<16x32xf32>,
    } else {
    }
    %c0 = arith.constant 0 : index
    %c0_1 = arith.constant 0 : index
    %3 = vector.load %arg9[%c0, %c0_1] : memref<16x32xf32, #tpu.memory_space<vmem>>, vector<16x32xf32>
    %c0_2 = arith.constant 0 : index
    %c0_3 = arith.constant 0 : index
    %4 = vector.load %arg3[%c0_2, %c0_3] : memref<16x128xbf16, #tpu.memory_space<vmem>>, vector<16x128xbf16>
    %c0_4 = arith.constant 0 : index
    %c0_5 = arith.constant 0 : index
    %5 = vector.load %arg4[%c0_4, %c0_5] : memref<128x32xbf16, #tpu.memory_space<vmem>>, vector<128x32xbf16>
    %cst = arith.constant dense<0.000000e+00> : vector<16x32xf32>
    %6 = tpu.matmul %4, %5, %cst {dimension_numbers = #tpu.dot_dimension_numbers<[1], [0], [0], [1], [0, 0, 1, 1], [], []>} : vector<16x128xbf16>, vector<128x32xbf16>, vector<16x32xf32> -> vector<16x32xf32>
    %7 = arith.addf %3, %6 : vector<16x32xf32>
    %c0_6 = arith.constant 0 : index
    %c0_7 = arith.constant 0 : index
    %8 = vector.load %arg9[%c0_6, %c0_7] : memref<16x32xf32, #tpu.memory_space<vmem>>, vector<16x32xf32>
    tpu.vector_store %arg9[%c0_6, %c0_7], %7 {strides = array<i32>} : memref<16x32xf32, #tpu.memory_space<vmem>>, vector<16x32xf32>,
    %c0_i32_8 = arith.constant 0 : i32
    %9 = arith.cmpi eq, %arg2, %c0_i32_8 : i32
    %10 = arith.extui %9 : i1 to i32
    %c0_i32_9 = arith.constant 0 : i32
    %11 = arith.cmpi ne, %10, %c0_i32_9 : i32
    scf.if %11 {
      %c0_10 = arith.constant 0 : index
      %c0_11 = arith.constant 0 : index
      %12 = vector.load %arg9[%c0_10, %c0_11] : memref<16x32xf32, #tpu.memory_space<vmem>>, vector<16x32xf32>
      %c0_12 = arith.constant 0 : index
      %c0_13 = arith.constant 0 : index
      %13 = vector.load %arg5[%c0_12, %c0_13] : memref<16x32xbf16, #tpu.memory_space<vmem>>, vector<16x32xbf16>
      %14 = arith.extf %13 : vector<16x32xbf16> to vector<16x32xf32>
      %15 = arith.addf %12, %14 : vector<16x32xf32>
      %cst_14 = arith.constant dense<0.000000e+00> : vector<16xf32>
      %16 = vector.multi_reduction <add>, %15, %cst_14 [1] : vector<16x32xf32> to vector<16xf32>
      %17 = vector.shape_cast %16 : vector<16xf32> to vector<16x1xf32>
      %cst_15 = arith.constant 3.200000e+01 : f32
      %18 = vector.broadcast %cst_15 : f32 to vector<16x1xf32>
      %19 = arith.divf %17, %18 : vector<16x1xf32>
      %20 = vector.broadcast %19 : vector<16x1xf32> to vector<16x32xf32>
      %21 = arith.subf %15, %20 : vector<16x32xf32>
      %22 = arith.mulf %21, %21 : vector<16x32xf32>
      %cst_16 = arith.constant dense<0.000000e+00> : vector<16xf32>
      %23 = vector.multi_reduction <add>, %22, %cst_16 [1] : vector<16x32xf32> to vector<16xf32>
      %24 = vector.shape_cast %23 : vector<16xf32> to vector<16x1xf32>
      %cst_17 = arith.constant 3.200000e+01 : f32
      %25 = vector.broadcast %cst_17 : f32 to vector<16x1xf32>
      %26 = arith.divf %24, %25 : vector<16x1xf32>
      %27 = vector.broadcast %19 : vector<16x1xf32> to vector<16x32xf32>
      %28 = arith.subf %15, %27 : vector<16x32xf32>
      %cst_18 = arith.constant 9.99999974E-6 : f32
      %29 = vector.broadcast %cst_18 : f32 to vector<16x1xf32>
      %30 = arith.addf %26, %29 : vector<16x1xf32>
      %31 = math.rsqrt %30 : vector<16x1xf32>
      %32 = vector.broadcast %31 : vector<16x1xf32> to vector<16x32xf32>
      %33 = arith.mulf %28, %32 : vector<16x32xf32>
      %c0_19 = arith.constant 0 : index
      %c0_20 = arith.constant 0 : index
      %34 = vector.load %arg6[%c0_19, %c0_20] : memref<1x32xf32, #tpu.memory_space<vmem>>, vector<1x32xf32>
      %35 = vector.broadcast %34 : vector<1x32xf32> to vector<16x32xf32>
      %36 = arith.mulf %33, %35 : vector<16x32xf32>
      %c0_21 = arith.constant 0 : index
      %c0_22 = arith.constant 0 : index
      %37 = vector.load %arg7[%c0_21, %c0_22] : memref<1x32xf32, #tpu.memory_space<vmem>>, vector<1x32xf32>
      %38 = vector.broadcast %37 : vector<1x32xf32> to vector<16x32xf32>
      %39 = arith.addf %36, %38 : vector<16x32xf32>
      %40 = arith.truncf %39 : vector<16x32xf32> to vector<16x32xbf16>
      %c0_23 = arith.constant 0 : index
      %c0_24 = arith.constant 0 : index
      %41 = vector.load %arg8[%c0_23, %c0_24] : memref<16x32xbf16, #tpu.memory_space<vmem>>, vector<16x32xbf16>
      tpu.vector_store %arg8[%c0_23, %c0_24], %40 {strides = array<i32>} : memref<16x32xbf16, #tpu.memory_space<vmem>>, vector<16x32xbf16>,
    } else {
    }
    return
  }
  func.func @transform_0(%arg0: i32, %arg1: i32, %arg2: i32) -> (i32, i32) {
    %c0_i32 = arith.constant 0 : i32
    return %arg0, %arg2 : i32, i32
  }
  func.func @transform_1(%arg0: i32, %arg1: i32, %arg2: i32) -> (i32, i32) {
    %c0_i32 = arith.constant 0 : i32
    return %arg2, %arg1 : i32, i32
  }
  func.func @transform_2(%arg0: i32, %arg1: i32, %arg2: i32) -> (i32, i32) {
    %c0_i32 = arith.constant 0 : i32
    %c0_i32_0 = arith.constant 0 : i32
    return %arg0, %c0_i32 : i32, i32
  }
  func.func @transform_3(%arg0: i32, %arg1: i32, %arg2: i32) -> (i32, i32) {
    %c0_i32 = arith.constant 0 : i32
    %c0_i32_0 = arith.constant 0 : i32
    %c0_i32_1 = arith.constant 0 : i32
    return %c0_i32, %c0_i32_0 : i32, i32
  }
  func.func @transform_4(%arg0: i32, %arg1: i32, %arg2: i32) -> (i32, i32) {
    %c0_i32 = arith.constant 0 : i32
    %c0_i32_0 = arith.constant 0 : i32
    %c0_i32_1 = arith.constant 0 : i32
    return %c0_i32, %c0_i32_0 : i32, i32
  }
  func.func @transform_5(%arg0: i32, %arg1: i32, %arg2: i32) -> (i32, i32) {
    %c0_i32 = arith.constant 0 : i32
    return %arg0, %arg1 : i32, i32
  }
}

module attributes {stable_mosaic.version = 11 : i64} {
  func.func @_matmul_kernel(%arg0: i32, %arg1: i32, %arg2: i32, %arg3: memref<16x128xbf16, #tpu.memory_space<vmem>>, %arg4: memref<128x128xbf16, #tpu.memory_space<vmem>>, %arg5: memref<1x128xf32, #tpu.memory_space<vmem>>, %arg6: memref<16x128xbf16, #tpu.memory_space<vmem>>, %arg7: memref<16x128xf32, #tpu.memory_space<vmem>>) attributes {dimension_semantics = [#tpu.dimension_semantics<parallel>, #tpu.dimension_semantics<parallel>, #tpu.dimension_semantics<arbitrary>], iteration_bounds = array<i64: 1, 1, 1>, scalar_prefetch = 0 : i64, scratch_operands = 1 : i64, tpu.core_type = #tpu.core_type<tc>, window_params = [{transform_indices = @transform_0, window_bounds = array<i64: 16, 128>}, {transform_indices = @transform_1, window_bounds = array<i64: 128, 128>}, {transform_indices = @transform_2, window_bounds = array<i64: 1, 128>}, {transform_indices = @transform_3, window_bounds = array<i64: 16, 128>}]} {
    %c0_i32 = arith.constant 0 : i32
    %0 = arith.cmpi eq, %arg2, %c0_i32 : i32
    %1 = arith.extui %0 : i1 to i32
    %c0_i32_0 = arith.constant 0 : i32
    %2 = arith.cmpi ne, %1, %c0_i32_0 : i32
    scf.if %2 {
      %cst_10 = arith.constant 0.000000e+00 : f32
      %12 = vector.broadcast %cst_10 : f32 to vector<16x128xf32>
      %c0_11 = arith.constant 0 : index
      %c0_12 = arith.constant 0 : index
      %13 = vector.load %arg7[%c0_11, %c0_12] : memref<16x128xf32, #tpu.memory_space<vmem>>, vector<16x128xf32>
      tpu.vector_store %arg7[%c0_11, %c0_12], %12 {strides = array<i32>} : memref<16x128xf32, #tpu.memory_space<vmem>>, vector<16x128xf32>,
    } else {
    }
    %c0 = arith.constant 0 : index
    %c0_1 = arith.constant 0 : index
    %3 = vector.load %arg7[%c0, %c0_1] : memref<16x128xf32, #tpu.memory_space<vmem>>, vector<16x128xf32>
    %c0_2 = arith.constant 0 : index
    %c0_3 = arith.constant 0 : index
    %4 = vector.load %arg3[%c0_2, %c0_3] : memref<16x128xbf16, #tpu.memory_space<vmem>>, vector<16x128xbf16>
    %c0_4 = arith.constant 0 : index
    %c0_5 = arith.constant 0 : index
    %5 = vector.load %arg4[%c0_4, %c0_5] : memref<128x128xbf16, #tpu.memory_space<vmem>>, vector<128x128xbf16>
    %cst = arith.constant dense<0.000000e+00> : vector<16x128xf32>
    %6 = tpu.matmul %4, %5, %cst {dimension_numbers = #tpu.dot_dimension_numbers<[1], [0], [0], [1], [0, 0, 1, 1], [], []>} : vector<16x128xbf16>, vector<128x128xbf16>, vector<16x128xf32> -> vector<16x128xf32>
    %7 = arith.addf %3, %6 : vector<16x128xf32>
    %c0_6 = arith.constant 0 : index
    %c0_7 = arith.constant 0 : index
    %8 = vector.load %arg7[%c0_6, %c0_7] : memref<16x128xf32, #tpu.memory_space<vmem>>, vector<16x128xf32>
    tpu.vector_store %arg7[%c0_6, %c0_7], %7 {strides = array<i32>} : memref<16x128xf32, #tpu.memory_space<vmem>>, vector<16x128xf32>,
    %c0_i32_8 = arith.constant 0 : i32
    %9 = arith.cmpi eq, %arg2, %c0_i32_8 : i32
    %10 = arith.extui %9 : i1 to i32
    %c0_i32_9 = arith.constant 0 : i32
    %11 = arith.cmpi ne, %10, %c0_i32_9 : i32
    scf.if %11 {
      %c0_10 = arith.constant 0 : index
      %c0_11 = arith.constant 0 : index
      %12 = vector.load %arg7[%c0_10, %c0_11] : memref<16x128xf32, #tpu.memory_space<vmem>>, vector<16x128xf32>
      %c0_12 = arith.constant 0 : index
      %c0_13 = arith.constant 0 : index
      %13 = vector.load %arg5[%c0_12, %c0_13] : memref<1x128xf32, #tpu.memory_space<vmem>>, vector<1x128xf32>
      %14 = vector.broadcast %13 : vector<1x128xf32> to vector<16x128xf32>
      %15 = arith.addf %12, %14 : vector<16x128xf32>
      %cst_14 = arith.constant 0.000000e+00 : f32
      %16 = vector.broadcast %cst_14 : f32 to vector<16x128xf32>
      %17 = arith.maximumf %15, %16 : vector<16x128xf32>
      %18 = arith.truncf %17 : vector<16x128xf32> to vector<16x128xbf16>
      %c0_15 = arith.constant 0 : index
      %c0_16 = arith.constant 0 : index
      %19 = vector.load %arg6[%c0_15, %c0_16] : memref<16x128xbf16, #tpu.memory_space<vmem>>, vector<16x128xbf16>
      tpu.vector_store %arg6[%c0_15, %c0_16], %18 {strides = array<i32>} : memref<16x128xbf16, #tpu.memory_space<vmem>>, vector<16x128xbf16>,
    } else {
    }
    return
  }
  func.func @transform_0(%arg0: i32, %arg1: i32, %arg2: i32) -> (i32, i32) {
    %c0_i32 = arith.constant 0 : i32
    return %arg0, %arg2 : i32, i32
  }
  func.func @transform_1(%arg0: i32, %arg1: i32, %arg2: i32) -> (i32, i32) {
    %c0_i32 = arith.constant 0 : i32
    return %arg2, %arg1 : i32, i32
  }
  func.func @transform_2(%arg0: i32, %arg1: i32, %arg2: i32) -> (i32, i32) {
    %c0_i32 = arith.constant 0 : i32
    %c0_i32_0 = arith.constant 0 : i32
    return %c0_i32, %arg1 : i32, i32
  }
  func.func @transform_3(%arg0: i32, %arg1: i32, %arg2: i32) -> (i32, i32) {
    %c0_i32 = arith.constant 0 : i32
    return %arg0, %arg1 : i32, i32
  }
}

module attributes {stable_mosaic.version = 11 : i64} {
  func.func @_matmul_kernel(%arg0: i32, %arg1: i32, %arg2: i32, %arg3: memref<16x128xbf16, #tpu.memory_space<vmem>>, %arg4: memref<128x32xbf16, #tpu.memory_space<vmem>>, %arg5: memref<1x32xf32, #tpu.memory_space<vmem>>, %arg6: memref<16x32xbf16, #tpu.memory_space<vmem>>, %arg7: memref<1x32xf32, #tpu.memory_space<vmem>>, %arg8: memref<1x32xf32, #tpu.memory_space<vmem>>, %arg9: memref<16x32xbf16, #tpu.memory_space<vmem>>, %arg10: memref<16x32xf32, #tpu.memory_space<vmem>>) attributes {dimension_semantics = [#tpu.dimension_semantics<parallel>, #tpu.dimension_semantics<parallel>, #tpu.dimension_semantics<arbitrary>], iteration_bounds = array<i64: 1, 1, 1>, scalar_prefetch = 0 : i64, scratch_operands = 1 : i64, tpu.core_type = #tpu.core_type<tc>, window_params = [{transform_indices = @transform_0, window_bounds = array<i64: 16, 128>}, {transform_indices = @transform_1, window_bounds = array<i64: 128, 32>}, {transform_indices = @transform_2, window_bounds = array<i64: 1, 32>}, {transform_indices = @transform_3, window_bounds = array<i64: 16, 32>}, {pipeline_mode = #tpu.pipeline_mode<synchronous>, transform_indices = @transform_4, window_bounds = array<i64: 1, 32>}, {pipeline_mode = #tpu.pipeline_mode<synchronous>, transform_indices = @transform_5, window_bounds = array<i64: 1, 32>}, {transform_indices = @transform_6, window_bounds = array<i64: 16, 32>}]} {
    %c0_i32 = arith.constant 0 : i32
    %0 = arith.cmpi eq, %arg2, %c0_i32 : i32
    %1 = arith.extui %0 : i1 to i32
    %c0_i32_0 = arith.constant 0 : i32
    %2 = arith.cmpi ne, %1, %c0_i32_0 : i32
    scf.if %2 {
      %cst_10 = arith.constant 0.000000e+00 : f32
      %12 = vector.broadcast %cst_10 : f32 to vector<16x32xf32>
      %c0_11 = arith.constant 0 : index
      %c0_12 = arith.constant 0 : index
      %13 = vector.load %arg10[%c0_11, %c0_12] : memref<16x32xf32, #tpu.memory_space<vmem>>, vector<16x32xf32>
      tpu.vector_store %arg10[%c0_11, %c0_12], %12 {strides = array<i32>} : memref<16x32xf32, #tpu.memory_space<vmem>>, vector<16x32xf32>,
    } else {
    }
    %c0 = arith.constant 0 : index
    %c0_1 = arith.constant 0 : index
    %3 = vector.load %arg10[%c0, %c0_1] : memref<16x32xf32, #tpu.memory_space<vmem>>, vector<16x32xf32>
    %c0_2 = arith.constant 0 : index
    %c0_3 = arith.constant 0 : index
    %4 = vector.load %arg3[%c0_2, %c0_3] : memref<16x128xbf16, #tpu.memory_space<vmem>>, vector<16x128xbf16>
    %c0_4 = arith.constant 0 : index
    %c0_5 = arith.constant 0 : index
    %5 = vector.load %arg4[%c0_4, %c0_5] : memref<128x32xbf16, #tpu.memory_space<vmem>>, vector<128x32xbf16>
    %cst = arith.constant dense<0.000000e+00> : vector<16x32xf32>
    %6 = tpu.matmul %4, %5, %cst {dimension_numbers = #tpu.dot_dimension_numbers<[1], [0], [0], [1], [0, 0, 1, 1], [], []>} : vector<16x128xbf16>, vector<128x32xbf16>, vector<16x32xf32> -> vector<16x32xf32>
    %7 = arith.addf %3, %6 : vector<16x32xf32>
    %c0_6 = arith.constant 0 : index
    %c0_7 = arith.constant 0 : index
    %8 = vector.load %arg10[%c0_6, %c0_7] : memref<16x32xf32, #tpu.memory_space<vmem>>, vector<16x32xf32>
    tpu.vector_store %arg10[%c0_6, %c0_7], %7 {strides = array<i32>} : memref<16x32xf32, #tpu.memory_space<vmem>>, vector<16x32xf32>,
    %c0_i32_8 = arith.constant 0 : i32
    %9 = arith.cmpi eq, %arg2, %c0_i32_8 : i32
    %10 = arith.extui %9 : i1 to i32
    %c0_i32_9 = arith.constant 0 : i32
    %11 = arith.cmpi ne, %10, %c0_i32_9 : i32
    scf.if %11 {
      %c0_10 = arith.constant 0 : index
      %c0_11 = arith.constant 0 : index
      %12 = vector.load %arg10[%c0_10, %c0_11] : memref<16x32xf32, #tpu.memory_space<vmem>>, vector<16x32xf32>
      %c0_12 = arith.constant 0 : index
      %c0_13 = arith.constant 0 : index
      %13 = vector.load %arg5[%c0_12, %c0_13] : memref<1x32xf32, #tpu.memory_space<vmem>>, vector<1x32xf32>
      %14 = vector.broadcast %13 : vector<1x32xf32> to vector<16x32xf32>
      %15 = arith.addf %12, %14 : vector<16x32xf32>
      %c0_14 = arith.constant 0 : index
      %c0_15 = arith.constant 0 : index
      %16 = vector.load %arg6[%c0_14, %c0_15] : memref<16x32xbf16, #tpu.memory_space<vmem>>, vector<16x32xbf16>
      %17 = arith.extf %16 : vector<16x32xbf16> to vector<16x32xf32>
      %18 = arith.addf %15, %17 : vector<16x32xf32>
      %cst_16 = arith.constant dense<0.000000e+00> : vector<16xf32>
      %19 = vector.multi_reduction <add>, %18, %cst_16 [1] : vector<16x32xf32> to vector<16xf32>
      %20 = vector.shape_cast %19 : vector<16xf32> to vector<16x1xf32>
      %cst_17 = arith.constant 3.200000e+01 : f32
      %21 = vector.broadcast %cst_17 : f32 to vector<16x1xf32>
      %22 = arith.divf %20, %21 : vector<16x1xf32>
      %23 = vector.broadcast %22 : vector<16x1xf32> to vector<16x32xf32>
      %24 = arith.subf %18, %23 : vector<16x32xf32>
      %25 = arith.mulf %24, %24 : vector<16x32xf32>
      %cst_18 = arith.constant dense<0.000000e+00> : vector<16xf32>
      %26 = vector.multi_reduction <add>, %25, %cst_18 [1] : vector<16x32xf32> to vector<16xf32>
      %27 = vector.shape_cast %26 : vector<16xf32> to vector<16x1xf32>
      %cst_19 = arith.constant 3.200000e+01 : f32
      %28 = vector.broadcast %cst_19 : f32 to vector<16x1xf32>
      %29 = arith.divf %27, %28 : vector<16x1xf32>
      %30 = vector.broadcast %22 : vector<16x1xf32> to vector<16x32xf32>
      %31 = arith.subf %18, %30 : vector<16x32xf32>
      %cst_20 = arith.constant 9.99999974E-6 : f32
      %32 = vector.broadcast %cst_20 : f32 to vector<16x1xf32>
      %33 = arith.addf %29, %32 : vector<16x1xf32>
      %34 = math.rsqrt %33 : vector<16x1xf32>
      %35 = vector.broadcast %34 : vector<16x1xf32> to vector<16x32xf32>
      %36 = arith.mulf %31, %35 : vector<16x32xf32>
      %c0_21 = arith.constant 0 : index
      %c0_22 = arith.constant 0 : index
      %37 = vector.load %arg7[%c0_21, %c0_22] : memref<1x32xf32, #tpu.memory_space<vmem>>, vector<1x32xf32>
      %38 = vector.broadcast %37 : vector<1x32xf32> to vector<16x32xf32>
      %39 = arith.mulf %36, %38 : vector<16x32xf32>
      %c0_23 = arith.constant 0 : index
      %c0_24 = arith.constant 0 : index
      %40 = vector.load %arg8[%c0_23, %c0_24] : memref<1x32xf32, #tpu.memory_space<vmem>>, vector<1x32xf32>
      %41 = vector.broadcast %40 : vector<1x32xf32> to vector<16x32xf32>
      %42 = arith.addf %39, %41 : vector<16x32xf32>
      %43 = arith.truncf %42 : vector<16x32xf32> to vector<16x32xbf16>
      %c0_25 = arith.constant 0 : index
      %c0_26 = arith.constant 0 : index
      %44 = vector.load %arg9[%c0_25, %c0_26] : memref<16x32xbf16, #tpu.memory_space<vmem>>, vector<16x32xbf16>
      tpu.vector_store %arg9[%c0_25, %c0_26], %43 {strides = array<i32>} : memref<16x32xbf16, #tpu.memory_space<vmem>>, vector<16x32xbf16>,
    } else {
    }
    return
  }
  func.func @transform_0(%arg0: i32, %arg1: i32, %arg2: i32) -> (i32, i32) {
    %c0_i32 = arith.constant 0 : i32
    return %arg0, %arg2 : i32, i32
  }
  func.func @transform_1(%arg0: i32, %arg1: i32, %arg2: i32) -> (i32, i32) {
    %c0_i32 = arith.constant 0 : i32
    return %arg2, %arg1 : i32, i32
  }
  func.func @transform_2(%arg0: i32, %arg1: i32, %arg2: i32) -> (i32, i32) {
    %c0_i32 = arith.constant 0 : i32
    %c0_i32_0 = arith.constant 0 : i32
    return %c0_i32, %arg1 : i32, i32
  }
  func.func @transform_3(%arg0: i32, %arg1: i32, %arg2: i32) -> (i32, i32) {
    %c0_i32 = arith.constant 0 : i32
    %c0_i32_0 = arith.constant 0 : i32
    return %arg0, %c0_i32 : i32, i32
  }
  func.func @transform_4(%arg0: i32, %arg1: i32, %arg2: i32) -> (i32, i32) {
    %c0_i32 = arith.constant 0 : i32
    %c0_i32_0 = arith.constant 0 : i32
    %c0_i32_1 = arith.constant 0 : i32
    return %c0_i32, %c0_i32_0 : i32, i32
  }
  func.func @transform_5(%arg0: i32, %arg1: i32, %arg2: i32) -> (i32, i32) {
    %c0_i32 = arith.constant 0 : i32
    %c0_i32_0 = arith.constant 0 : i32
    %c0_i32_1 = arith.constant 0 : i32
    return %c0_i32, %c0_i32_0 : i32, i32
  }
  func.func @transform_6(%arg0: i32, %arg1: i32, %arg2: i32) -> (i32, i32) {
    %c0_i32 = arith.constant 0 : i32
    return %arg0, %arg1 : i32, i32
  }
}

module attributes {stable_mosaic.version = 11 : i64} {
  func.func @_matmul_kernel(%arg0: i32, %arg1: i32, %arg2: i32, %arg3: memref<16x128xbf16, #tpu.memory_space<vmem>>, %arg4: memref<128x128xbf16, #tpu.memory_space<vmem>>, %arg5: memref<16x128xf32, #tpu.memory_space<vmem>>, %arg6: memref<16x128xf32, #tpu.memory_space<vmem>>) attributes {dimension_semantics = [#tpu.dimension_semantics<parallel>, #tpu.dimension_semantics<parallel>, #tpu.dimension_semantics<arbitrary>], iteration_bounds = array<i64: 1, 1, 1>, scalar_prefetch = 0 : i64, scratch_operands = 1 : i64, tpu.core_type = #tpu.core_type<tc>, window_params = [{transform_indices = @transform_0, window_bounds = array<i64: 16, 128>}, {transform_indices = @transform_1, window_bounds = array<i64: 128, 128>}, {transform_indices = @transform_2, window_bounds = array<i64: 16, 128>}]} {
    %c0_i32 = arith.constant 0 : i32
    %0 = arith.cmpi eq, %arg2, %c0_i32 : i32
    %1 = arith.extui %0 : i1 to i32
    %c0_i32_0 = arith.constant 0 : i32
    %2 = arith.cmpi ne, %1, %c0_i32_0 : i32
    scf.if %2 {
      %cst_10 = arith.constant 0.000000e+00 : f32
      %12 = vector.broadcast %cst_10 : f32 to vector<16x128xf32>
      %c0_11 = arith.constant 0 : index
      %c0_12 = arith.constant 0 : index
      %13 = vector.load %arg6[%c0_11, %c0_12] : memref<16x128xf32, #tpu.memory_space<vmem>>, vector<16x128xf32>
      tpu.vector_store %arg6[%c0_11, %c0_12], %12 {strides = array<i32>} : memref<16x128xf32, #tpu.memory_space<vmem>>, vector<16x128xf32>,
    } else {
    }
    %c0 = arith.constant 0 : index
    %c0_1 = arith.constant 0 : index
    %3 = vector.load %arg6[%c0, %c0_1] : memref<16x128xf32, #tpu.memory_space<vmem>>, vector<16x128xf32>
    %c0_2 = arith.constant 0 : index
    %c0_3 = arith.constant 0 : index
    %4 = vector.load %arg3[%c0_2, %c0_3] : memref<16x128xbf16, #tpu.memory_space<vmem>>, vector<16x128xbf16>
    %c0_4 = arith.constant 0 : index
    %c0_5 = arith.constant 0 : index
    %5 = vector.load %arg4[%c0_4, %c0_5] : memref<128x128xbf16, #tpu.memory_space<vmem>>, vector<128x128xbf16>
    %cst = arith.constant dense<0.000000e+00> : vector<16x128xf32>
    %6 = tpu.matmul %4, %5, %cst {dimension_numbers = #tpu.dot_dimension_numbers<[1], [0], [0], [1], [0, 0, 1, 1], [], []>} : vector<16x128xbf16>, vector<128x128xbf16>, vector<16x128xf32> -> vector<16x128xf32>
    %7 = arith.addf %3, %6 : vector<16x128xf32>
    %c0_6 = arith.constant 0 : index
    %c0_7 = arith.constant 0 : index
    %8 = vector.load %arg6[%c0_6, %c0_7] : memref<16x128xf32, #tpu.memory_space<vmem>>, vector<16x128xf32>
    tpu.vector_store %arg6[%c0_6, %c0_7], %7 {strides = array<i32>} : memref<16x128xf32, #tpu.memory_space<vmem>>, vector<16x128xf32>,
    %c0_i32_8 = arith.constant 0 : i32
    %9 = arith.cmpi eq, %arg2, %c0_i32_8 : i32
    %10 = arith.extui %9 : i1 to i32
    %c0_i32_9 = arith.constant 0 : i32
    %11 = arith.cmpi ne, %10, %c0_i32_9 : i32
    scf.if %11 {
      %c0_10 = arith.constant 0 : index
      %c0_11 = arith.constant 0 : index
      %12 = vector.load %arg6[%c0_10, %c0_11] : memref<16x128xf32, #tpu.memory_space<vmem>>, vector<16x128xf32>
      %c0_12 = arith.constant 0 : index
      %c0_13 = arith.constant 0 : index
      %13 = vector.load %arg5[%c0_12, %c0_13] : memref<16x128xf32, #tpu.memory_space<vmem>>, vector<16x128xf32>
      tpu.vector_store %arg5[%c0_12, %c0_13], %12 {strides = array<i32>} : memref<16x128xf32, #tpu.memory_space<vmem>>, vector<16x128xf32>,
    } else {
    }
    return
  }
  func.func @transform_0(%arg0: i32, %arg1: i32, %arg2: i32) -> (i32, i32) {
    %c0_i32 = arith.constant 0 : i32
    return %arg0, %arg2 : i32, i32
  }
  func.func @transform_1(%arg0: i32, %arg1: i32, %arg2: i32) -> (i32, i32) {
    %c0_i32 = arith.constant 0 : i32
    return %arg2, %arg1 : i32, i32
  }
  func.func @transform_2(%arg0: i32, %arg1: i32, %arg2: i32) -> (i32, i32) {
    %c0_i32 = arith.constant 0 : i32
    return %arg0, %arg1 : i32, i32
  }
}

module attributes {stable_mosaic.version = 11 : i64} {
  func.func @_flash_kernel(%arg0: i32, %arg1: i32, %arg2: i32, %arg3: memref<1x1x8x8xbf16, #tpu.memory_space<vmem>>, %arg4: memref<1x1x8x8xbf16, #tpu.memory_space<vmem>>, %arg5: memref<1x1x8x8xbf16, #tpu.memory_space<vmem>>, %arg6: memref<1x8x8xbf16, #tpu.memory_space<vmem>>, %arg7: memref<8x1xf32, #tpu.memory_space<vmem>>, %arg8: memref<8x1xf32, #tpu.memory_space<vmem>>, %arg9: memref<8x8xf32, #tpu.memory_space<vmem>>) attributes {dimension_semantics = [#tpu.dimension_semantics<parallel>, #tpu.dimension_semantics<parallel>, #tpu.dimension_semantics<arbitrary>], iteration_bounds = array<i64: 8, 1, 1>, scalar_prefetch = 0 : i64, scratch_operands = 3 : i64, tpu.core_type = #tpu.core_type<tc>, window_params = [{transform_indices = @transform_0, window_bounds = array<i64: 1, 1, 8, 8>}, {transform_indices = @transform_1, window_bounds = array<i64: 1, 1, 8, 8>}, {transform_indices = @transform_2, window_bounds = array<i64: 1, 1, 8, 8>}, {transform_indices = @transform_3, window_bounds = array<i64: 1, 8, 8>}]} {
    %c0_i32 = arith.constant 0 : i32
    %0 = arith.cmpi eq, %arg2, %c0_i32 : i32
    %1 = arith.extui %0 : i1 to i32
    %c0_i32_0 = arith.constant 0 : i32
    %2 = arith.cmpi ne, %1, %c0_i32_0 : i32
    scf.if %2 {
      %cst_30 = arith.constant -1.000000e+30 : f32
      %38 = vector.broadcast %cst_30 : f32 to vector<8x1xf32>
      %c0_31 = arith.constant 0 : index
      %c0_32 = arith.constant 0 : index
      %39 = vector.load %arg7[%c0_31, %c0_32] : memref<8x1xf32, #tpu.memory_space<vmem>>, vector<8x1xf32>
      tpu.vector_store %arg7[%c0_31, %c0_32], %38 {strides = array<i32>} : memref<8x1xf32, #tpu.memory_space<vmem>>, vector<8x1xf32>,
      %cst_33 = arith.constant 0.000000e+00 : f32
      %40 = vector.broadcast %cst_33 : f32 to vector<8x1xf32>
      %c0_34 = arith.constant 0 : index
      %c0_35 = arith.constant 0 : index
      %41 = vector.load %arg8[%c0_34, %c0_35] : memref<8x1xf32, #tpu.memory_space<vmem>>, vector<8x1xf32>
      tpu.vector_store %arg8[%c0_34, %c0_35], %40 {strides = array<i32>} : memref<8x1xf32, #tpu.memory_space<vmem>>, vector<8x1xf32>,
      %cst_36 = arith.constant 0.000000e+00 : f32
      %42 = vector.broadcast %cst_36 : f32 to vector<8x8xf32>
      %c0_37 = arith.constant 0 : index
      %c0_38 = arith.constant 0 : index
      %43 = vector.load %arg9[%c0_37, %c0_38] : memref<8x8xf32, #tpu.memory_space<vmem>>, vector<8x8xf32>
      tpu.vector_store %arg9[%c0_37, %c0_38], %42 {strides = array<i32>} : memref<8x8xf32, #tpu.memory_space<vmem>>, vector<8x8xf32>,
    } else {
    }
    %c0 = arith.constant 0 : index
    %c0_1 = arith.constant 0 : index
    %c0_2 = arith.constant 0 : index
    %c0_3 = arith.constant 0 : index
    %3 = vector.load %arg3[%c0, %c0_1, %c0_2, %c0_3] : memref<1x1x8x8xbf16, #tpu.memory_space<vmem>>, vector<1x1x8x8xbf16>
    %4 = vector.shape_cast %3 : vector<1x1x8x8xbf16> to vector<8x8xbf16>
    %c0_4 = arith.constant 0 : index
    %c0_5 = arith.constant 0 : index
    %c0_6 = arith.constant 0 : index
    %c0_7 = arith.constant 0 : index
    %5 = vector.load %arg4[%c0_4, %c0_5, %c0_6, %c0_7] : memref<1x1x8x8xbf16, #tpu.memory_space<vmem>>, vector<1x1x8x8xbf16>
    %6 = vector.shape_cast %5 : vector<1x1x8x8xbf16> to vector<8x8xbf16>
    %c0_8 = arith.constant 0 : index
    %c0_9 = arith.constant 0 : index
    %c0_10 = arith.constant 0 : index
    %c0_11 = arith.constant 0 : index
    %7 = vector.load %arg5[%c0_8, %c0_9, %c0_10, %c0_11] : memref<1x1x8x8xbf16, #tpu.memory_space<vmem>>, vector<1x1x8x8xbf16>
    %8 = vector.shape_cast %7 : vector<1x1x8x8xbf16> to vector<8x8xbf16>
    %cst = arith.constant dense<0.000000e+00> : vector<8x8xf32>
    %9 = tpu.matmul %4, %6, %cst {dimension_numbers = #tpu.dot_dimension_numbers<[1], [1], [0], [0], [0, 0, 1, 0], [], []>} : vector<8x8xbf16>, vector<8x8xbf16>, vector<8x8xf32> -> vector<8x8xf32>
    %cst_12 = arith.constant 0.353553385 : f32
    %10 = vector.broadcast %cst_12 : f32 to vector<8x8xf32>
    %11 = arith.mulf %9, %10 : vector<8x8xf32>
    %c0_13 = arith.constant 0 : index
    %c0_14 = arith.constant 0 : index
    %12 = vector.load %arg7[%c0_13, %c0_14] : memref<8x1xf32, #tpu.memory_space<vmem>>, vector<8x1xf32>
    %cst_15 = arith.constant dense<0xFF800000> : vector<8xf32>
    %13 = vector.multi_reduction <maximumf>, %11, %cst_15 [1] : vector<8x8xf32> to vector<8xf32>
    %14 = vector.shape_cast %13 : vector<8xf32> to vector<8x1xf32>
    %15 = arith.maximumf %12, %14 : vector<8x1xf32>
    %16 = arith.subf %12, %15 : vector<8x1xf32>
    %17 = math.exp %16 : vector<8x1xf32>
    %18 = vector.broadcast %15 : vector<8x1xf32> to vector<8x8xf32>
    %19 = arith.subf %11, %18 : vector<8x8xf32>
    %20 = math.exp %19 : vector<8x8xf32>
    %c0_16 = arith.constant 0 : index
    %c0_17 = arith.constant 0 : index
    %21 = vector.load %arg8[%c0_16, %c0_17] : memref<8x1xf32, #tpu.memory_space<vmem>>, vector<8x1xf32>
    %22 = arith.mulf %17, %21 : vector<8x1xf32>
    %cst_18 = arith.constant dense<0.000000e+00> : vector<8xf32>
    %23 = vector.multi_reduction <add>, %20, %cst_18 [1] : vector<8x8xf32> to vector<8xf32>
    %24 = vector.shape_cast %23 : vector<8xf32> to vector<8x1xf32>
    %25 = arith.addf %22, %24 : vector<8x1xf32>
    %c0_19 = arith.constant 0 : index
    %c0_20 = arith.constant 0 : index
    %26 = vector.load %arg8[%c0_19, %c0_20] : memref<8x1xf32, #tpu.memory_space<vmem>>, vector<8x1xf32>
    tpu.vector_store %arg8[%c0_19, %c0_20], %25 {strides = array<i32>} : memref<8x1xf32, #tpu.memory_space<vmem>>, vector<8x1xf32>,
    %c0_21 = arith.constant 0 : index
    %c0_22 = arith.constant 0 : index
    %27 = vector.load %arg9[%c0_21, %c0_22] : memref<8x8xf32, #tpu.memory_space<vmem>>, vector<8x8xf32>
    %28 = vector.broadcast %17 : vector<8x1xf32> to vector<8x8xf32>
    %29 = arith.mulf %28, %27 : vector<8x8xf32>
    %30 = arith.truncf %20 : vector<8x8xf32> to vector<8x8xbf16>
    %cst_23 = arith.constant dense<0.000000e+00> : vector<8x8xf32>
    %31 = tpu.matmul %30, %8, %cst_23 {dimension_numbers = #tpu.dot_dimension_numbers<[1], [0], [0], [1], [0, 0, 1, 1], [], []>} : vector<8x8xbf16>, vector<8x8xbf16>, vector<8x8xf32> -> vector<8x8xf32>
    %32 = arith.addf %29, %31 : vector<8x8xf32>
    %c0_24 = arith.constant 0 : index
    %c0_25 = arith.constant 0 : index
    %33 = vector.load %arg9[%c0_24, %c0_25] : memref<8x8xf32, #tpu.memory_space<vmem>>, vector<8x8xf32>
    tpu.vector_store %arg9[%c0_24, %c0_25], %32 {strides = array<i32>} : memref<8x8xf32, #tpu.memory_space<vmem>>, vector<8x8xf32>,
    %c0_26 = arith.constant 0 : index
    %c0_27 = arith.constant 0 : index
    %34 = vector.load %arg7[%c0_26, %c0_27] : memref<8x1xf32, #tpu.memory_space<vmem>>, vector<8x1xf32>
    tpu.vector_store %arg7[%c0_26, %c0_27], %15 {strides = array<i32>} : memref<8x1xf32, #tpu.memory_space<vmem>>, vector<8x1xf32>,
    %c0_i32_28 = arith.constant 0 : i32
    %35 = arith.cmpi eq, %arg2, %c0_i32_28 : i32
    %36 = arith.extui %35 : i1 to i32
    %c0_i32_29 = arith.constant 0 : i32
    %37 = arith.cmpi ne, %36, %c0_i32_29 : i32
    scf.if %37 {
      %c0_30 = arith.constant 0 : index
      %c0_31 = arith.constant 0 : index
      %38 = vector.load %arg8[%c0_30, %c0_31] : memref<8x1xf32, #tpu.memory_space<vmem>>, vector<8x1xf32>
      %cst_32 = arith.constant 0.000000e+00 : f32
      %39 = vector.broadcast %cst_32 : f32 to vector<8x1xf32>
      %40 = arith.cmpf ogt, %38, %39 : vector<8x1xf32>
      %41 = tpu.reciprocal %38 {approx = true} : vector<8x1xf32> -> vector<8x1xf32>
      %cst_33 = arith.constant 0.000000e+00 : f32
      %42 = vector.broadcast %cst_33 : f32 to vector<8x1xf32>
      %43 = arith.select %40, %41, %42 : vector<8x1xi1>, vector<8x1xf32>
      %c0_34 = arith.constant 0 : index
      %c0_35 = arith.constant 0 : index
      %44 = vector.load %arg9[%c0_34, %c0_35] : memref<8x8xf32, #tpu.memory_space<vmem>>, vector<8x8xf32>
      %45 = vector.broadcast %43 : vector<8x1xf32> to vector<8x8xf32>
      %46 = arith.mulf %44, %45 : vector<8x8xf32>
      %47 = arith.truncf %46 : vector<8x8xf32> to vector<8x8xbf16>
      %c0_36 = arith.constant 0 : index
      %c0_37 = arith.constant 0 : index
      %c0_38 = arith.constant 0 : index
      %48 = vector.load %arg6[%c0_36, %c0_37, %c0_38] : memref<1x8x8xbf16, #tpu.memory_space<vmem>>, vector<1x8x8xbf16>
      %49 = vector.shape_cast %48 : vector<1x8x8xbf16> to vector<8x8xbf16>
      %50 = vector.shape_cast %47 : vector<8x8xbf16> to vector<1x8x8xbf16>
      tpu.vector_store %arg6[%c0_36, %c0_37, %c0_38], %50 {strides = array<i32>} : memref<1x8x8xbf16, #tpu.memory_space<vmem>>, vector<1x8x8xbf16>,
    } else {
    }
    return
  }
  func.func @transform_0(%arg0: i32, %arg1: i32, %arg2: i32) -> (i32, i32, i32, i32) {
    %c0_i32 = arith.constant 0 : i32
    %c0_i32_0 = arith.constant 0 : i32
    %c0_i32_1 = arith.constant 0 : i32
    return %c0_i32, %arg0, %arg1, %c0_i32_0 : i32, i32, i32, i32
  }
  func.func @transform_1(%arg0: i32, %arg1: i32, %arg2: i32) -> (i32, i32, i32, i32) {
    %c0_i32 = arith.constant 0 : i32
    %c0_i32_0 = arith.constant 0 : i32
    %c0_i32_1 = arith.constant 0 : i32
    return %c0_i32, %arg0, %arg2, %c0_i32_0 : i32, i32, i32, i32
  }
  func.func @transform_2(%arg0: i32, %arg1: i32, %arg2: i32) -> (i32, i32, i32, i32) {
    %c1_i32 = arith.constant 1 : i32
    %c0_i32 = arith.constant 0 : i32
    %c0_i32_0 = arith.constant 0 : i32
    return %c1_i32, %arg0, %arg2, %c0_i32 : i32, i32, i32, i32
  }
  func.func @transform_3(%arg0: i32, %arg1: i32, %arg2: i32) -> (i32, i32, i32) {
    %c0_i32 = arith.constant 0 : i32
    %c0_i32_0 = arith.constant 0 : i32
    return %arg0, %arg1, %c0_i32 : i32, i32, i32
  }
}

</mosaic_0001>

<llo_original>
// kernel: _lambda_.40
$region0: #{_lambda_.40}
  #allocation0 [shape = 'u32[]', space=smem, size = 0x4, offset = 0x4, fixed_abs, tag = 'smem constant byte address 0x4 - core index']
  #allocation1 [shape = 'u32[144,128]{1,0:T(1,128)}', space=vmem, size = 0x12000, scoped, tag = 'internal scratch']
  #allocation2 [shape = 'f32[8,1]{1,0:T(8,128)}', space=vmem, size = 0x1000, scoped, tag = 'scratch operand']
  #allocation3 [shape = 'f32[8,1]{1,0:T(8,128)}', space=vmem, size = 0x1000, scoped, tag = 'scratch operand']
  #allocation4 [shape = 'f32[8,8]{1,0:T(8,128)}', space=vmem, size = 0x1000, scoped, tag = 'scratch operand']
  %s0 = inlined_call_operand.hbm [shape: bf16[3,8,8,8], index: 0, kind: input, shape index: {}, may-alias: {0,1,2}]
  %s1 = inlined_call_operand.hbm [shape: bf16[3,8,8,8], index: 1, kind: input, shape index: {}, may-alias: {0,1,2}]
  %s2 = inlined_call_operand.hbm [shape: bf16[3,8,8,8], index: 2, kind: input, shape index: {}, may-alias: {0,1,2}]
  %s3 = inlined_call_operand.hbm [shape: bf16[8,8,8], index: 3, kind: output, shape index: {}]
  %s4 = sld [smem:[#allocation0]]
  $region65: #{_lambda_.40} parent=0
    _
  %s6 = ssub.s32 1, %s4
  %s7 = scalar_select 0, %s6, %s4
  $region1: #{_lambda_.40} parent=0
    #allocation5 [shape = 'u8[4096]{0}', space=vmem, size = 0x1000, scoped, tag = 'input window, operand 0']
    #allocation6 [shape = 's32[2]{0}', space=sflag, size = 0x8, scoped, tag = 'scoped memory for _lambda_.40']
    #allocation7 [shape = 's32[2]{0}', space=sflag, size = 0x8, scoped, tag = 'scoped memory for _lambda_.40']
    #allocation8 [shape = 'u8[4096]{0}', space=vmem, size = 0x1000, scoped, tag = 'input window, operand 1']
    #allocation9 [shape = 's32[2]{0}', space=sflag, size = 0x8, scoped, tag = 'scoped memory for _lambda_.40']
    #allocation10 [shape = 'u8[4096]{0}', space=vmem, size = 0x1000, scoped, tag = 'input window, operand 2']
    #allocation11 [shape = 'u8[4096]{0}', space=vmem, size = 0x1000, scoped, tag = 'output window, operand 0']
    %8 = vsyncpa [#allocation6], 0
    %s9 = scalar_lea.sflag [#allocation6], 1
    %10 = vsyncpa %s9, 0
    %11 = vsyncpa [#allocation9], 0
    %s12 = scalar_lea.sflag [#allocation9], 1
    %13 = vsyncpa %s12, 0
    %14 = vsyncpa [#allocation7], 0
    %s15 = scalar_lea.sflag [#allocation7], 1
    %16 = vsyncpa %s15, 0
    loop: start=0, step=1, limit=10
    $region2: #{_lambda_.40} parent=1 // loop_pre_header
      _
    $region3: #{_lambda_.40} parent=1 // loop_header
      %s18 = sphi 0, %s22
      %p19 = scmp.ge.s32.totalorder %s18, 10
      %s25 = sphi 0, %s44
      %s26 = sphi 0, %s40
      %s27 = sphi 0, %s36
      %s28 = sphi 0, %s25
      %s29 = sphi 0, %s26
      %s30 = sphi 0, %s27
      %s31 = sphi 0, %s28
      %s32 = sphi 0, %s29
      %s33 = sphi 0, %s30
      %s49 = sphi 0, %s51
      %s52 = sphi 0, %s49
      %s53 = sphi 0, %s52
      %s69 = sphi 0, %s53
      %s77 = sphi 0, %s79
      %s80 = sphi 0, %s77
      %s81 = sphi 0, %s80
      %s97 = sphi 0, %s81
      %s105 = sphi 0, %s107
      %s108 = sphi 0, %s105
      %s109 = sphi 0, %s108
      %s125 = sphi 0, %s109
      %s133 = sphi 0, %s135
      %s136 = sphi 0, %s133
      %s137 = sphi 0, %s136
      %s153 = sphi 0, %s137
    $region4: #{_lambda_.40} parent=1 // loop_header_branch
      %21 = sbr.rel (%p19) target = $region8
    $region5: #{_lambda_.40} parent=1 // loop_body
      %s23 = ssub.s32 %s18, 1
      %s24 = ssub.s32 %s18, 2
      %s34 = sadd.s32 1, %s27
      %p35 = scmp.ge.s32.totalorder %s34, 1
      %s36 = scalar_select %p35, 0, %s34
      %s37 = sadd.s32 1, %s26
      %s38 = scalar_select %p35, %s37, %s26
      %p39 = scmp.ge.s32.totalorder %s38, 1
      %s40 = scalar_select %p39, 0, %s38
      %s41 = sadd.s32 1, %s25
      %s42 = scalar_select %p39, %s41, %s25
      %p43 = scmp.ge.s32.totalorder %s42, 8
      %s44 = scalar_select %p43, 0, %s42
      %s45 = ssub.s32 %s25, %s44
      %s46 = ssub.s32 %s26, %s40
      %s47 = sor.u32 %s45, %s46
      %p48 = scmp.eq.s32.totalorder %s47, 0
      %s50 = sadd.s32 %s49, 1
      %s51 = scalar_select %p48, %s49, %s50
      %p54 = pneg %p48
      %p55 = scmp.eq.s32.totalorder %s18, 7
      %p56 = por %p54, %p55
      %p57 = scmp.ne.s32.totalorder %s49, %s52
      %p58 = scmp.eq.s32.totalorder %s18, 0
      %p59 = por %p57, %p58
      %p60 = scmp.ne.s32.totalorder %s49, %s52
      %p61 = scmp.eq.s32.totalorder %s23, 7
      %p62 = por %p60, %p61
      %p63 = scmp.ne.s32.totalorder %s52, %s53
      %p64 = scmp.eq.s32.totalorder %s23, 0
      %p65 = por %p63, %p64
      %p66 = scmp.ne.s32.totalorder %s52, %s53
      %p67 = scmp.eq.s32.totalorder %s24, 7
      %p68 = por %p66, %p67
      %p70 = scmp.ne.s32.totalorder %s53, %s69
      %p71 = scmp.eq.s32.totalorder %s24, 0
      %p72 = por %p70, %p71
      %s73 = ssub.s32 %s25, %s44
      %s74 = ssub.s32 %s27, %s36
      %s75 = sor.u32 %s73, %s74
      %p76 = scmp.eq.s32.totalorder %s75, 0
      %s78 = sadd.s32 %s77, 1
      %s79 = scalar_select %p76, %s77, %s78
      %p82 = pneg %p76
      %p83 = scmp.eq.s32.totalorder %s18, 7
      %p84 = por %p82, %p83
      %p85 = scmp.ne.s32.totalorder %s77, %s80
      %p86 = scmp.eq.s32.totalorder %s18, 0
      %p87 = por %p85, %p86
      %p88 = scmp.ne.s32.totalorder %s77, %s80
      %p89 = scmp.eq.s32.totalorder %s23, 7
      %p90 = por %p88, %p89
      %p91 = scmp.ne.s32.totalorder %s80, %s81
      %p92 = scmp.eq.s32.totalorder %s23, 0
      %p93 = por %p91, %p92
      %p94 = scmp.ne.s32.totalorder %s80, %s81
      %p95 = scmp.eq.s32.totalorder %s24, 7
      %p96 = por %p94, %p95
      %p98 = scmp.ne.s32.totalorder %s81, %s97
      %p99 = scmp.eq.s32.totalorder %s24, 0
      %p100 = por %p98, %p99
      %s101 = ssub.s32 %s25, %s44
      %s102 = ssub.s32 %s27, %s36
      %s103 = sor.u32 %s101, %s102
      %p104 = scmp.eq.s32.totalorder %s103, 0
      %s106 = sadd.s32 %s105, 1
      %s107 = scalar_select %p104, %s105, %s106
      %p110 = pneg %p104
      %p111 = scmp.eq.s32.totalorder %s18, 7
      %p112 = por %p110, %p111
      %p113 = scmp.ne.s32.totalorder %s105, %s108
      %p114 = scmp.eq.s32.totalorder %s18, 0
      %p115 = por %p113, %p114
      %p116 = scmp.ne.s32.totalorder %s105, %s108
      %p117 = scmp.eq.s32.totalorder %s23, 7
      %p118 = por %p116, %p117
      %p119 = scmp.ne.s32.totalorder %s108, %s109
      %p120 = scmp.eq.s32.totalorder %s23, 0
      %p121 = por %p119, %p120
      %p122 = scmp.ne.s32.totalorder %s108, %s109
      %p123 = scmp.eq.s32.totalorder %s24, 7
      %p124 = por %p122, %p123
      %p126 = scmp.ne.s32.totalorder %s109, %s125
      %p127 = scmp.eq.s32.totalorder %s24, 0
      %p128 = por %p126, %p127
      %s129 = ssub.s32 %s25, %s44
      %s130 = ssub.s32 %s26, %s40
      %s131 = sor.u32 %s129, %s130
      %p132 = scmp.eq.s32.totalorder %s131, 0
      %s134 = sadd.s32 %s133, 1
      %s135 = scalar_select %p132, %s133, %s134
      %p138 = pneg %p132
      %p139 = scmp.eq.s32.totalorder %s18, 7
      %p140 = por %p138, %p139
      %p141 = scmp.ne.s32.totalorder %s133, %s136
      %p142 = scmp.eq.s32.totalorder %s18, 0
      %p143 = por %p141, %p142
      %p144 = scmp.ne.s32.totalorder %s133, %s136
      %p145 = scmp.eq.s32.totalorder %s23, 7
      %p146 = por %p144, %p145
      %p147 = scmp.ne.s32.totalorder %s136, %s137
      %p148 = scmp.eq.s32.totalorder %s23, 0
      %p149 = por %p147, %p148
      %p150 = scmp.ne.s32.totalorder %s136, %s137
      %p151 = scmp.eq.s32.totalorder %s24, 7
      %p152 = por %p150, %p151
      %p154 = scmp.ne.s32.totalorder %s137, %s153
      %p155 = scmp.eq.s32.totalorder %s24, 0
      %p156 = por %p154, %p155
      %p157 = scmp.le.s32.totalorder 1, %s18
      %p158 = scmp.lt.s32.totalorder %s18, 9
      %p159 = pnand %p157, %p158
      %p160 = pneg %p159
      // Predicated region
      $region9: #{_lambda_.40} parent=5 // pred_check
        _
      $region10: #{_lambda_.40} parent=5 // pred_check_branch
        %162 = sbr.rel (%p159) target = $region12
      $region11: #{_lambda_.40} parent=5 // pred_region
        %s163 = ssub.s32 %s18, 1
      $region12: #{_lambda_.40} parent=5 // pred_fallthru
        _
      %p164 = scmp.lt.s32.totalorder %s18, 8
      // Predicated region
      $region13: #{_lambda_.40} parent=5 // pred_check
        %p165 = pneg %p164
      $region14: #{_lambda_.40} parent=5 // pred_check_branch
        %167 = sbr.rel (%p165) target = $region16
      $region15: #{_lambda_.40} parent=5 // pred_region
        // Predicated region
        $region17: #{_lambda_.40} parent=15 // pred_check
          %p168 = pneg %p59
        $region18: #{_lambda_.40} parent=15 // pred_check_branch
          %170 = sbr.rel (%p168) target = $region20
        $region19: #{_lambda_.40} parent=15 // pred_region
          %s171 = sand.u32 %s49, 1
          %s172 = scalar_lea.sflag [#allocation6], %s171
          %s173 = sand.u32 %s49, 1
          %s174 = smul.addr %s173, 4
          %s175 = scalar_lea.vmem [#allocation5], %s174
          %s177 = ssub.s32 64, 64
          %178 = vsyncadd %s172, %s177
          %s179 = sadd.s32 %s26, %s25
          %s180 = smul.addr %s179, 64
          %s181 = scalar_lea.hbm %s0, %s180
          %s183 = sshll.u32 %s175, 4
          %s184 = int_to_ptr.vmem [resolvable:$true] %s183
          %186 = dma.hbm_to_vmem [thread:$0]  %s181, 64, %s184, %s172
        $region20: #{_lambda_.40} parent=15 // pred_fallthru
          _
        // Predicated region
        $region21: #{_lambda_.40} parent=15 // pred_check
          %p187 = pneg %p87
        $region22: #{_lambda_.40} parent=15 // pred_check_branch
          %189 = sbr.rel (%p187) target = $region24
        $region23: #{_lambda_.40} parent=15 // pred_region
          %s190 = sand.u32 %s18, 1
          %s191 = scalar_lea.sflag [#allocation9], %s190
          %s192 = sand.u32 %s77, 1
          %s193 = smul.addr %s192, 4
          %s194 = scalar_lea.vmem [#allocation8], %s193
          %s196 = ssub.s32 64, 64
          %197 = vsyncadd %s191, %s196
          %s198 = sadd.s32 %s27, %s25
          %s199 = sadd.s32 %s198, 8
          %s200 = smul.addr %s199, 64
          %s201 = scalar_lea.hbm %s1, %s200
          %s203 = sshll.u32 %s194, 4
          %s204 = int_to_ptr.vmem [resolvable:$true] %s203
          %206 = dma.hbm_to_vmem [thread:$0]  %s201, 64, %s204, %s191
        $region24: #{_lambda_.40} parent=15 // pred_fallthru
          _
        // Predicated region
        $region25: #{_lambda_.40} parent=15 // pred_check
          %p207 = pneg %p115
        $region26: #{_lambda_.40} parent=15 // pred_check_branch
          %209 = sbr.rel (%p207) target = $region28
        $region27: #{_lambda_.40} parent=15 // pred_region
          %s210 = sand.u32 %s18, 1
          %s211 = scalar_lea.sflag [#allocation9], %s210
          %s212 = sand.u32 %s105, 1
          %s213 = smul.addr %s212, 4
          %s214 = scalar_lea.vmem [#allocation10], %s213
          %s216 = ssub.s32 64, 64
          %217 = vsyncadd %s211, %s216
          %s218 = sadd.s32 %s27, %s25
          %s219 = sadd.s32 %s218, 16
          %s220 = smul.addr %s219, 64
          %s221 = scalar_lea.hbm %s2, %s220
          %s223 = sshll.u32 %s214, 4
          %s224 = int_to_ptr.vmem [resolvable:$true] %s223
          %226 = dma.hbm_to_vmem [thread:$0]  %s221, 64, %s224, %s211
        $region28: #{_lambda_.40} parent=15 // pred_fallthru
          _
      $region16: #{_lambda_.40} parent=5 // pred_fallthru
        _
      %p227 = scmp.le.s32.totalorder 1, %s18
      %p228 = scmp.lt.s32.totalorder %s18, 9
      %p229 = pnand %p227, %p228
      %p230 = pneg %p229
      // Predicated region
      $region29: #{_lambda_.40} parent=5 // pred_check
        _
      $region30: #{_lambda_.40} parent=5 // pred_check_branch
        %232 = sbr.rel (%p229) target = $region32
      $region31: #{_lambda_.40} parent=5 // pred_region
        %s233 = ssub.s32 %s18, 1
        %s234 = sand.u32 %s52, 1
        %s235 = scalar_lea.sflag [#allocation6], %s234
        %s236 = sand.u32 %s52, 1
        %s237 = smul.addr %s236, 4
        %s238 = scalar_lea.vmem [#allocation5], %s237
        // Predicated region
        $region33: #{_lambda_.40} parent=31 // pred_check
          %p239 = pneg %p65
        $region34: #{_lambda_.40} parent=31 // pred_check_branch
          %241 = sbr.rel (%p239) target = $region36
        $region35: #{_lambda_.40} parent=31 // pred_region
          %242 = dma.done %s235, 64
        $region36: #{_lambda_.40} parent=31 // pred_fallthru
          _
        %s243 = sand.u32 %s23, 1
        %s244 = scalar_lea.sflag [#allocation9], %s243
        %s245 = sand.u32 %s80, 1
        %s246 = smul.addr %s245, 4
        %s247 = scalar_lea.vmem [#allocation8], %s246
        // Predicated region
        $region37: #{_lambda_.40} parent=31 // pred_check
          %p248 = pneg %p93
        $region38: #{_lambda_.40} parent=31 // pred_check_branch
          %250 = sbr.rel (%p248) target = $region40
        $region39: #{_lambda_.40} parent=31 // pred_region
          %251 = dma.done %s244, 64
        $region40: #{_lambda_.40} parent=31 // pred_fallthru
          _
        %s252 = sand.u32 %s23, 1
        %s253 = scalar_lea.sflag [#allocation9], %s252
        %s254 = sand.u32 %s108, 1
        %s255 = smul.addr %s254, 4
        %s256 = scalar_lea.vmem [#allocation10], %s255
        // Predicated region
        $region41: #{_lambda_.40} parent=31 // pred_check
          %p257 = pneg %p121
        $region42: #{_lambda_.40} parent=31 // pred_check_branch
          %259 = sbr.rel (%p257) target = $region44
        $region43: #{_lambda_.40} parent=31 // pred_region
          %260 = dma.done %s253, 64
        $region44: #{_lambda_.40} parent=31 // pred_fallthru
          _
        %s261 = sand.u32 %s52, 1
        %s262 = scalar_lea.sflag [#allocation6], %s261
        %s263 = sand.u32 %s52, 1
        %s264 = smul.addr %s263, 4
        %s265 = scalar_lea.vmem [#allocation5], %s264
        %p266 = pneg %p65
        %p267 = pneg %p62
        %s268 = sand.u32 %s23, 1
        %s269 = scalar_lea.sflag [#allocation9], %s268
        %s270 = sand.u32 %s80, 1
        %s271 = smul.addr %s270, 4
        %s272 = scalar_lea.vmem [#allocation8], %s271
        %p273 = pneg %p93
        %p274 = pneg %p90
        %s275 = sand.u32 %s23, 1
        %s276 = scalar_lea.sflag [#allocation9], %s275
        %s277 = sand.u32 %s108, 1
        %s278 = smul.addr %s277, 4
        %s279 = scalar_lea.vmem [#allocation10], %s278
        %p280 = pneg %p121
        %p281 = pneg %p118
        %p282 = pneg %p149
        %p283 = pneg %p146
        %s284 = sand.u32 %s136, 1
        %s285 = scalar_lea.sflag [#allocation7], %s284
        %s286 = sand.u32 %s136, 1
        %s287 = smul.addr %s286, 4
        %s288 = scalar_lea.vmem [#allocation11], %s287
        %p290 = scmp.eq.s32.totalorder %s30, 0
        // Predicated region
        $region45: #{_lambda_.40} parent=31 // pred_check
          %p291 = pneg %p290
        $region46: #{_lambda_.40} parent=31 // pred_check_branch
          %293 = sbr.rel (%p291) target = $region48
        $region47: #{_lambda_.40} parent=31 // pred_region
          %vm294 = vcmask 7168
          %295 = vst.msk [vmem:[#allocation2] sm:$0xff] %vm294, -1e+30
          %296 = vst.msk [vmem:[#allocation3] sm:$0xff] %vm294, 0.0
          %vm297 = vcmask 64512
          %298 = vst.msk [vmem:[#allocation4] sm:$0xff] %vm297, 0.0
        $region48: #{_lambda_.40} parent=31 // pred_fallthru
          _
        %v299 = vld [vmem:[%s238] sm:$0xf]
        %v300 = vld [vmem:[%s247] sm:$0xf]
        %v301 = vld [vmem:[%s256] sm:$0xf]
        %vm302 = vcmask 64512
        %v304 = vsel %vm302, %v299, 0
        %v307 = vsel %vm302, %v300, 0
        %309 = vmatprep.subr.bf16.mxu0 0
        %310 = vmatpush1.bf16.xpose.msra.mxu0 %v307
        %311 = vmatprep.subr.bf16.mxu0 0
        %312 = vmatpush1.bf16.xpose.msra.mxu0 0
        %313 = vmatprep.subr.bf16.mxu0 0
        %314 = vmatpush1.bf16.xpose.msra.mxu0 0
        %315 = vmatprep.subr.bf16.mxu0 0
        %316 = vmatpush1.bf16.xpose.msra.mxu0 0
        %317 = vmatprep.subr.bf16.mxu0 0
        %318 = vmatpush1.bf16.xpose.msra.mxu0 0
        %319 = vmatprep.subr.bf16.mxu0 0
        %320 = vmatpush1.bf16.xpose.msra.mxu0 0
        %321 = vmatprep.subr.bf16.mxu0 0
        %322 = vmatpush1.bf16.xpose.msra.mxu0 0
        %323 = vmatprep.subr.bf16.mxu0 0
        %324 = vmatpush1.bf16.xpose.msra.mxu0 0
        %325 = vmatprep.subr.bf16.mxu0 0
        %326 = vmatpush1.bf16.xpose.msra.mxu0 0
        %327 = vmatprep.subr.bf16.mxu0 0
        %328 = vmatpush1.bf16.xpose.msra.mxu0 0
        %329 = vmatprep.subr.bf16.mxu0 0
        %330 = vmatpush1.bf16.xpose.msra.mxu0 0
        %331 = vmatprep.subr.bf16.mxu0 0
        %332 = vmatpush1.bf16.xpose.msra.mxu0 0
        %333 = vmatprep.subr.bf16.mxu0 0
        %334 = vmatpush1.bf16.xpose.msra.mxu0 0
        %335 = vmatprep.subr.bf16.mxu0 0
        %336 = vmatpush1.bf16.xpose.msra.mxu0 0
        %337 = vmatprep.subr.bf16.mxu0 0
        %338 = vmatpush1.bf16.xpose.msra.mxu0 0
        %339 = vmatprep.subr.bf16.mxu0 0
        %340 = vmatpush1.bf16.xpose.msra.mxu0 0
        %341 = vmatprep.mubr.bf16.mxu0 0
        %342 = vmatmul.mubr.bf16.gmra.mrb[0].mxu0 %v304
        %v343 = vpop.f32.mrb[0].mxu0
        %v344 = vadd.f32 0.0, %v343
        %v345 = vpop.f32.mrb[0].mxu0
        %v346 = vpop.f32.mrb[0].mxu0
        %v347 = vpop.f32.mrb[0].mxu0
        %348 = vdwg.mxu0
        %v349 = vmul.f32 %v344, 0.35355338
        %v350 = vld [vmem:[#allocation2] sm:$0xff]
        %v351 = vsel %vm302, %v349, -inf
        %352 = vmax.xlane.f32.xlu0 %v351
        %v353 = vpop.xlane.xlu0 %352
        %v354 = vmax.f32 %v350, %v353
        %v355 = vsub.f32 %v350, %v354
        %v356 = vmul.f32 %v355, 1.442695
        %v357 = vpow.pop %v356
        %359 = vset.pattern.permute.xlu0 0
        %360 = vperm.xlu0 %359, %v354
        %v361 = vpop.permute.xlu0 %360
        %v363 = vsub.f32 %v349, %v361
        %v364 = vmul.f32 %v363, 1.442695
        %v365 = vpow.pop %v364
        %v366 = vld [vmem:[#allocation3] sm:$0xff]
        %v367 = vmul.f32 %v357, %v366
        %v368 = vsel %vm302, %v365, 0.0
        %369 = vadd.xlane.f32.xlu0 %v368
        %v370 = vpop.xlane.xlu0 %369
        %v371 = vadd.f32 %v367, %v370
        %vm372 = vcmask 7168
        %373 = vst.msk [vmem:[#allocation3] sm:$0xff] %vm372, %v371
        %v374 = vld [vmem:[#allocation4] sm:$0xff]
        %376 = vset.pattern.permute.xlu0 0
        %377 = vperm.xlu0 %376, %v357
        %v378 = vpop.permute.xlu0 %377
        %v380 = vmul.f32 %v378, %v374
        %v381 = vpack.c.bf16 %v365, %v365
        %v383 = vsel %vm302, %v381, 0
        %vm385 = vcmask 1043456
        %v387 = vsel %vm385, %v301, 0
        %389 = vmatprep.subr.bf16.mxu0 0
        %390 = vmatpush1.bf16.msra.mxu0 %v387
        %391 = vmatprep.subr.bf16.mxu0 0
        %392 = vmatpush1.bf16.msra.mxu0 0
        %393 = vmatprep.subr.bf16.mxu0 0
        %394 = vmatpush1.bf16.msra.mxu0 0
        %395 = vmatprep.subr.bf16.mxu0 0
        %396 = vmatpush1.bf16.msra.mxu0 0
        %397 = vmatprep.subr.bf16.mxu0 0
        %398 = vmatpush1.bf16.msra.mxu0 0
        %399 = vmatprep.subr.bf16.mxu0 0
        %400 = vmatpush1.bf16.msra.mxu0 0
        %401 = vmatprep.subr.bf16.mxu0 0
        %402 = vmatpush1.bf16.msra.mxu0 0
        %403 = vmatprep.subr.bf16.mxu0 0
        %404 = vmatpush1.bf16.msra.mxu0 0
        %405 = vmatprep.subr.bf16.mxu0 0
        %406 = vmatpush1.bf16.msra.mxu0 0
        %407 = vmatprep.subr.bf16.mxu0 0
        %408 = vmatpush1.bf16.msra.mxu0 0
        %409 = vmatprep.subr.bf16.mxu0 0
        %410 = vmatpush1.bf16.msra.mxu0 0
        %411 = vmatprep.subr.bf16.mxu0 0
        %412 = vmatpush1.bf16.msra.mxu0 0
        %413 = vmatprep.subr.bf16.mxu0 0
        %414 = vmatpush1.bf16.msra.mxu0 0
        %415 = vmatprep.subr.bf16.mxu0 0
        %416 = vmatpush1.bf16.msra.mxu0 0
        %417 = vmatprep.subr.bf16.mxu0 0
        %418 = vmatpush1.bf16.msra.mxu0 0
        %419 = vmatprep.subr.bf16.mxu0 0
        %420 = vmatpush1.bf16.msra.mxu0 0
        %421 = vmatprep.mubr.bf16.mxu0 0
        %422 = vmatmul.mubr.bf16.gmra.mrb[0].mxu0 %v383
        %v423 = vpop.f32.mrb[0].mxu0
        %v424 = vadd.f32 0.0, %v423
        %v425 = vpop.f32.mrb[0].mxu0
        %v426 = vpop.f32.mrb[0].mxu0
        %v427 = vpop.f32.mrb[0].mxu0
        %428 = vdwg.mxu0
        %v429 = vadd.f32 %v380, %v424
        %430 = vst.msk [vmem:[#allocation4] sm:$0xff] %vm302, %v429
        %431 = vst.msk [vmem:[#allocation2] sm:$0xff] %vm372, %v354
        // Predicated region
        $region49: #{_lambda_.40} parent=31 // pred_check
          %p432 = pneg %p290
        $region50: #{_lambda_.40} parent=31 // pred_check_branch
          %434 = sbr.rel (%p432) target = $region52
        $region51: #{_lambda_.40} parent=31 // pred_region
          %v435 = vld [vmem:[#allocation3] sm:$0xff]
          %vm436 = vcmp.gt.f32.partialorder %v435, 0.0
          %v437 = vrcp.pop %v435
          %v438 = vsel %vm436, %v437, 0.0
          %v439 = vld [vmem:[#allocation4] sm:$0xff]
          %441 = vset.pattern.permute.xlu0 0
          %442 = vperm.xlu0 %441, %v438
          %v443 = vpop.permute.xlu0 %442
          %v445 = vmul.f32 %v439, %v443
          %v446 = vpack.c.bf16 %v445, %v445
          %vm447 = vcmask 60416
          %448 = vst.msk [vmem:[%s288] sm:$0xf] %vm447, %v446
        $region52: #{_lambda_.40} parent=31 // pred_fallthru
          _
        %s449 = sand.u32 %s136, 1
        %s450 = scalar_lea.sflag [#allocation7], %s449
        %s451 = sand.u32 %s136, 1
        %s452 = smul.addr %s451, 4
        %s453 = scalar_lea.vmem [#allocation11], %s452
        // Predicated region
        $region53: #{_lambda_.40} parent=31 // pred_check
          %p454 = pneg %p146
        $region54: #{_lambda_.40} parent=31 // pred_check_branch
          %456 = sbr.rel (%p454) target = $region56
        $region55: #{_lambda_.40} parent=31 // pred_region
          %s458 = ssub.s32 64, 64
          %459 = vsyncadd %s450, %s458
          %s460 = sadd.s32 %s29, %s28
          %s461 = smul.addr %s460, 64
          %s462 = scalar_lea.hbm %s3, %s461
          %s464 = sshll.u32 %s453, 4
          %s465 = int_to_ptr.vmem [resolvable:$true] %s464
          %467 = dma.vmem_to_hbm [thread:$0]  %s465, 64, %s462, %s450
        $region56: #{_lambda_.40} parent=31 // pred_fallthru
          _
      $region32: #{_lambda_.40} parent=5 // pred_fallthru
        _
      %p468 = scmp.le.s32.totalorder 2, %s18
      // Predicated region
      $region57: #{_lambda_.40} parent=5 // pred_check
        %p469 = pneg %p468
      $region58: #{_lambda_.40} parent=5 // pred_check_branch
        %471 = sbr.rel (%p469) target = $region60
      $region59: #{_lambda_.40} parent=5 // pred_region
        %s472 = ssub.s32 %s18, 2
        // Predicated region
        $region61: #{_lambda_.40} parent=59 // pred_check
          %p473 = pneg %p152
        $region62: #{_lambda_.40} parent=59 // pred_check_branch
          %475 = sbr.rel (%p473) target = $region64
        $region63: #{_lambda_.40} parent=59 // pred_region
          %s476 = sand.u32 %s137, 1
          %s477 = scalar_lea.sflag [#allocation7], %s476
          %s478 = sand.u32 %s137, 1
          %s479 = smul.addr %s478, 4
          %s480 = scalar_lea.vmem [#allocation11], %s479
          %481 = dma.done %s477, 64
        $region64: #{_lambda_.40} parent=59 // pred_fallthru
          _
      $region60: #{_lambda_.40} parent=5 // pred_fallthru
        _
    $region6: #{_lambda_.40} parent=1 // loop_footer
      %s22 = sadd.s32 1, %s18
    $region7: #{_lambda_.40} parent=1 // loop_footer_branch
      %17 = sbr.rel target = $region3
    $region8: #{_lambda_.40} parent=1 // loop_exit
      _
    %482 = vsyncpa [#allocation6], 1
    %s483 = scalar_lea.sflag [#allocation6], 1
    %484 = vsyncpa %s483, 1
    %485 = vsyncpa [#allocation9], 1
    %s486 = scalar_lea.sflag [#allocation9], 1
    %487 = vsyncpa %s486, 1
    %488 = vsyncpa [#allocation7], 1
    %s489 = scalar_lea.sflag [#allocation7], 1
    %490 = vsyncpa %s489, 1

// kernel: _lambda_.39
$region0: #{_lambda_.39}
  #allocation0 [shape = 'u32[]', space=smem, size = 0x4, offset = 0x4, fixed_abs, tag = 'smem constant byte address 0x4 - core index']
  #allocation1 [shape = 'u32[144,128]{1,0:T(1,128)}', space=vmem, size = 0x12000, scoped, tag = 'internal scratch']
  #allocation2 [shape = 'f32[16,128]{1,0:T(8,128)}', space=vmem, size = 0x2000, scoped, tag = 'scratch operand']
  %s0 = inlined_call_operand.hbm [shape: bf16[16,128], index: 0, kind: input, shape index: {}]
  %s1 = inlined_call_operand.hbm [shape: bf16[128,128], index: 1, kind: input, shape index: {}]
  %s2 = inlined_call_operand.hbm [shape: bf16[16,128], index: 2, kind: output, shape index: {}]
  %s3 = sld [smem:[#allocation0]]
  $region34: #{_lambda_.39} parent=0
    _
  %s5 = ssub.s32 1, %s3
  %s6 = scalar_select 0, %s5, %s3
  $region1: #{_lambda_.39} parent=0
    #allocation3 [shape = 'u8[4096]{0}', space=vmem, size = 0x1000, scoped, tag = 'input window, operand 0, single buffered']
    #allocation4 [shape = 's32[1]{0}', space=sflag, size = 0x4, scoped, tag = 'scoped memory for _lambda_.39']
    #allocation5 [shape = 's32[1]{0}', space=sflag, size = 0x4, scoped, tag = 'scoped memory for _lambda_.39']
    #allocation6 [shape = 'u8[32768]{0}', space=vmem, size = 0x8000, scoped, tag = 'input window, operand 1, single buffered']
    #allocation7 [shape = 's32[1]{0}', space=sflag, size = 0x4, scoped, tag = 'scoped memory for _lambda_.39']
    #allocation8 [shape = 'u8[4096]{0}', space=vmem, size = 0x1000, scoped, tag = 'output window, operand 0, single buffered']
    %7 = vsyncpa [#allocation4], 0
    %8 = vsyncpa [#allocation7], 0
    %9 = vsyncpa [#allocation5], 0
    // Predicated region
    $region2: #{_lambda_.39} parent=1 // pred_check
      _
    $region3: #{_lambda_.39} parent=1 // pred_check_branch
      %11 = sbr.rel (0) target = $region5
    $region4: #{_lambda_.39} parent=1 // pred_region
      %s13 = ssub.s32 128, 128
      %14 = vsyncadd [#allocation4], %s13
      %s15 = sshll.u32 [#allocation3], 4
      %s16 = int_to_ptr.vmem [resolvable:$true] %s15
      %21 = dma.hbm_to_vmem [thread:$0]  %s0, 128, %s16, [#allocation4], 64, 64, 4
    $region5: #{_lambda_.39} parent=1 // pred_fallthru
      _
    // Predicated region
    $region6: #{_lambda_.39} parent=1 // pred_check
      _
    $region7: #{_lambda_.39} parent=1 // pred_check_branch
      %23 = sbr.rel (0) target = $region9
    $region8: #{_lambda_.39} parent=1 // pred_region
      %s25 = ssub.s32 1024, 1024
      %26 = vsyncadd [#allocation7], %s25
      %s27 = sshll.u32 [#allocation6], 4
      %s28 = int_to_ptr.vmem [resolvable:$true] %s27
      %33 = dma.hbm_to_vmem [thread:$0]  %s1, 1024, %s28, [#allocation7], 64, 64, 4
    $region9: #{_lambda_.39} parent=1 // pred_fallthru
      _
    // Predicated region
    $region10: #{_lambda_.39} parent=1 // pred_check
      _
    $region11: #{_lambda_.39} parent=1 // pred_check_branch
      %35 = sbr.rel (0) target = $region13
    $region12: #{_lambda_.39} parent=1 // pred_region
      %36 = dma.done [#allocation4], 128
    $region13: #{_lambda_.39} parent=1 // pred_fallthru
      _
    // Predicated region
    $region14: #{_lambda_.39} parent=1 // pred_check
      _
    $region15: #{_lambda_.39} parent=1 // pred_check_branch
      %38 = sbr.rel (0) target = $region17
    $region16: #{_lambda_.39} parent=1 // pred_region
      %39 = dma.done [#allocation7], 1024
    $region17: #{_lambda_.39} parent=1 // pred_fallthru
      _
    %p41 = scmp.eq.s32.totalorder 0, 0
    // Predicated region
    $region18: #{_lambda_.39} parent=1 // pred_check
      %p42 = pneg %p41
    $region19: #{_lambda_.39} parent=1 // pred_check_branch
      %44 = sbr.rel (%p42) target = $region21
    $region20: #{_lambda_.39} parent=1 // pred_region
      %45 = vst [vmem:[#allocation2] sm:$0xff] 0.0
      %46 = vst [vmem:[#allocation2 + $0x8] sm:$0xff] 0.0
    $region21: #{_lambda_.39} parent=1 // pred_fallthru
      _
    %v47 = vld [vmem:[#allocation2] sm:$0xff]
    %v48 = vld [vmem:[#allocation2 + $0x8] sm:$0xff]
    %v49 = vld [vmem:[#allocation3] sm:$0xf]
    %v50 = vld [vmem:[#allocation3 + $0x4] sm:$0xf]
    %v51 = vld [vmem:[#allocation6] sm:$0xf]
    %v52 = vld [vmem:[#allocation6 + $0x4] sm:$0xf]
    %v53 = vld [vmem:[#allocation6 + $0x8] sm:$0xf]
    %v54 = vld [vmem:[#allocation6 + $0xc] sm:$0xf]
    %v55 = vld [vmem:[#allocation6 + $0x10] sm:$0xf]
    %v56 = vld [vmem:[#allocation6 + $0x14] sm:$0xf]
    %v57 = vld [vmem:[#allocation6 + $0x18] sm:$0xf]
    %v58 = vld [vmem:[#allocation6 + $0x1c] sm:$0xf]
    %v59 = vld [vmem:[#allocation6 + $0x20] sm:$0xf]
    %v60 = vld [vmem:[#allocation6 + $0x24] sm:$0xf]
    %v61 = vld [vmem:[#allocation6 + $0x28] sm:$0xf]
    %v62 = vld [vmem:[#allocation6 + $0x2c] sm:$0xf]
    %v63 = vld [vmem:[#allocation6 + $0x30] sm:$0xf]
    %v64 = vld [vmem:[#allocation6 + $0x34] sm:$0xf]
    %v65 = vld [vmem:[#allocation6 + $0x38] sm:$0xf]
    %v66 = vld [vmem:[#allocation6 + $0x3c] sm:$0xf]
    %v69 = vunpack.c.l.b16 %v49
    %v70 = vunpack.c.l.b16 %v50
    %v71 = vpack.c.b16 %v70, %v69
    %v89 = vunpack.c.l.b16 %v51
    %v90 = vunpack.c.l.b16 %v52
    %v91 = vunpack.c.l.b16 %v53
    %v92 = vunpack.c.l.b16 %v54
    %v93 = vunpack.c.l.b16 %v55
    %v94 = vunpack.c.l.b16 %v56
    %v95 = vunpack.c.l.b16 %v57
    %v96 = vunpack.c.l.b16 %v58
    %v97 = vunpack.c.l.b16 %v59
    %v98 = vunpack.c.l.b16 %v60
    %v99 = vunpack.c.l.b16 %v61
    %v100 = vunpack.c.l.b16 %v62
    %v101 = vunpack.c.l.b16 %v63
    %v102 = vunpack.c.l.b16 %v64
    %v103 = vunpack.c.l.b16 %v65
    %v104 = vunpack.c.l.b16 %v66
    %v105 = vpack.c.b16 %v90, %v89
    %v106 = vpack.c.b16 %v92, %v91
    %v107 = vpack.c.b16 %v94, %v93
    %v108 = vpack.c.b16 %v96, %v95
    %v109 = vpack.c.b16 %v98, %v97
    %v110 = vpack.c.b16 %v100, %v99
    %v111 = vpack.c.b16 %v102, %v101
    %v112 = vpack.c.b16 %v104, %v103
    %121 = vmatprep.subr.bf16.mxu0 0
    %122 = vmatpush1.bf16.msra.mxu0 %v105
    %123 = vmatprep.subr.bf16.mxu0 0
    %124 = vmatpush1.bf16.msra.mxu0 %v106
    %125 = vmatprep.subr.bf16.mxu0 0
    %126 = vmatpush1.bf16.msra.mxu0 %v107
    %127 = vmatprep.subr.bf16.mxu0 0
    %128 = vmatpush1.bf16.msra.mxu0 %v108
    %129 = vmatprep.subr.bf16.mxu0 0
    %130 = vmatpush1.bf16.msra.mxu0 %v109
    %131 = vmatprep.subr.bf16.mxu0 0
    %132 = vmatpush1.bf16.msra.mxu0 %v110
    %133 = vmatprep.subr.bf16.mxu0 0
    %134 = vmatpush1.bf16.msra.mxu0 %v111
    %135 = vmatprep.subr.bf16.mxu0 0
    %136 = vmatpush1.bf16.msra.mxu0 %v112
    %137 = vmatprep.subr.bf16.mxu0 0
    %138 = vmatpush1.bf16.msra.mxu0 0
    %139 = vmatprep.subr.bf16.mxu0 0
    %140 = vmatpush1.bf16.msra.mxu0 0
    %141 = vmatprep.subr.bf16.mxu0 0
    %142 = vmatpush1.bf16.msra.mxu0 0
    %143 = vmatprep.subr.bf16.mxu0 0
    %144 = vmatpush1.bf16.msra.mxu0 0
    %145 = vmatprep.subr.bf16.mxu0 0
    %146 = vmatpush1.bf16.msra.mxu0 0
    %147 = vmatprep.subr.bf16.mxu0 0
    %148 = vmatpush1.bf16.msra.mxu0 0
    %149 = vmatprep.subr.bf16.mxu0 0
    %150 = vmatpush1.bf16.msra.mxu0 0
    %151 = vmatprep.subr.bf16.mxu0 0
    %152 = vmatpush1.bf16.msra.mxu0 0
    %153 = vmatprep.mubr.bf16.mxu0 0
    %154 = vmatmul.mubr.bf16.gmra.mrb[0].mxu0 %v71
    %v155 = vpop.f32.mrb[0].mxu0
    %v156 = vadd.f32 0.0, %v155
    %v157 = vpop.f32.mrb[0].mxu0
    %v158 = vpop.f32.mrb[0].mxu0
    %v159 = vadd.f32 0.0, %v158
    %v160 = vpop.f32.mrb[0].mxu0
    %161 = vdwg.mxu0
    %v162 = vadd.f32 %v47, %v156
    %v163 = vadd.f32 %v48, %v159
    %164 = vst [vmem:[#allocation2] sm:$0xff] %v162
    %165 = vst [vmem:[#allocation2 + $0x8] sm:$0xff] %v163
    // Predicated region
    $region22: #{_lambda_.39} parent=1 // pred_check
      %p166 = pneg %p41
    $region23: #{_lambda_.39} parent=1 // pred_check_branch
      %168 = sbr.rel (%p166) target = $region25
    $region24: #{_lambda_.39} parent=1 // pred_region
      %v169 = vld [vmem:[#allocation2] sm:$0xff]
      %v170 = vld [vmem:[#allocation2 + $0x8] sm:$0xff]
      %v171 = vpack.c.bf16 %v170, %v169
      %v173 = vunpack.c.l.b16 %v171
      %v174 = vunpack.c.h.b16 %v171
      %v175 = vpack.c.b16 %v173, %v173
      %v176 = vpack.c.b16 %v174, %v174
      %179 = vst [vmem:[#allocation8] sm:$0xf] %v175
      %180 = vst [vmem:[#allocation8 + $0x4] sm:$0xf] %v176
    $region25: #{_lambda_.39} parent=1 // pred_fallthru
      _
    // Predicated region
    $region26: #{_lambda_.39} parent=1 // pred_check
      _
    $region27: #{_lambda_.39} parent=1 // pred_check_branch
      %182 = sbr.rel (0) target = $region29
    $region28: #{_lambda_.39} parent=1 // pred_region
      %s184 = ssub.s32 128, 128
      %185 = vsyncadd [#allocation5], %s184
      %s186 = sshll.u32 [#allocation8], 4
      %s187 = int_to_ptr.vmem [resolvable:$true] %s186
      %192 = dma.vmem_to_hbm [thread:$0]  %s187, 128, %s2, [#allocation5], 64, 64, 4
    $region29: #{_lambda_.39} parent=1 // pred_fallthru
      _
    // Predicated region
    $region30: #{_lambda_.39} parent=1 // pred_check
      _
    $region31: #{_lambda_.39} parent=1 // pred_check_branch
      %194 = sbr.rel (0) target = $region33
    $region32: #{_lambda_.39} parent=1 // pred_region
      %195 = dma.done [#allocation5], 128
    $region33: #{_lambda_.39} parent=1 // pred_fallthru
      _
    %196 = vsyncpa [#allocation4], 1
    %197 = vsyncpa [#allocation7], 1
    %198 = vsyncpa [#allocation5], 1

// kernel: _lambda_.41
$region0: #{_lambda_.41}
  #allocation0 [shape = 'u32[]', space=smem, size = 0x4, offset = 0x4, fixed_abs, tag = 'smem constant byte address 0x4 - core index']
  #allocation1 [shape = 'u32[144,128]{1,0:T(1,128)}', space=vmem, size = 0x12000, scoped, tag = 'internal scratch']
  #allocation2 [shape = 'f32[16,32]{1,0:T(8,128)}', space=vmem, size = 0x2000, scoped, tag = 'scratch operand']
  %s0 = inlined_call_operand.hbm [shape: bf16[16,128], index: 0, kind: input, shape index: {}]
  %s1 = inlined_call_operand.hbm [shape: bf16[128,32], index: 1, kind: input, shape index: {}]
  %s2 = inlined_call_operand.hbm [shape: bf16[16,32], index: 2, kind: input, shape index: {}]
  %s3 = inlined_call_operand.hbm [shape: f32[1,32], index: 3, kind: input, shape index: {}]
  %s4 = inlined_call_operand.hbm [shape: f32[1,32], index: 4, kind: input, shape index: {}]
  %s5 = inlined_call_operand.hbm [shape: bf16[16,32], index: 5, kind: output, shape index: {}]
  %s6 = sld [smem:[#allocation0]]
  $region58: #{_lambda_.41} parent=0
    _
  %s8 = ssub.s32 1, %s6
  %s9 = scalar_select 0, %s8, %s6
  $region1: #{_lambda_.41} parent=0
    #allocation3 [shape = 'u8[4096]{0}', space=vmem, size = 0x1000, scoped, tag = 'input window, operand 0, single buffered']
    #allocation4 [shape = 's32[1]{0}', space=sflag, size = 0x4, scoped, tag = 'scoped memory for _lambda_.41']
    #allocation5 [shape = 's32[1]{0}', space=sflag, size = 0x4, scoped, tag = 'scoped memory for _lambda_.41']
    #allocation6 [shape = 'u8[32768]{0}', space=vmem, size = 0x8000, scoped, tag = 'input window, operand 1, single buffered']
    #allocation7 [shape = 's32[1]{0}', space=sflag, size = 0x4, scoped, tag = 'scoped memory for _lambda_.41']
    #allocation8 [shape = 'u8[4096]{0}', space=vmem, size = 0x1000, scoped, tag = 'input window, operand 2, single buffered']
    #allocation9 [shape = 'u8[512]{0}', space=vmem, size = 0x400, scoped, tag = 'input window, operand 3, single buffered']
    #allocation10 [shape = 's32[1]{0}', space=sflag, size = 0x4, scoped, tag = 'scoped memory for _lambda_.41']
    #allocation11 [shape = 'u8[512]{0}', space=vmem, size = 0x400, scoped, tag = 'input window, operand 4, single buffered']
    #allocation12 [shape = 'u8[4096]{0}', space=vmem, size = 0x1000, scoped, tag = 'output window, operand 0, single buffered']
    %10 = vsyncpa [#allocation4], 0
    %11 = vsyncpa [#allocation7], 0
    %12 = vsyncpa [#allocation10], 0
    %13 = vsyncpa [#allocation5], 0
    // Predicated region
    $region2: #{_lambda_.41} parent=1 // pred_check
      _
    $region3: #{_lambda_.41} parent=1 // pred_check_branch
      %15 = sbr.rel (0) target = $region5
    $region4: #{_lambda_.41} parent=1 // pred_region
      %s17 = ssub.s32 128, 128
      %18 = vsyncadd [#allocation4], %s17
      %s19 = sshll.u32 [#allocation3], 4
      %s20 = int_to_ptr.vmem [resolvable:$true] %s19
      %25 = dma.hbm_to_vmem [thread:$0]  %s0, 128, %s20, [#allocation4], 64, 64, 4
    $region5: #{_lambda_.41} parent=1 // pred_fallthru
      _
    // Predicated region
    $region6: #{_lambda_.41} parent=1 // pred_check
      _
    $region7: #{_lambda_.41} parent=1 // pred_check_branch
      %27 = sbr.rel (0) target = $region9
    $region8: #{_lambda_.41} parent=1 // pred_region
      %s29 = ssub.s32 1024, 1024
      %30 = vsyncadd [#allocation7], %s29
      %s31 = sshll.u32 [#allocation6], 4
      %s32 = int_to_ptr.vmem [resolvable:$true] %s31
      %37 = dma.hbm_to_vmem [thread:$0]  %s1, 1024, %s32, [#allocation7], 64, 64, 4
    $region9: #{_lambda_.41} parent=1 // pred_fallthru
      _
    // Predicated region
    $region10: #{_lambda_.41} parent=1 // pred_check
      _
    $region11: #{_lambda_.41} parent=1 // pred_check_branch
      %39 = sbr.rel (0) target = $region13
    $region12: #{_lambda_.41} parent=1 // pred_region
      %s41 = ssub.s32 128, 128
      %42 = vsyncadd [#allocation7], %s41
      %s43 = sshll.u32 [#allocation8], 4
      %s44 = int_to_ptr.vmem [resolvable:$true] %s43
      %49 = dma.hbm_to_vmem [thread:$0]  %s2, 128, %s44, [#allocation7], 64, 64, 4
    $region13: #{_lambda_.41} parent=1 // pred_fallthru
      _
    // Predicated region
    $region14: #{_lambda_.41} parent=1 // pred_check
      _
    $region15: #{_lambda_.41} parent=1 // pred_check_branch
      %51 = sbr.rel (0) target = $region17
    $region16: #{_lambda_.41} parent=1 // pred_region
      %s53 = ssub.s32 16, 16
      %54 = vsyncadd [#allocation10], %s53
      %s56 = sshll.u32 [#allocation9], 4
      %s57 = int_to_ptr.vmem [resolvable:$true] %s56
      %59 = dma.hbm_to_vmem [thread:$0]  %s3, 16, %s57, [#allocation10]
    $region17: #{_lambda_.41} parent=1 // pred_fallthru
      _
    // Predicated region
    $region18: #{_lambda_.41} parent=1 // pred_check
      _
    $region19: #{_lambda_.41} parent=1 // pred_check_branch
      %61 = sbr.rel (0) target = $region21
    $region20: #{_lambda_.41} parent=1 // pred_region
      %s63 = ssub.s32 16, 16
      %64 = vsyncadd [#allocation10], %s63
      %s66 = sshll.u32 [#allocation11], 4
      %s67 = int_to_ptr.vmem [resolvable:$true] %s66
      %69 = dma.hbm_to_vmem [thread:$0]  %s4, 16, %s67, [#allocation10]
    $region21: #{_lambda_.41} parent=1 // pred_fallthru
      _
    // Predicated region
    $region22: #{_lambda_.41} parent=1 // pred_check
      _
    $region23: #{_lambda_.41} parent=1 // pred_check_branch
      %71 = sbr.rel (0) target = $region25
    $region24: #{_lambda_.41} parent=1 // pred_region
      %72 = dma.done [#allocation4], 128
    $region25: #{_lambda_.41} parent=1 // pred_fallthru
      _
    // Predicated region
    $region26: #{_lambda_.41} parent=1 // pred_check
      _
    $region27: #{_lambda_.41} parent=1 // pred_check_branch
      %74 = sbr.rel (0) target = $region29
    $region28: #{_lambda_.41} parent=1 // pred_region
      %75 = dma.done [#allocation7], 1024
    $region29: #{_lambda_.41} parent=1 // pred_fallthru
      _
    // Predicated region
    $region30: #{_lambda_.41} parent=1 // pred_check
      _
    $region31: #{_lambda_.41} parent=1 // pred_check_branch
      %77 = sbr.rel (0) target = $region33
    $region32: #{_lambda_.41} parent=1 // pred_region
      %78 = dma.done [#allocation7], 128
    $region33: #{_lambda_.41} parent=1 // pred_fallthru
      _
    // Predicated region
    $region34: #{_lambda_.41} parent=1 // pred_check
      _
    $region35: #{_lambda_.41} parent=1 // pred_check_branch
      %80 = sbr.rel (0) target = $region37
    $region36: #{_lambda_.41} parent=1 // pred_region
      %81 = dma.done [#allocation10], 16
    $region37: #{_lambda_.41} parent=1 // pred_fallthru
      _
    // Predicated region
    $region38: #{_lambda_.41} parent=1 // pred_check
      _
    $region39: #{_lambda_.41} parent=1 // pred_check_branch
      %83 = sbr.rel (0) target = $region41
    $region40: #{_lambda_.41} parent=1 // pred_region
      %84 = dma.done [#allocation10], 16
    $region41: #{_lambda_.41} parent=1 // pred_fallthru
      _
    %p86 = scmp.eq.s32.totalorder 0, 0
    // Predicated region
    $region42: #{_lambda_.41} parent=1 // pred_check
      %p87 = pneg %p86
    $region43: #{_lambda_.41} parent=1 // pred_check_branch
      %89 = sbr.rel (%p87) target = $region45
    $region44: #{_lambda_.41} parent=1 // pred_region
      %vm90 = vcmask 261120
      %91 = vst.msk [vmem:[#allocation2] sm:$0xff] %vm90, 0.0
      %92 = vst.msk [vmem:[#allocation2 + $0x8] sm:$0xff] %vm90, 0.0
    $region45: #{_lambda_.41} parent=1 // pred_fallthru
      _
    %v93 = vld [vmem:[#allocation2] sm:$0xff]
    %v94 = vld [vmem:[#allocation2 + $0x8] sm:$0xff]
    %v95 = vld [vmem:[#allocation3] sm:$0xf]
    %v96 = vld [vmem:[#allocation3 + $0x4] sm:$0xf]
    %v97 = vld [vmem:[#allocation6] sm:$0xf]
    %v98 = vld [vmem:[#allocation6 + $0x4] sm:$0xf]
    %v99 = vld [vmem:[#allocation6 + $0x8] sm:$0xf]
    %v100 = vld [vmem:[#allocation6 + $0xc] sm:$0xf]
    %v101 = vld [vmem:[#allocation6 + $0x10] sm:$0xf]
    %v102 = vld [vmem:[#allocation6 + $0x14] sm:$0xf]
    %v103 = vld [vmem:[#allocation6 + $0x18] sm:$0xf]
    %v104 = vld [vmem:[#allocation6 + $0x1c] sm:$0xf]
    %v105 = vld [vmem:[#allocation6 + $0x20] sm:$0xf]
    %v106 = vld [vmem:[#allocation6 + $0x24] sm:$0xf]
    %v107 = vld [vmem:[#allocation6 + $0x28] sm:$0xf]
    %v108 = vld [vmem:[#allocation6 + $0x2c] sm:$0xf]
    %v109 = vld [vmem:[#allocation6 + $0x30] sm:$0xf]
    %v110 = vld [vmem:[#allocation6 + $0x34] sm:$0xf]
    %v111 = vld [vmem:[#allocation6 + $0x38] sm:$0xf]
    %v112 = vld [vmem:[#allocation6 + $0x3c] sm:$0xf]
    %v115 = vunpack.c.l.b16 %v95
    %v116 = vunpack.c.l.b16 %v96
    %v117 = vpack.c.b16 %v116, %v115
    %v135 = vunpack.c.l.b16 %v97
    %v136 = vunpack.c.l.b16 %v98
    %v137 = vunpack.c.l.b16 %v99
    %v138 = vunpack.c.l.b16 %v100
    %v139 = vunpack.c.l.b16 %v101
    %v140 = vunpack.c.l.b16 %v102
    %v141 = vunpack.c.l.b16 %v103
    %v142 = vunpack.c.l.b16 %v104
    %v143 = vunpack.c.l.b16 %v105
    %v144 = vunpack.c.l.b16 %v106
    %v145 = vunpack.c.l.b16 %v107
    %v146 = vunpack.c.l.b16 %v108
    %v147 = vunpack.c.l.b16 %v109
    %v148 = vunpack.c.l.b16 %v110
    %v149 = vunpack.c.l.b16 %v111
    %v150 = vunpack.c.l.b16 %v112
    %v151 = vpack.c.b16 %v136, %v135
    %v152 = vpack.c.b16 %v138, %v137
    %v153 = vpack.c.b16 %v140, %v139
    %v154 = vpack.c.b16 %v142, %v141
    %v155 = vpack.c.b16 %v144, %v143
    %v156 = vpack.c.b16 %v146, %v145
    %v157 = vpack.c.b16 %v148, %v147
    %v158 = vpack.c.b16 %v150, %v149
    %167 = vmatprep.subr.bf16.mxu0 0
    %168 = vmatpush1.bf16.msra.mxu0 %v151
    %169 = vmatprep.subr.bf16.mxu0 0
    %170 = vmatpush1.bf16.msra.mxu0 %v152
    %171 = vmatprep.subr.bf16.mxu0 0
    %172 = vmatpush1.bf16.msra.mxu0 %v153
    %173 = vmatprep.subr.bf16.mxu0 0
    %174 = vmatpush1.bf16.msra.mxu0 %v154
    %175 = vmatprep.subr.bf16.mxu0 0
    %176 = vmatpush1.bf16.msra.mxu0 %v155
    %177 = vmatprep.subr.bf16.mxu0 0
    %178 = vmatpush1.bf16.msra.mxu0 %v156
    %179 = vmatprep.subr.bf16.mxu0 0
    %180 = vmatpush1.bf16.msra.mxu0 %v157
    %181 = vmatprep.subr.bf16.mxu0 0
    %182 = vmatpush1.bf16.msra.mxu0 %v158
    %183 = vmatprep.subr.bf16.mxu0 0
    %184 = vmatpush1.bf16.msra.mxu0 0
    %185 = vmatprep.subr.bf16.mxu0 0
    %186 = vmatpush1.bf16.msra.mxu0 0
    %187 = vmatprep.subr.bf16.mxu0 0
    %188 = vmatpush1.bf16.msra.mxu0 0
    %189 = vmatprep.subr.bf16.mxu0 0
    %190 = vmatpush1.bf16.msra.mxu0 0
    %191 = vmatprep.subr.bf16.mxu0 0
    %192 = vmatpush1.bf16.msra.mxu0 0
    %193 = vmatprep.subr.bf16.mxu0 0
    %194 = vmatpush1.bf16.msra.mxu0 0
    %195 = vmatprep.subr.bf16.mxu0 0
    %196 = vmatpush1.bf16.msra.mxu0 0
    %197 = vmatprep.subr.bf16.mxu0 0
    %198 = vmatpush1.bf16.msra.mxu0 0
    %199 = vmatprep.mubr.bf16.mxu0 0
    %200 = vmatmul.mubr.bf16.gmra.mrb[0].mxu0 %v117
    %v201 = vpop.f32.mrb[0].mxu0
    %v202 = vadd.f32 0.0, %v201
    %v203 = vpop.f32.mrb[0].mxu0
    %v204 = vpop.f32.mrb[0].mxu0
    %v205 = vadd.f32 0.0, %v204
    %v206 = vpop.f32.mrb[0].mxu0
    %207 = vdwg.mxu0
    %v208 = vadd.f32 %v93, %v202
    %v209 = vadd.f32 %v94, %v205
    %vm210 = vcmask 261120
    %211 = vst.msk [vmem:[#allocation2] sm:$0xff] %vm210, %v208
    %212 = vst.msk [vmem:[#allocation2 + $0x8] sm:$0xff] %vm210, %v209
    // Predicated region
    $region46: #{_lambda_.41} parent=1 // pred_check
      %p213 = pneg %p86
    $region47: #{_lambda_.41} parent=1 // pred_check_branch
      %215 = sbr.rel (%p213) target = $region49
    $region48: #{_lambda_.41} parent=1 // pred_region
      %v216 = vld [vmem:[#allocation2] sm:$0xff]
      %v217 = vld [vmem:[#allocation2 + $0x8] sm:$0xff]
      %v218 = vld [vmem:[#allocation8] sm:$0xf]
      %v219 = vld [vmem:[#allocation8 + $0x4] sm:$0xf]
      %v220 = vunpack.c.l.bf16 %v218
      %v221 = vunpack.c.l.bf16 %v219
      %v222 = vadd.f32 %v216, %v220
      %v223 = vadd.f32 %v217, %v221
      %v224 = vsel %vm210, %v222, 0.0
      %225 = vadd.xlane.f32.xlu0 %v224
      %v226 = vpop.xlane.xlu0 %225
      %v227 = vsel %vm210, %v223, 0.0
      %228 = vadd.xlane.f32.xlu0 %v227
      %v229 = vpop.xlane.xlu0 %228
      %v230 = vrcp.pop 32.0
      %v231 = vmul.f32 %v226, %v230
      %v232 = vmul.f32 %v229, %v230
      %v233 = vsub.f32 %v222, %v231
      %v234 = vsub.f32 %v223, %v232
      %v235 = vmul.f32 %v233, %v233
      %v236 = vmul.f32 %v234, %v234
      %v237 = vsel %vm210, %v235, 0.0
      %238 = vadd.xlane.f32.xlu0 %v237
      %v239 = vpop.xlane.xlu0 %238
      %v240 = vsel %vm210, %v236, 0.0
      %241 = vadd.xlane.f32.xlu0 %v240
      %v242 = vpop.xlane.xlu0 %241
      %v243 = vmul.f32 %v239, %v230
      %v244 = vmul.f32 %v242, %v230
      %v245 = vadd.f32 %v243, 1e-05
      %v246 = vadd.f32 %v244, 1e-05
      %v247 = vrsqrt.pop %v245
      %v248 = vrsqrt.pop %v246
      %v249 = vmul.f32 %v233, %v247
      %v250 = vmul.f32 %v234, %v248
      %v251 = vld [vmem:[#allocation9] sm:$0x1]
      %v253 = vlaneseq
      %v254 = vshrl.u32 %v253, 7
      %v255 = vsub.s32 0, %v254
      %v256 = vrot.slane %v251, %v255
      %v258 = vmul.f32 %v249, %v256
      %v259 = vmul.f32 %v250, %v256
      %v260 = vld [vmem:[#allocation11] sm:$0x1]
      %v262 = vlaneseq
      %v263 = vshrl.u32 %v262, 7
      %v264 = vsub.s32 0, %v263
      %v265 = vrot.slane %v260, %v264
      %v267 = vadd.f32 %v258, %v265
      %v268 = vadd.f32 %v259, %v265
      %v269 = vpack.c.bf16 %v268, %v267
      %v271 = vunpack.c.l.b16 %v269
      %v272 = vunpack.c.h.b16 %v269
      %v273 = vpack.c.b16 %v271, %v271
      %v274 = vpack.c.b16 %v272, %v272
      %vm277 = vcmask 257024
      %278 = vst.msk [vmem:[#allocation12] sm:$0xf] %vm277, %v273
      %279 = vst.msk [vmem:[#allocation12 + $0x4] sm:$0xf] %vm277, %v274
    $region49: #{_lambda_.41} parent=1 // pred_fallthru
      _
    // Predicated region
    $region50: #{_lambda_.41} parent=1 // pred_check
      _
    $region51: #{_lambda_.41} parent=1 // pred_check_branch
      %281 = sbr.rel (0) target = $region53
    $region52: #{_lambda_.41} parent=1 // pred_region
      %s283 = ssub.s32 128, 128
      %284 = vsyncadd [#allocation5], %s283
      %s285 = sshll.u32 [#allocation12], 4
      %s286 = int_to_ptr.vmem [resolvable:$true] %s285
      %291 = dma.vmem_to_hbm [thread:$0]  %s286, 128, %s5, [#allocation5], 64, 64, 4
    $region53: #{_lambda_.41} parent=1 // pred_fallthru
      _
    // Predicated region
    $region54: #{_lambda_.41} parent=1 // pred_check
      _
    $region55: #{_lambda_.41} parent=1 // pred_check_branch
      %293 = sbr.rel (0) target = $region57
    $region56: #{_lambda_.41} parent=1 // pred_region
      %294 = dma.done [#allocation5], 128
    $region57: #{_lambda_.41} parent=1 // pred_fallthru
      _
    %295 = vsyncpa [#allocation4], 1
    %296 = vsyncpa [#allocation7], 1
    %297 = vsyncpa [#allocation10], 1
    %298 = vsyncpa [#allocation5], 1

// kernel: _lambda_.32
$region0: #{_lambda_.32}
  #allocation0 [shape = 'u32[]', space=smem, size = 0x4, offset = 0x4, fixed_abs, tag = 'smem constant byte address 0x4 - core index']
  #allocation1 [shape = 'u32[144,128]{1,0:T(1,128)}', space=vmem, size = 0x12000, scoped, tag = 'internal scratch']
  #allocation2 [shape = 'f32[16,128]{1,0:T(8,128)}', space=vmem, size = 0x2000, scoped, tag = 'scratch operand']
  %s0 = inlined_call_operand.hbm [shape: bf16[16,128], index: 0, kind: input, shape index: {}]
  %s1 = inlined_call_operand.hbm [shape: bf16[128,128], index: 1, kind: input, shape index: {}]
  %s2 = inlined_call_operand.hbm [shape: f32[1,128], index: 2, kind: input, shape index: {}]
  %s3 = inlined_call_operand.hbm [shape: bf16[16,128], index: 3, kind: output, shape index: {}]
  %s4 = sld [smem:[#allocation0]]
  $region42: #{_lambda_.32} parent=0
    _
  %s6 = ssub.s32 1, %s4
  %s7 = scalar_select 0, %s6, %s4
  $region1: #{_lambda_.32} parent=0
    #allocation3 [shape = 'u8[4096]{0}', space=vmem, size = 0x1000, scoped, tag = 'input window, operand 0, single buffered']
    #allocation4 [shape = 's32[1]{0}', space=sflag, size = 0x4, scoped, tag = 'scoped memory for _lambda_.32']
    #allocation5 [shape = 's32[1]{0}', space=sflag, size = 0x4, scoped, tag = 'scoped memory for _lambda_.32']
    #allocation6 [shape = 'u8[32768]{0}', space=vmem, size = 0x8000, scoped, tag = 'input window, operand 1, single buffered']
    #allocation7 [shape = 's32[1]{0}', space=sflag, size = 0x4, scoped, tag = 'scoped memory for _lambda_.32']
    #allocation8 [shape = 'u8[512]{0}', space=vmem, size = 0x400, scoped, tag = 'input window, operand 2, single buffered']
    #allocation9 [shape = 'u8[4096]{0}', space=vmem, size = 0x1000, scoped, tag = 'output window, operand 0, single buffered']
    %8 = vsyncpa [#allocation4], 0
    %9 = vsyncpa [#allocation7], 0
    %10 = vsyncpa [#allocation5], 0
    // Predicated region
    $region2: #{_lambda_.32} parent=1 // pred_check
      _
    $region3: #{_lambda_.32} parent=1 // pred_check_branch
      %12 = sbr.rel (0) target = $region5
    $region4: #{_lambda_.32} parent=1 // pred_region
      %s14 = ssub.s32 128, 128
      %15 = vsyncadd [#allocation4], %s14
      %s16 = sshll.u32 [#allocation3], 4
      %s17 = int_to_ptr.vmem [resolvable:$true] %s16
      %22 = dma.hbm_to_vmem [thread:$0]  %s0, 128, %s17, [#allocation4], 64, 64, 4
    $region5: #{_lambda_.32} parent=1 // pred_fallthru
      _
    // Predicated region
    $region6: #{_lambda_.32} parent=1 // pred_check
      _
    $region7: #{_lambda_.32} parent=1 // pred_check_branch
      %24 = sbr.rel (0) target = $region9
    $region8: #{_lambda_.32} parent=1 // pred_region
      %s26 = ssub.s32 1024, 1024
      %27 = vsyncadd [#allocation7], %s26
      %s28 = sshll.u32 [#allocation6], 4
      %s29 = int_to_ptr.vmem [resolvable:$true] %s28
      %34 = dma.hbm_to_vmem [thread:$0]  %s1, 1024, %s29, [#allocation7], 64, 64, 4
    $region9: #{_lambda_.32} parent=1 // pred_fallthru
      _
    // Predicated region
    $region10: #{_lambda_.32} parent=1 // pred_check
      _
    $region11: #{_lambda_.32} parent=1 // pred_check_branch
      %36 = sbr.rel (0) target = $region13
    $region12: #{_lambda_.32} parent=1 // pred_region
      %s38 = ssub.s32 16, 16
      %39 = vsyncadd [#allocation7], %s38
      %s41 = sshll.u32 [#allocation8], 4
      %s42 = int_to_ptr.vmem [resolvable:$true] %s41
      %44 = dma.hbm_to_vmem [thread:$0]  %s2, 16, %s42, [#allocation7]
    $region13: #{_lambda_.32} parent=1 // pred_fallthru
      _
    // Predicated region
    $region14: #{_lambda_.32} parent=1 // pred_check
      _
    $region15: #{_lambda_.32} parent=1 // pred_check_branch
      %46 = sbr.rel (0) target = $region17
    $region16: #{_lambda_.32} parent=1 // pred_region
      %47 = dma.done [#allocation4], 128
    $region17: #{_lambda_.32} parent=1 // pred_fallthru
      _
    // Predicated region
    $region18: #{_lambda_.32} parent=1 // pred_check
      _
    $region19: #{_lambda_.32} parent=1 // pred_check_branch
      %49 = sbr.rel (0) target = $region21
    $region20: #{_lambda_.32} parent=1 // pred_region
      %50 = dma.done [#allocation7], 1024
    $region21: #{_lambda_.32} parent=1 // pred_fallthru
      _
    // Predicated region
    $region22: #{_lambda_.32} parent=1 // pred_check
      _
    $region23: #{_lambda_.32} parent=1 // pred_check_branch
      %52 = sbr.rel (0) target = $region25
    $region24: #{_lambda_.32} parent=1 // pred_region
      %53 = dma.done [#allocation7], 16
    $region25: #{_lambda_.32} parent=1 // pred_fallthru
      _
    %p55 = scmp.eq.s32.totalorder 0, 0
    // Predicated region
    $region26: #{_lambda_.32} parent=1 // pred_check
      %p56 = pneg %p55
    $region27: #{_lambda_.32} parent=1 // pred_check_branch
      %58 = sbr.rel (%p56) target = $region29
    $region28: #{_lambda_.32} parent=1 // pred_region
      %59 = vst [vmem:[#allocation2] sm:$0xff] 0.0
      %60 = vst [vmem:[#allocation2 + $0x8] sm:$0xff] 0.0
    $region29: #{_lambda_.32} parent=1 // pred_fallthru
      _
    %v61 = vld [vmem:[#allocation2] sm:$0xff]
    %v62 = vld [vmem:[#allocation2 + $0x8] sm:$0xff]
    %v63 = vld [vmem:[#allocation3] sm:$0xf]
    %v64 = vld [vmem:[#allocation3 + $0x4] sm:$0xf]
    %v65 = vld [vmem:[#allocation6] sm:$0xf]
    %v66 = vld [vmem:[#allocation6 + $0x4] sm:$0xf]
    %v67 = vld [vmem:[#allocation6 + $0x8] sm:$0xf]
    %v68 = vld [vmem:[#allocation6 + $0xc] sm:$0xf]
    %v69 = vld [vmem:[#allocation6 + $0x10] sm:$0xf]
    %v70 = vld [vmem:[#allocation6 + $0x14] sm:$0xf]
    %v71 = vld [vmem:[#allocation6 + $0x18] sm:$0xf]
    %v72 = vld [vmem:[#allocation6 + $0x1c] sm:$0xf]
    %v73 = vld [vmem:[#allocation6 + $0x20] sm:$0xf]
    %v74 = vld [vmem:[#allocation6 + $0x24] sm:$0xf]
    %v75 = vld [vmem:[#allocation6 + $0x28] sm:$0xf]
    %v76 = vld [vmem:[#allocation6 + $0x2c] sm:$0xf]
    %v77 = vld [vmem:[#allocation6 + $0x30] sm:$0xf]
    %v78 = vld [vmem:[#allocation6 + $0x34] sm:$0xf]
    %v79 = vld [vmem:[#allocation6 + $0x38] sm:$0xf]
    %v80 = vld [vmem:[#allocation6 + $0x3c] sm:$0xf]
    %v83 = vunpack.c.l.b16 %v63
    %v84 = vunpack.c.l.b16 %v64
    %v85 = vpack.c.b16 %v84, %v83
    %v103 = vunpack.c.l.b16 %v65
    %v104 = vunpack.c.l.b16 %v66
    %v105 = vunpack.c.l.b16 %v67
    %v106 = vunpack.c.l.b16 %v68
    %v107 = vunpack.c.l.b16 %v69
    %v108 = vunpack.c.l.b16 %v70
    %v109 = vunpack.c.l.b16 %v71
    %v110 = vunpack.c.l.b16 %v72
    %v111 = vunpack.c.l.b16 %v73
    %v112 = vunpack.c.l.b16 %v74
    %v113 = vunpack.c.l.b16 %v75
    %v114 = vunpack.c.l.b16 %v76
    %v115 = vunpack.c.l.b16 %v77
    %v116 = vunpack.c.l.b16 %v78
    %v117 = vunpack.c.l.b16 %v79
    %v118 = vunpack.c.l.b16 %v80
    %v119 = vpack.c.b16 %v104, %v103
    %v120 = vpack.c.b16 %v106, %v105
    %v121 = vpack.c.b16 %v108, %v107
    %v122 = vpack.c.b16 %v110, %v109
    %v123 = vpack.c.b16 %v112, %v111
    %v124 = vpack.c.b16 %v114, %v113
    %v125 = vpack.c.b16 %v116, %v115
    %v126 = vpack.c.b16 %v118, %v117
    %135 = vmatprep.subr.bf16.mxu0 0
    %136 = vmatpush1.bf16.msra.mxu0 %v119
    %137 = vmatprep.subr.bf16.mxu0 0
    %138 = vmatpush1.bf16.msra.mxu0 %v120
    %139 = vmatprep.subr.bf16.mxu0 0
    %140 = vmatpush1.bf16.msra.mxu0 %v121
    %141 = vmatprep.subr.bf16.mxu0 0
    %142 = vmatpush1.bf16.msra.mxu0 %v122
    %143 = vmatprep.subr.bf16.mxu0 0
    %144 = vmatpush1.bf16.msra.mxu0 %v123
    %145 = vmatprep.subr.bf16.mxu0 0
    %146 = vmatpush1.bf16.msra.mxu0 %v124
    %147 = vmatprep.subr.bf16.mxu0 0
    %148 = vmatpush1.bf16.msra.mxu0 %v125
    %149 = vmatprep.subr.bf16.mxu0 0
    %150 = vmatpush1.bf16.msra.mxu0 %v126
    %151 = vmatprep.subr.bf16.mxu0 0
    %152 = vmatpush1.bf16.msra.mxu0 0
    %153 = vmatprep.subr.bf16.mxu0 0
    %154 = vmatpush1.bf16.msra.mxu0 0
    %155 = vmatprep.subr.bf16.mxu0 0
    %156 = vmatpush1.bf16.msra.mxu0 0
    %157 = vmatprep.subr.bf16.mxu0 0
    %158 = vmatpush1.bf16.msra.mxu0 0
    %159 = vmatprep.subr.bf16.mxu0 0
    %160 = vmatpush1.bf16.msra.mxu0 0
    %161 = vmatprep.subr.bf16.mxu0 0
    %162 = vmatpush1.bf16.msra.mxu0 0
    %163 = vmatprep.subr.bf16.mxu0 0
    %164 = vmatpush1.bf16.msra.mxu0 0
    %165 = vmatprep.subr.bf16.mxu0 0
    %166 = vmatpush1.bf16.msra.mxu0 0
    %167 = vmatprep.mubr.bf16.mxu0 0
    %168 = vmatmul.mubr.bf16.gmra.mrb[0].mxu0 %v85
    %v169 = vpop.f32.mrb[0].mxu0
    %v170 = vadd.f32 0.0, %v169
    %v171 = vpop.f32.mrb[0].mxu0
    %v172 = vpop.f32.mrb[0].mxu0
    %v173 = vadd.f32 0.0, %v172
    %v174 = vpop.f32.mrb[0].mxu0
    %175 = vdwg.mxu0
    %v176 = vadd.f32 %v61, %v170
    %v177 = vadd.f32 %v62, %v173
    %178 = vst [vmem:[#allocation2] sm:$0xff] %v176
    %179 = vst [vmem:[#allocation2 + $0x8] sm:$0xff] %v177
    // Predicated region
    $region30: #{_lambda_.32} parent=1 // pred_check
      %p180 = pneg %p55
    $region31: #{_lambda_.32} parent=1 // pred_check_branch
      %182 = sbr.rel (%p180) target = $region33
    $region32: #{_lambda_.32} parent=1 // pred_region
      %v183 = vld [vmem:[#allocation2] sm:$0xff]
      %v184 = vld [vmem:[#allocation2 + $0x8] sm:$0xff]
      %v185 = vld [vmem:[#allocation8] sm:$0x1]
      %v187 = vlaneseq
      %v188 = vshrl.u32 %v187, 7
      %v189 = vsub.s32 0, %v188
      %v190 = vrot.slane %v185, %v189
      %v192 = vadd.f32 %v183, %v190
      %v193 = vadd.f32 %v184, %v190
      %v194 = vmax.f32 %v192, 0.0
      %v195 = vmax.f32 %v193, 0.0
      %v196 = vpack.c.bf16 %v195, %v194
      %v198 = vunpack.c.l.b16 %v196
      %v199 = vunpack.c.h.b16 %v196
      %v200 = vpack.c.b16 %v198, %v198
      %v201 = vpack.c.b16 %v199, %v199
      %204 = vst [vmem:[#allocation9] sm:$0xf] %v200
      %205 = vst [vmem:[#allocation9 + $0x4] sm:$0xf] %v201
    $region33: #{_lambda_.32} parent=1 // pred_fallthru
      _
    // Predicated region
    $region34: #{_lambda_.32} parent=1 // pred_check
      _
    $region35: #{_lambda_.32} parent=1 // pred_check_branch
      %207 = sbr.rel (0) target = $region37
    $region36: #{_lambda_.32} parent=1 // pred_region
      %s209 = ssub.s32 128, 128
      %210 = vsyncadd [#allocation5], %s209
      %s211 = sshll.u32 [#allocation9], 4
      %s212 = int_to_ptr.vmem [resolvable:$true] %s211
      %217 = dma.vmem_to_hbm [thread:$0]  %s212, 128, %s3, [#allocation5], 64, 64, 4
    $region37: #{_lambda_.32} parent=1 // pred_fallthru
      _
    // Predicated region
    $region38: #{_lambda_.32} parent=1 // pred_check
      _
    $region39: #{_lambda_.32} parent=1 // pred_check_branch
      %219 = sbr.rel (0) target = $region41
    $region40: #{_lambda_.32} parent=1 // pred_region
      %220 = dma.done [#allocation5], 128
    $region41: #{_lambda_.32} parent=1 // pred_fallthru
      _
    %221 = vsyncpa [#allocation4], 1
    %222 = vsyncpa [#allocation7], 1
    %223 = vsyncpa [#allocation5], 1

// kernel: _lambda_.33
$region0: #{_lambda_.33}
  #allocation0 [shape = 'u32[]', space=smem, size = 0x4, offset = 0x4, fixed_abs, tag = 'smem constant byte address 0x4 - core index']
  #allocation1 [shape = 'u32[144,128]{1,0:T(1,128)}', space=vmem, size = 0x12000, scoped, tag = 'internal scratch']
  #allocation2 [shape = 'f32[16,32]{1,0:T(8,128)}', space=vmem, size = 0x2000, scoped, tag = 'scratch operand']
  %s0 = inlined_call_operand.hbm [shape: bf16[16,128], index: 0, kind: input, shape index: {}]
  %s1 = inlined_call_operand.hbm [shape: bf16[128,32], index: 1, kind: input, shape index: {}]
  %s2 = inlined_call_operand.hbm [shape: f32[1,32], index: 2, kind: input, shape index: {}]
  %s3 = inlined_call_operand.hbm [shape: bf16[16,32], index: 3, kind: input, shape index: {}]
  %s4 = inlined_call_operand.hbm [shape: f32[1,32], index: 4, kind: input, shape index: {}]
  %s5 = inlined_call_operand.hbm [shape: f32[1,32], index: 5, kind: input, shape index: {}]
  %s6 = inlined_call_operand.hbm [shape: bf16[16,32], index: 6, kind: output, shape index: {}]
  %s7 = sld [smem:[#allocation0]]
  $region66: #{_lambda_.33} parent=0
    _
  %s9 = ssub.s32 1, %s7
  %s10 = scalar_select 0, %s9, %s7
  $region1: #{_lambda_.33} parent=0
    #allocation3 [shape = 'u8[4096]{0}', space=vmem, size = 0x1000, scoped, tag = 'input window, operand 0, single buffered']
    #allocation4 [shape = 's32[1]{0}', space=sflag, size = 0x4, scoped, tag = 'scoped memory for _lambda_.33']
    #allocation5 [shape = 's32[1]{0}', space=sflag, size = 0x4, scoped, tag = 'scoped memory for _lambda_.33']
    #allocation6 [shape = 'u8[32768]{0}', space=vmem, size = 0x8000, scoped, tag = 'input window, operand 1, single buffered']
    #allocation7 [shape = 's32[1]{0}', space=sflag, size = 0x4, scoped, tag = 'scoped memory for _lambda_.33']
    #allocation8 [shape = 'u8[512]{0}', space=vmem, size = 0x400, scoped, tag = 'input window, operand 2, single buffered']
    #allocation9 [shape = 'u8[4096]{0}', space=vmem, size = 0x1000, scoped, tag = 'input window, operand 3, single buffered']
    #allocation10 [shape = 's32[1]{0}', space=sflag, size = 0x4, scoped, tag = 'scoped memory for _lambda_.33']
    #allocation11 [shape = 'u8[512]{0}', space=vmem, size = 0x400, scoped, tag = 'input window, operand 4, single buffered']
    #allocation12 [shape = 'u8[512]{0}', space=vmem, size = 0x400, scoped, tag = 'input window, operand 5, single buffered']
    #allocation13 [shape = 's32[1]{0}', space=sflag, size = 0x4, scoped, tag = 'scoped memory for _lambda_.33']
    #allocation14 [shape = 'u8[4096]{0}', space=vmem, size = 0x1000, scoped, tag = 'output window, operand 0, single buffered']
    %11 = vsyncpa [#allocation4], 0
    %12 = vsyncpa [#allocation7], 0
    %13 = vsyncpa [#allocation10], 0
    %14 = vsyncpa [#allocation13], 0
    %15 = vsyncpa [#allocation5], 0
    // Predicated region
    $region2: #{_lambda_.33} parent=1 // pred_check
      _
    $region3: #{_lambda_.33} parent=1 // pred_check_branch
      %17 = sbr.rel (0) target = $region5
    $region4: #{_lambda_.33} parent=1 // pred_region
      %s19 = ssub.s32 128, 128
      %20 = vsyncadd [#allocation4], %s19
      %s21 = sshll.u32 [#allocation3], 4
      %s22 = int_to_ptr.vmem [resolvable:$true] %s21
      %27 = dma.hbm_to_vmem [thread:$0]  %s0, 128, %s22, [#allocation4], 64, 64, 4
    $region5: #{_lambda_.33} parent=1 // pred_fallthru
      _
    // Predicated region
    $region6: #{_lambda_.33} parent=1 // pred_check
      _
    $region7: #{_lambda_.33} parent=1 // pred_check_branch
      %29 = sbr.rel (0) target = $region9
    $region8: #{_lambda_.33} parent=1 // pred_region
      %s31 = ssub.s32 1024, 1024
      %32 = vsyncadd [#allocation7], %s31
      %s33 = sshll.u32 [#allocation6], 4
      %s34 = int_to_ptr.vmem [resolvable:$true] %s33
      %39 = dma.hbm_to_vmem [thread:$0]  %s1, 1024, %s34, [#allocation7], 64, 64, 4
    $region9: #{_lambda_.33} parent=1 // pred_fallthru
      _
    // Predicated region
    $region10: #{_lambda_.33} parent=1 // pred_check
      _
    $region11: #{_lambda_.33} parent=1 // pred_check_branch
      %41 = sbr.rel (0) target = $region13
    $region12: #{_lambda_.33} parent=1 // pred_region
      %s43 = ssub.s32 16, 16
      %44 = vsyncadd [#allocation7], %s43
      %s46 = sshll.u32 [#allocation8], 4
      %s47 = int_to_ptr.vmem [resolvable:$true] %s46
      %49 = dma.hbm_to_vmem [thread:$0]  %s2, 16, %s47, [#allocation7]
    $region13: #{_lambda_.33} parent=1 // pred_fallthru
      _
    // Predicated region
    $region14: #{_lambda_.33} parent=1 // pred_check
      _
    $region15: #{_lambda_.33} parent=1 // pred_check_branch
      %51 = sbr.rel (0) target = $region17
    $region16: #{_lambda_.33} parent=1 // pred_region
      %s53 = ssub.s32 128, 128
      %54 = vsyncadd [#allocation10], %s53
      %s55 = sshll.u32 [#allocation9], 4
      %s56 = int_to_ptr.vmem [resolvable:$true] %s55
      %61 = dma.hbm_to_vmem [thread:$0]  %s3, 128, %s56, [#allocation10], 64, 64, 4
    $region17: #{_lambda_.33} parent=1 // pred_fallthru
      _
    // Predicated region
    $region18: #{_lambda_.33} parent=1 // pred_check
      _
    $region19: #{_lambda_.33} parent=1 // pred_check_branch
      %63 = sbr.rel (0) target = $region21
    $region20: #{_lambda_.33} parent=1 // pred_region
      %s65 = ssub.s32 16, 16
      %66 = vsyncadd [#allocation10], %s65
      %s68 = sshll.u32 [#allocation11], 4
      %s69 = int_to_ptr.vmem [resolvable:$true] %s68
      %71 = dma.hbm_to_vmem [thread:$0]  %s4, 16, %s69, [#allocation10]
    $region21: #{_lambda_.33} parent=1 // pred_fallthru
      _
    // Predicated region
    $region22: #{_lambda_.33} parent=1 // pred_check
      _
    $region23: #{_lambda_.33} parent=1 // pred_check_branch
      %73 = sbr.rel (0) target = $region25
    $region24: #{_lambda_.33} parent=1 // pred_region
      %s75 = ssub.s32 16, 16
      %76 = vsyncadd [#allocation13], %s75
      %s78 = sshll.u32 [#allocation12], 4
      %s79 = int_to_ptr.vmem [resolvable:$true] %s78
      %81 = dma.hbm_to_vmem [thread:$0]  %s5, 16, %s79, [#allocation13]
    $region25: #{_lambda_.33} parent=1 // pred_fallthru
      _
    // Predicated region
    $region26: #{_lambda_.33} parent=1 // pred_check
      _
    $region27: #{_lambda_.33} parent=1 // pred_check_branch
      %83 = sbr.rel (0) target = $region29
    $region28: #{_lambda_.33} parent=1 // pred_region
      %84 = dma.done [#allocation4], 128
    $region29: #{_lambda_.33} parent=1 // pred_fallthru
      _
    // Predicated region
    $region30: #{_lambda_.33} parent=1 // pred_check
      _
    $region31: #{_lambda_.33} parent=1 // pred_check_branch
      %86 = sbr.rel (0) target = $region33
    $region32: #{_lambda_.33} parent=1 // pred_region
      %87 = dma.done [#allocation7], 1024
    $region33: #{_lambda_.33} parent=1 // pred_fallthru
      _
    // Predicated region
    $region34: #{_lambda_.33} parent=1 // pred_check
      _
    $region35: #{_lambda_.33} parent=1 // pred_check_branch
      %89 = sbr.rel (0) target = $region37
    $region36: #{_lambda_.33} parent=1 // pred_region
      %90 = dma.done [#allocation7], 16
    $region37: #{_lambda_.33} parent=1 // pred_fallthru
      _
    // Predicated region
    $region38: #{_lambda_.33} parent=1 // pred_check
      _
    $region39: #{_lambda_.33} parent=1 // pred_check_branch
      %92 = sbr.rel (0) target = $region41
    $region40: #{_lambda_.33} parent=1 // pred_region
      %93 = dma.done [#allocation10], 128
    $region41: #{_lambda_.33} parent=1 // pred_fallthru
      _
    // Predicated region
    $region42: #{_lambda_.33} parent=1 // pred_check
      _
    $region43: #{_lambda_.33} parent=1 // pred_check_branch
      %95 = sbr.rel (0) target = $region45
    $region44: #{_lambda_.33} parent=1 // pred_region
      %96 = dma.done [#allocation10], 16
    $region45: #{_lambda_.33} parent=1 // pred_fallthru
      _
    // Predicated region
    $region46: #{_lambda_.33} parent=1 // pred_check
      _
    $region47: #{_lambda_.33} parent=1 // pred_check_branch
      %98 = sbr.rel (0) target = $region49
    $region48: #{_lambda_.33} parent=1 // pred_region
      %99 = dma.done [#allocation13], 16
    $region49: #{_lambda_.33} parent=1 // pred_fallthru
      _
    %p101 = scmp.eq.s32.totalorder 0, 0
    // Predicated region
    $region50: #{_lambda_.33} parent=1 // pred_check
      %p102 = pneg %p101
    $region51: #{_lambda_.33} parent=1 // pred_check_branch
      %104 = sbr.rel (%p102) target = $region53
    $region52: #{_lambda_.33} parent=1 // pred_region
      %vm105 = vcmask 261120
      %106 = vst.msk [vmem:[#allocation2] sm:$0xff] %vm105, 0.0
      %107 = vst.msk [vmem:[#allocation2 + $0x8] sm:$0xff] %vm105, 0.0
    $region53: #{_lambda_.33} parent=1 // pred_fallthru
      _
    %v108 = vld [vmem:[#allocation2] sm:$0xff]
    %v109 = vld [vmem:[#allocation2 + $0x8] sm:$0xff]
    %v110 = vld [vmem:[#allocation3] sm:$0xf]
    %v111 = vld [vmem:[#allocation3 + $0x4] sm:$0xf]
    %v112 = vld [vmem:[#allocation6] sm:$0xf]
    %v113 = vld [vmem:[#allocation6 + $0x4] sm:$0xf]
    %v114 = vld [vmem:[#allocation6 + $0x8] sm:$0xf]
    %v115 = vld [vmem:[#allocation6 + $0xc] sm:$0xf]
    %v116 = vld [vmem:[#allocation6 + $0x10] sm:$0xf]
    %v117 = vld [vmem:[#allocation6 + $0x14] sm:$0xf]
    %v118 = vld [vmem:[#allocation6 + $0x18] sm:$0xf]
    %v119 = vld [vmem:[#allocation6 + $0x1c] sm:$0xf]
    %v120 = vld [vmem:[#allocation6 + $0x20] sm:$0xf]
    %v121 = vld [vmem:[#allocation6 + $0x24] sm:$0xf]
    %v122 = vld [vmem:[#allocation6 + $0x28] sm:$0xf]
    %v123 = vld [vmem:[#allocation6 + $0x2c] sm:$0xf]
    %v124 = vld [vmem:[#allocation6 + $0x30] sm:$0xf]
    %v125 = vld [vmem:[#allocation6 + $0x34] sm:$0xf]
    %v126 = vld [vmem:[#allocation6 + $0x38] sm:$0xf]
    %v127 = vld [vmem:[#allocation6 + $0x3c] sm:$0xf]
    %v130 = vunpack.c.l.b16 %v110
    %v131 = vunpack.c.l.b16 %v111
    %v132 = vpack.c.b16 %v131, %v130
    %v150 = vunpack.c.l.b16 %v112
    %v151 = vunpack.c.l.b16 %v113
    %v152 = vunpack.c.l.b16 %v114
    %v153 = vunpack.c.l.b16 %v115
    %v154 = vunpack.c.l.b16 %v116
    %v155 = vunpack.c.l.b16 %v117
    %v156 = vunpack.c.l.b16 %v118
    %v157 = vunpack.c.l.b16 %v119
    %v158 = vunpack.c.l.b16 %v120
    %v159 = vunpack.c.l.b16 %v121
    %v160 = vunpack.c.l.b16 %v122
    %v161 = vunpack.c.l.b16 %v123
    %v162 = vunpack.c.l.b16 %v124
    %v163 = vunpack.c.l.b16 %v125
    %v164 = vunpack.c.l.b16 %v126
    %v165 = vunpack.c.l.b16 %v127
    %v166 = vpack.c.b16 %v151, %v150
    %v167 = vpack.c.b16 %v153, %v152
    %v168 = vpack.c.b16 %v155, %v154
    %v169 = vpack.c.b16 %v157, %v156
    %v170 = vpack.c.b16 %v159, %v158
    %v171 = vpack.c.b16 %v161, %v160
    %v172 = vpack.c.b16 %v163, %v162
    %v173 = vpack.c.b16 %v165, %v164
    %182 = vmatprep.subr.bf16.mxu0 0
    %183 = vmatpush1.bf16.msra.mxu0 %v166
    %184 = vmatprep.subr.bf16.mxu0 0
    %185 = vmatpush1.bf16.msra.mxu0 %v167
    %186 = vmatprep.subr.bf16.mxu0 0
    %187 = vmatpush1.bf16.msra.mxu0 %v168
    %188 = vmatprep.subr.bf16.mxu0 0
    %189 = vmatpush1.bf16.msra.mxu0 %v169
    %190 = vmatprep.subr.bf16.mxu0 0
    %191 = vmatpush1.bf16.msra.mxu0 %v170
    %192 = vmatprep.subr.bf16.mxu0 0
    %193 = vmatpush1.bf16.msra.mxu0 %v171
    %194 = vmatprep.subr.bf16.mxu0 0
    %195 = vmatpush1.bf16.msra.mxu0 %v172
    %196 = vmatprep.subr.bf16.mxu0 0
    %197 = vmatpush1.bf16.msra.mxu0 %v173
    %198 = vmatprep.subr.bf16.mxu0 0
    %199 = vmatpush1.bf16.msra.mxu0 0
    %200 = vmatprep.subr.bf16.mxu0 0
    %201 = vmatpush1.bf16.msra.mxu0 0
    %202 = vmatprep.subr.bf16.mxu0 0
    %203 = vmatpush1.bf16.msra.mxu0 0
    %204 = vmatprep.subr.bf16.mxu0 0
    %205 = vmatpush1.bf16.msra.mxu0 0
    %206 = vmatprep.subr.bf16.mxu0 0
    %207 = vmatpush1.bf16.msra.mxu0 0
    %208 = vmatprep.subr.bf16.mxu0 0
    %209 = vmatpush1.bf16.msra.mxu0 0
    %210 = vmatprep.subr.bf16.mxu0 0
    %211 = vmatpush1.bf16.msra.mxu0 0
    %212 = vmatprep.subr.bf16.mxu0 0
    %213 = vmatpush1.bf16.msra.mxu0 0
    %214 = vmatprep.mubr.bf16.mxu0 0
    %215 = vmatmul.mubr.bf16.gmra.mrb[0].mxu0 %v132
    %v216 = vpop.f32.mrb[0].mxu0
    %v217 = vadd.f32 0.0, %v216
    %v218 = vpop.f32.mrb[0].mxu0
    %v219 = vpop.f32.mrb[0].mxu0
    %v220 = vadd.f32 0.0, %v219
    %v221 = vpop.f32.mrb[0].mxu0
    %222 = vdwg.mxu0
    %v223 = vadd.f32 %v108, %v217
    %v224 = vadd.f32 %v109, %v220
    %vm225 = vcmask 261120
    %226 = vst.msk [vmem:[#allocation2] sm:$0xff] %vm225, %v223
    %227 = vst.msk [vmem:[#allocation2 + $0x8] sm:$0xff] %vm225, %v224
    // Predicated region
    $region54: #{_lambda_.33} parent=1 // pred_check
      %p228 = pneg %p101
    $region55: #{_lambda_.33} parent=1 // pred_check_branch
      %230 = sbr.rel (%p228) target = $region57
    $region56: #{_lambda_.33} parent=1 // pred_region
      %v231 = vld [vmem:[#allocation2] sm:$0xff]
      %v232 = vld [vmem:[#allocation2 + $0x8] sm:$0xff]
      %v233 = vld [vmem:[#allocation8] sm:$0x1]
      %v235 = vlaneseq
      %v236 = vshrl.u32 %v235, 7
      %v237 = vsub.s32 0, %v236
      %v238 = vrot.slane %v233, %v237
      %v240 = vadd.f32 %v231, %v238
      %v241 = vadd.f32 %v232, %v238
      %v242 = vld [vmem:[#allocation9] sm:$0xf]
      %v243 = vld [vmem:[#allocation9 + $0x4] sm:$0xf]
      %v244 = vunpack.c.l.bf16 %v242
      %v245 = vunpack.c.l.bf16 %v243
      %v246 = vadd.f32 %v240, %v244
      %v247 = vadd.f32 %v241, %v245
      %v248 = vsel %vm225, %v246, 0.0
      %249 = vadd.xlane.f32.xlu0 %v248
      %v250 = vpop.xlane.xlu0 %249
      %v251 = vsel %vm225, %v247, 0.0
      %252 = vadd.xlane.f32.xlu0 %v251
      %v253 = vpop.xlane.xlu0 %252
      %v254 = vrcp.pop 32.0
      %v255 = vmul.f32 %v250, %v254
      %v256 = vmul.f32 %v253, %v254
      %v257 = vsub.f32 %v246, %v255
      %v258 = vsub.f32 %v247, %v256
      %v259 = vmul.f32 %v257, %v257
      %v260 = vmul.f32 %v258, %v258
      %v261 = vsel %vm225, %v259, 0.0
      %262 = vadd.xlane.f32.xlu0 %v261
      %v263 = vpop.xlane.xlu0 %262
      %v264 = vsel %vm225, %v260, 0.0
      %265 = vadd.xlane.f32.xlu0 %v264
      %v266 = vpop.xlane.xlu0 %265
      %v267 = vmul.f32 %v263, %v254
      %v268 = vmul.f32 %v266, %v254
      %v269 = vadd.f32 %v267, 1e-05
      %v270 = vadd.f32 %v268, 1e-05
      %v271 = vrsqrt.pop %v269
      %v272 = vrsqrt.pop %v270
      %v273 = vmul.f32 %v257, %v271
      %v274 = vmul.f32 %v258, %v272
      %v275 = vld [vmem:[#allocation11] sm:$0x1]
      %v277 = vlaneseq
      %v278 = vshrl.u32 %v277, 7
      %v279 = vsub.s32 0, %v278
      %v280 = vrot.slane %v275, %v279
      %v282 = vmul.f32 %v273, %v280
      %v283 = vmul.f32 %v274, %v280
      %v284 = vld [vmem:[#allocation12] sm:$0x1]
      %v286 = vlaneseq
      %v287 = vshrl.u32 %v286, 7
      %v288 = vsub.s32 0, %v287
      %v289 = vrot.slane %v284, %v288
      %v291 = vadd.f32 %v282, %v289
      %v292 = vadd.f32 %v283, %v289
      %v293 = vpack.c.bf16 %v292, %v291
      %v295 = vunpack.c.l.b16 %v293
      %v296 = vunpack.c.h.b16 %v293
      %v297 = vpack.c.b16 %v295, %v295
      %v298 = vpack.c.b16 %v296, %v296
      %vm301 = vcmask 257024
      %302 = vst.msk [vmem:[#allocation14] sm:$0xf] %vm301, %v297
      %303 = vst.msk [vmem:[#allocation14 + $0x4] sm:$0xf] %vm301, %v298
    $region57: #{_lambda_.33} parent=1 // pred_fallthru
      _
    // Predicated region
    $region58: #{_lambda_.33} parent=1 // pred_check
      _
    $region59: #{_lambda_.33} parent=1 // pred_check_branch
      %305 = sbr.rel (0) target = $region61
    $region60: #{_lambda_.33} parent=1 // pred_region
      %s307 = ssub.s32 128, 128
      %308 = vsyncadd [#allocation5], %s307
      %s309 = sshll.u32 [#allocation14], 4
      %s310 = int_to_ptr.vmem [resolvable:$true] %s309
      %315 = dma.vmem_to_hbm [thread:$0]  %s310, 128, %s6, [#allocation5], 64, 64, 4
    $region61: #{_lambda_.33} parent=1 // pred_fallthru
      _
    // Predicated region
    $region62: #{_lambda_.33} parent=1 // pred_check
      _
    $region63: #{_lambda_.33} parent=1 // pred_check_branch
      %317 = sbr.rel (0) target = $region65
    $region64: #{_lambda_.33} parent=1 // pred_region
      %318 = dma.done [#allocation5], 128
    $region65: #{_lambda_.33} parent=1 // pred_fallthru
      _
    %319 = vsyncpa [#allocation4], 1
    %320 = vsyncpa [#allocation7], 1
    %321 = vsyncpa [#allocation10], 1
    %322 = vsyncpa [#allocation13], 1
    %323 = vsyncpa [#allocation5], 1

// kernel: _lambda_.57
$region0: #{_lambda_.57}
  #allocation0 [shape = 'u32[]', space=smem, size = 0x4, offset = 0x4, fixed_abs, tag = 'smem constant byte address 0x4 - core index']
  #allocation1 [shape = 'u32[144,128]{1,0:T(1,128)}', space=vmem, size = 0x12000, scoped, tag = 'internal scratch']
  #allocation2 [shape = 'f32[16,128]{1,0:T(8,128)}', space=vmem, size = 0x2000, scoped, tag = 'scratch operand']
  %s0 = inlined_call_operand.hbm [shape: bf16[16,128], index: 0, kind: input, shape index: {}]
  %s1 = inlined_call_operand.hbm [shape: bf16[128,128], index: 1, kind: input, shape index: {}]
  %s2 = inlined_call_operand.hbm [shape: f32[16,128], index: 2, kind: output, shape index: {}]
  %s3 = sld [smem:[#allocation0]]
  $region34: #{_lambda_.57} parent=0
    _
  %s5 = ssub.s32 1, %s3
  %s6 = scalar_select 0, %s5, %s3
  $region1: #{_lambda_.57} parent=0
    #allocation3 [shape = 'u8[4096]{0}', space=vmem, size = 0x1000, scoped, tag = 'input window, operand 0, single buffered']
    #allocation4 [shape = 's32[1]{0}', space=sflag, size = 0x4, scoped, tag = 'scoped memory for _lambda_.57']
    #allocation5 [shape = 's32[1]{0}', space=sflag, size = 0x4, scoped, tag = 'scoped memory for _lambda_.57']
    #allocation6 [shape = 'u8[32768]{0}', space=vmem, size = 0x8000, scoped, tag = 'input window, operand 1, single buffered']
    #allocation7 [shape = 's32[1]{0}', space=sflag, size = 0x4, scoped, tag = 'scoped memory for _lambda_.57']
    #allocation8 [shape = 'u8[8192]{0}', space=vmem, size = 0x2000, scoped, tag = 'output window, operand 0, single buffered']
    %7 = vsyncpa [#allocation4], 0
    %8 = vsyncpa [#allocation7], 0
    %9 = vsyncpa [#allocation5], 0
    // Predicated region
    $region2: #{_lambda_.57} parent=1 // pred_check
      _
    $region3: #{_lambda_.57} parent=1 // pred_check_branch
      %11 = sbr.rel (0) target = $region5
    $region4: #{_lambda_.57} parent=1 // pred_region
      %s13 = ssub.s32 128, 128
      %14 = vsyncadd [#allocation4], %s13
      %s15 = sshll.u32 [#allocation3], 4
      %s16 = int_to_ptr.vmem [resolvable:$true] %s15
      %21 = dma.hbm_to_vmem [thread:$0]  %s0, 128, %s16, [#allocation4], 64, 64, 4
    $region5: #{_lambda_.57} parent=1 // pred_fallthru
      _
    // Predicated region
    $region6: #{_lambda_.57} parent=1 // pred_check
      _
    $region7: #{_lambda_.57} parent=1 // pred_check_branch
      %23 = sbr.rel (0) target = $region9
    $region8: #{_lambda_.57} parent=1 // pred_region
      %s25 = ssub.s32 1024, 1024
      %26 = vsyncadd [#allocation7], %s25
      %s27 = sshll.u32 [#allocation6], 4
      %s28 = int_to_ptr.vmem [resolvable:$true] %s27
      %33 = dma.hbm_to_vmem [thread:$0]  %s1, 1024, %s28, [#allocation7], 64, 64, 4
    $region9: #{_lambda_.57} parent=1 // pred_fallthru
      _
    // Predicated region
    $region10: #{_lambda_.57} parent=1 // pred_check
      _
    $region11: #{_lambda_.57} parent=1 // pred_check_branch
      %35 = sbr.rel (0) target = $region13
    $region12: #{_lambda_.57} parent=1 // pred_region
      %36 = dma.done [#allocation4], 128
    $region13: #{_lambda_.57} parent=1 // pred_fallthru
      _
    // Predicated region
    $region14: #{_lambda_.57} parent=1 // pred_check
      _
    $region15: #{_lambda_.57} parent=1 // pred_check_branch
      %38 = sbr.rel (0) target = $region17
    $region16: #{_lambda_.57} parent=1 // pred_region
      %39 = dma.done [#allocation7], 1024
    $region17: #{_lambda_.57} parent=1 // pred_fallthru
      _
    %p41 = scmp.eq.s32.totalorder 0, 0
    // Predicated region
    $region18: #{_lambda_.57} parent=1 // pred_check
      %p42 = pneg %p41
    $region19: #{_lambda_.57} parent=1 // pred_check_branch
      %44 = sbr.rel (%p42) target = $region21
    $region20: #{_lambda_.57} parent=1 // pred_region
      %45 = vst [vmem:[#allocation2] sm:$0xff] 0.0
      %46 = vst [vmem:[#allocation2 + $0x8] sm:$0xff] 0.0
    $region21: #{_lambda_.57} parent=1 // pred_fallthru
      _
    %v47 = vld [vmem:[#allocation2] sm:$0xff]
    %v48 = vld [vmem:[#allocation2 + $0x8] sm:$0xff]
    %v49 = vld [vmem:[#allocation3] sm:$0xf]
    %v50 = vld [vmem:[#allocation3 + $0x4] sm:$0xf]
    %v51 = vld [vmem:[#allocation6] sm:$0xf]
    %v52 = vld [vmem:[#allocation6 + $0x4] sm:$0xf]
    %v53 = vld [vmem:[#allocation6 + $0x8] sm:$0xf]
    %v54 = vld [vmem:[#allocation6 + $0xc] sm:$0xf]
    %v55 = vld [vmem:[#allocation6 + $0x10] sm:$0xf]
    %v56 = vld [vmem:[#allocation6 + $0x14] sm:$0xf]
    %v57 = vld [vmem:[#allocation6 + $0x18] sm:$0xf]
    %v58 = vld [vmem:[#allocation6 + $0x1c] sm:$0xf]
    %v59 = vld [vmem:[#allocation6 + $0x20] sm:$0xf]
    %v60 = vld [vmem:[#allocation6 + $0x24] sm:$0xf]
    %v61 = vld [vmem:[#allocation6 + $0x28] sm:$0xf]
    %v62 = vld [vmem:[#allocation6 + $0x2c] sm:$0xf]
    %v63 = vld [vmem:[#allocation6 + $0x30] sm:$0xf]
    %v64 = vld [vmem:[#allocation6 + $0x34] sm:$0xf]
    %v65 = vld [vmem:[#allocation6 + $0x38] sm:$0xf]
    %v66 = vld [vmem:[#allocation6 + $0x3c] sm:$0xf]
    %v69 = vunpack.c.l.b16 %v49
    %v70 = vunpack.c.l.b16 %v50
    %v71 = vpack.c.b16 %v70, %v69
    %v89 = vunpack.c.l.b16 %v51
    %v90 = vunpack.c.l.b16 %v52
    %v91 = vunpack.c.l.b16 %v53
    %v92 = vunpack.c.l.b16 %v54
    %v93 = vunpack.c.l.b16 %v55
    %v94 = vunpack.c.l.b16 %v56
    %v95 = vunpack.c.l.b16 %v57
    %v96 = vunpack.c.l.b16 %v58
    %v97 = vunpack.c.l.b16 %v59
    %v98 = vunpack.c.l.b16 %v60
    %v99 = vunpack.c.l.b16 %v61
    %v100 = vunpack.c.l.b16 %v62
    %v101 = vunpack.c.l.b16 %v63
    %v102 = vunpack.c.l.b16 %v64
    %v103 = vunpack.c.l.b16 %v65
    %v104 = vunpack.c.l.b16 %v66
    %v105 = vpack.c.b16 %v90, %v89
    %v106 = vpack.c.b16 %v92, %v91
    %v107 = vpack.c.b16 %v94, %v93
    %v108 = vpack.c.b16 %v96, %v95
    %v109 = vpack.c.b16 %v98, %v97
    %v110 = vpack.c.b16 %v100, %v99
    %v111 = vpack.c.b16 %v102, %v101
    %v112 = vpack.c.b16 %v104, %v103
    %121 = vmatprep.subr.bf16.mxu0 0
    %122 = vmatpush1.bf16.msra.mxu0 %v105
    %123 = vmatprep.subr.bf16.mxu0 0
    %124 = vmatpush1.bf16.msra.mxu0 %v106
    %125 = vmatprep.subr.bf16.mxu0 0
    %126 = vmatpush1.bf16.msra.mxu0 %v107
    %127 = vmatprep.subr.bf16.mxu0 0
    %128 = vmatpush1.bf16.msra.mxu0 %v108
    %129 = vmatprep.subr.bf16.mxu0 0
    %130 = vmatpush1.bf16.msra.mxu0 %v109
    %131 = vmatprep.subr.bf16.mxu0 0
    %132 = vmatpush1.bf16.msra.mxu0 %v110
    %133 = vmatprep.subr.bf16.mxu0 0
    %134 = vmatpush1.bf16.msra.mxu0 %v111
    %135 = vmatprep.subr.bf16.mxu0 0
    %136 = vmatpush1.bf16.msra.mxu0 %v112
    %137 = vmatprep.subr.bf16.mxu0 0
    %138 = vmatpush1.bf16.msra.mxu0 0
    %139 = vmatprep.subr.bf16.mxu0 0
    %140 = vmatpush1.bf16.msra.mxu0 0
    %141 = vmatprep.subr.bf16.mxu0 0
    %142 = vmatpush1.bf16.msra.mxu0 0
    %143 = vmatprep.subr.bf16.mxu0 0
    %144 = vmatpush1.bf16.msra.mxu0 0
    %145 = vmatprep.subr.bf16.mxu0 0
    %146 = vmatpush1.bf16.msra.mxu0 0
    %147 = vmatprep.subr.bf16.mxu0 0
    %148 = vmatpush1.bf16.msra.mxu0 0
    %149 = vmatprep.subr.bf16.mxu0 0
    %150 = vmatpush1.bf16.msra.mxu0 0
    %151 = vmatprep.subr.bf16.mxu0 0
    %152 = vmatpush1.bf16.msra.mxu0 0
    %153 = vmatprep.mubr.bf16.mxu0 0
    %154 = vmatmul.mubr.bf16.gmra.mrb[0].mxu0 %v71
    %v155 = vpop.f32.mrb[0].mxu0
    %v156 = vadd.f32 0.0, %v155
    %v157 = vpop.f32.mrb[0].mxu0
    %v158 = vpop.f32.mrb[0].mxu0
    %v159 = vadd.f32 0.0, %v158
    %v160 = vpop.f32.mrb[0].mxu0
    %161 = vdwg.mxu0
    %v162 = vadd.f32 %v47, %v156
    %v163 = vadd.f32 %v48, %v159
    %164 = vst [vmem:[#allocation2] sm:$0xff] %v162
    %165 = vst [vmem:[#allocation2 + $0x8] sm:$0xff] %v163
    // Predicated region
    $region22: #{_lambda_.57} parent=1 // pred_check
      %p166 = pneg %p41
    $region23: #{_lambda_.57} parent=1 // pred_check_branch
      %168 = sbr.rel (%p166) target = $region25
    $region24: #{_lambda_.57} parent=1 // pred_region
      %v169 = vld [vmem:[#allocation2] sm:$0xff]
      %v170 = vld [vmem:[#allocation2 + $0x8] sm:$0xff]
      %171 = vst [vmem:[#allocation8] sm:$0xff] %v169
      %172 = vst [vmem:[#allocation8 + $0x8] sm:$0xff] %v170
    $region25: #{_lambda_.57} parent=1 // pred_fallthru
      _
    // Predicated region
    $region26: #{_lambda_.57} parent=1 // pred_check
      _
    $region27: #{_lambda_.57} parent=1 // pred_check_branch
      %174 = sbr.rel (0) target = $region29
    $region28: #{_lambda_.57} parent=1 // pred_region
      %s176 = ssub.s32 256, 256
      %177 = vsyncadd [#allocation5], %s176
      %s178 = sshll.u32 [#allocation8], 4
      %s179 = int_to_ptr.vmem [resolvable:$true] %s178
      %184 = dma.vmem_to_hbm [thread:$0]  %s179, 256, %s2, [#allocation5], 128, 128, 8
    $region29: #{_lambda_.57} parent=1 // pred_fallthru
      _
    // Predicated region
    $region30: #{_lambda_.57} parent=1 // pred_check
      _
    $region31: #{_lambda_.57} parent=1 // pred_check_branch
      %186 = sbr.rel (0) target = $region33
    $region32: #{_lambda_.57} parent=1 // pred_region
      %187 = dma.done [#allocation5], 256
    $region33: #{_lambda_.57} parent=1 // pred_fallthru
      _
    %188 = vsyncpa [#allocation4], 1
    %189 = vsyncpa [#allocation7], 1
    %190 = vsyncpa [#allocation5], 1

// kernel: _lambda_.44
$region0: #{_lambda_.44}
  #allocation0 [shape = 'u32[]', space=smem, size = 0x4, offset = 0x4, fixed_abs, tag = 'smem constant byte address 0x4 - core index']
  #allocation1 [shape = 'u32[144,128]{1,0:T(1,128)}', space=vmem, size = 0x12000, scoped, tag = 'internal scratch']
  #allocation2 [shape = 'f32[8,1]{1,0:T(8,128)}', space=vmem, size = 0x1000, scoped, tag = 'scratch operand']
  #allocation3 [shape = 'f32[8,1]{1,0:T(8,128)}', space=vmem, size = 0x1000, scoped, tag = 'scratch operand']
  #allocation4 [shape = 'f32[8,8]{1,0:T(8,128)}', space=vmem, size = 0x1000, scoped, tag = 'scratch operand']
  %s0 = inlined_call_operand.hbm [shape: bf16[1,8,8,8], index: 0, kind: input, shape index: {}]
  %s1 = inlined_call_operand.hbm [shape: bf16[2,8,8,8], index: 1, kind: input, shape index: {}, may-alias: {1,2}]
  %s2 = inlined_call_operand.hbm [shape: bf16[2,8,8,8], index: 2, kind: input, shape index: {}, may-alias: {1,2}]
  %s3 = inlined_call_operand.hbm [shape: bf16[8,8,8], index: 3, kind: output, shape index: {}]
  %s4 = sld [smem:[#allocation0]]
  $region65: #{_lambda_.44} parent=0
    _
  %s6 = ssub.s32 1, %s4
  %s7 = scalar_select 0, %s6, %s4
  $region1: #{_lambda_.44} parent=0
    #allocation5 [shape = 'u8[4096]{0}', space=vmem, size = 0x1000, scoped, tag = 'input window, operand 0']
    #allocation6 [shape = 's32[2]{0}', space=sflag, size = 0x8, scoped, tag = 'scoped memory for _lambda_.44']
    #allocation7 [shape = 's32[2]{0}', space=sflag, size = 0x8, scoped, tag = 'scoped memory for _lambda_.44']
    #allocation8 [shape = 'u8[4096]{0}', space=vmem, size = 0x1000, scoped, tag = 'input window, operand 1']
    #allocation9 [shape = 's32[2]{0}', space=sflag, size = 0x8, scoped, tag = 'scoped memory for _lambda_.44']
    #allocation10 [shape = 'u8[4096]{0}', space=vmem, size = 0x1000, scoped, tag = 'input window, operand 2']
    #allocation11 [shape = 'u8[4096]{0}', space=vmem, size = 0x1000, scoped, tag = 'output window, operand 0']
    %8 = vsyncpa [#allocation6], 0
    %s9 = scalar_lea.sflag [#allocation6], 1
    %10 = vsyncpa %s9, 0
    %11 = vsyncpa [#allocation9], 0
    %s12 = scalar_lea.sflag [#allocation9], 1
    %13 = vsyncpa %s12, 0
    %14 = vsyncpa [#allocation7], 0
    %s15 = scalar_lea.sflag [#allocation7], 1
    %16 = vsyncpa %s15, 0
    loop: start=0, step=1, limit=10
    $region2: #{_lambda_.44} parent=1 // loop_pre_header
      _
    $region3: #{_lambda_.44} parent=1 // loop_header
      %s18 = sphi 0, %s22
      %p19 = scmp.ge.s32.totalorder %s18, 10
      %s25 = sphi 0, %s44
      %s26 = sphi 0, %s40
      %s27 = sphi 0, %s36
      %s28 = sphi 0, %s25
      %s29 = sphi 0, %s26
      %s30 = sphi 0, %s27
      %s31 = sphi 0, %s28
      %s32 = sphi 0, %s29
      %s33 = sphi 0, %s30
      %s49 = sphi 0, %s51
      %s52 = sphi 0, %s49
      %s53 = sphi 0, %s52
      %s69 = sphi 0, %s53
      %s77 = sphi 0, %s79
      %s80 = sphi 0, %s77
      %s81 = sphi 0, %s80
      %s97 = sphi 0, %s81
      %s105 = sphi 0, %s107
      %s108 = sphi 0, %s105
      %s109 = sphi 0, %s108
      %s125 = sphi 0, %s109
      %s133 = sphi 0, %s135
      %s136 = sphi 0, %s133
      %s137 = sphi 0, %s136
      %s153 = sphi 0, %s137
    $region4: #{_lambda_.44} parent=1 // loop_header_branch
      %21 = sbr.rel (%p19) target = $region8
    $region5: #{_lambda_.44} parent=1 // loop_body
      %s23 = ssub.s32 %s18, 1
      %s24 = ssub.s32 %s18, 2
      %s34 = sadd.s32 1, %s27
      %p35 = scmp.ge.s32.totalorder %s34, 1
      %s36 = scalar_select %p35, 0, %s34
      %s37 = sadd.s32 1, %s26
      %s38 = scalar_select %p35, %s37, %s26
      %p39 = scmp.ge.s32.totalorder %s38, 1
      %s40 = scalar_select %p39, 0, %s38
      %s41 = sadd.s32 1, %s25
      %s42 = scalar_select %p39, %s41, %s25
      %p43 = scmp.ge.s32.totalorder %s42, 8
      %s44 = scalar_select %p43, 0, %s42
      %s45 = ssub.s32 %s25, %s44
      %s46 = ssub.s32 %s26, %s40
      %s47 = sor.u32 %s45, %s46
      %p48 = scmp.eq.s32.totalorder %s47, 0
      %s50 = sadd.s32 %s49, 1
      %s51 = scalar_select %p48, %s49, %s50
      %p54 = pneg %p48
      %p55 = scmp.eq.s32.totalorder %s18, 7
      %p56 = por %p54, %p55
      %p57 = scmp.ne.s32.totalorder %s49, %s52
      %p58 = scmp.eq.s32.totalorder %s18, 0
      %p59 = por %p57, %p58
      %p60 = scmp.ne.s32.totalorder %s49, %s52
      %p61 = scmp.eq.s32.totalorder %s23, 7
      %p62 = por %p60, %p61
      %p63 = scmp.ne.s32.totalorder %s52, %s53
      %p64 = scmp.eq.s32.totalorder %s23, 0
      %p65 = por %p63, %p64
      %p66 = scmp.ne.s32.totalorder %s52, %s53
      %p67 = scmp.eq.s32.totalorder %s24, 7
      %p68 = por %p66, %p67
      %p70 = scmp.ne.s32.totalorder %s53, %s69
      %p71 = scmp.eq.s32.totalorder %s24, 0
      %p72 = por %p70, %p71
      %s73 = ssub.s32 %s25, %s44
      %s74 = ssub.s32 %s27, %s36
      %s75 = sor.u32 %s73, %s74
      %p76 = scmp.eq.s32.totalorder %s75, 0
      %s78 = sadd.s32 %s77, 1
      %s79 = scalar_select %p76, %s77, %s78
      %p82 = pneg %p76
      %p83 = scmp.eq.s32.totalorder %s18, 7
      %p84 = por %p82, %p83
      %p85 = scmp.ne.s32.totalorder %s77, %s80
      %p86 = scmp.eq.s32.totalorder %s18, 0
      %p87 = por %p85, %p86
      %p88 = scmp.ne.s32.totalorder %s77, %s80
      %p89 = scmp.eq.s32.totalorder %s23, 7
      %p90 = por %p88, %p89
      %p91 = scmp.ne.s32.totalorder %s80, %s81
      %p92 = scmp.eq.s32.totalorder %s23, 0
      %p93 = por %p91, %p92
      %p94 = scmp.ne.s32.totalorder %s80, %s81
      %p95 = scmp.eq.s32.totalorder %s24, 7
      %p96 = por %p94, %p95
      %p98 = scmp.ne.s32.totalorder %s81, %s97
      %p99 = scmp.eq.s32.totalorder %s24, 0
      %p100 = por %p98, %p99
      %s101 = ssub.s32 %s25, %s44
      %s102 = ssub.s32 %s27, %s36
      %s103 = sor.u32 %s101, %s102
      %p104 = scmp.eq.s32.totalorder %s103, 0
      %s106 = sadd.s32 %s105, 1
      %s107 = scalar_select %p104, %s105, %s106
      %p110 = pneg %p104
      %p111 = scmp.eq.s32.totalorder %s18, 7
      %p112 = por %p110, %p111
      %p113 = scmp.ne.s32.totalorder %s105, %s108
      %p114 = scmp.eq.s32.totalorder %s18, 0
      %p115 = por %p113, %p114
      %p116 = scmp.ne.s32.totalorder %s105, %s108
      %p117 = scmp.eq.s32.totalorder %s23, 7
      %p118 = por %p116, %p117
      %p119 = scmp.ne.s32.totalorder %s108, %s109
      %p120 = scmp.eq.s32.totalorder %s23, 0
      %p121 = por %p119, %p120
      %p122 = scmp.ne.s32.totalorder %s108, %s109
      %p123 = scmp.eq.s32.totalorder %s24, 7
      %p124 = por %p122, %p123
      %p126 = scmp.ne.s32.totalorder %s109, %s125
      %p127 = scmp.eq.s32.totalorder %s24, 0
      %p128 = por %p126, %p127
      %s129 = ssub.s32 %s25, %s44
      %s130 = ssub.s32 %s26, %s40
      %s131 = sor.u32 %s129, %s130
      %p132 = scmp.eq.s32.totalorder %s131, 0
      %s134 = sadd.s32 %s133, 1
      %s135 = scalar_select %p132, %s133, %s134
      %p138 = pneg %p132
      %p139 = scmp.eq.s32.totalorder %s18, 7
      %p140 = por %p138, %p139
      %p141 = scmp.ne.s32.totalorder %s133, %s136
      %p142 = scmp.eq.s32.totalorder %s18, 0
      %p143 = por %p141, %p142
      %p144 = scmp.ne.s32.totalorder %s133, %s136
      %p145 = scmp.eq.s32.totalorder %s23, 7
      %p146 = por %p144, %p145
      %p147 = scmp.ne.s32.totalorder %s136, %s137
      %p148 = scmp.eq.s32.totalorder %s23, 0
      %p149 = por %p147, %p148
      %p150 = scmp.ne.s32.totalorder %s136, %s137
      %p151 = scmp.eq.s32.totalorder %s24, 7
      %p152 = por %p150, %p151
      %p154 = scmp.ne.s32.totalorder %s137, %s153
      %p155 = scmp.eq.s32.totalorder %s24, 0
      %p156 = por %p154, %p155
      %p157 = scmp.le.s32.totalorder 1, %s18
      %p158 = scmp.lt.s32.totalorder %s18, 9
      %p159 = pnand %p157, %p158
      %p160 = pneg %p159
      // Predicated region
      $region9: #{_lambda_.44} parent=5 // pred_check
        _
      $region10: #{_lambda_.44} parent=5 // pred_check_branch
        %162 = sbr.rel (%p159) target = $region12
      $region11: #{_lambda_.44} parent=5 // pred_region
        %s163 = ssub.s32 %s18, 1
      $region12: #{_lambda_.44} parent=5 // pred_fallthru
        _
      %p164 = scmp.lt.s32.totalorder %s18, 8
      // Predicated region
      $region13: #{_lambda_.44} parent=5 // pred_check
        %p165 = pneg %p164
      $region14: #{_lambda_.44} parent=5 // pred_check_branch
        %167 = sbr.rel (%p165) target = $region16
      $region15: #{_lambda_.44} parent=5 // pred_region
        // Predicated region
        $region17: #{_lambda_.44} parent=15 // pred_check
          %p168 = pneg %p59
        $region18: #{_lambda_.44} parent=15 // pred_check_branch
          %170 = sbr.rel (%p168) target = $region20
        $region19: #{_lambda_.44} parent=15 // pred_region
          %s171 = sand.u32 %s49, 1
          %s172 = scalar_lea.sflag [#allocation6], %s171
          %s173 = sand.u32 %s49, 1
          %s174 = smul.addr %s173, 4
          %s175 = scalar_lea.vmem [#allocation5], %s174
          %s177 = ssub.s32 64, 64
          %178 = vsyncadd %s172, %s177
          %s179 = sadd.s32 %s26, %s25
          %s180 = smul.addr %s179, 64
          %s181 = scalar_lea.hbm %s0, %s180
          %s183 = sshll.u32 %s175, 4
          %s184 = int_to_ptr.vmem [resolvable:$true] %s183
          %186 = dma.hbm_to_vmem [thread:$0]  %s181, 64, %s184, %s172
        $region20: #{_lambda_.44} parent=15 // pred_fallthru
          _
        // Predicated region
        $region21: #{_lambda_.44} parent=15 // pred_check
          %p187 = pneg %p87
        $region22: #{_lambda_.44} parent=15 // pred_check_branch
          %189 = sbr.rel (%p187) target = $region24
        $region23: #{_lambda_.44} parent=15 // pred_region
          %s190 = sand.u32 %s18, 1
          %s191 = scalar_lea.sflag [#allocation9], %s190
          %s192 = sand.u32 %s77, 1
          %s193 = smul.addr %s192, 4
          %s194 = scalar_lea.vmem [#allocation8], %s193
          %s196 = ssub.s32 64, 64
          %197 = vsyncadd %s191, %s196
          %s198 = sadd.s32 %s27, %s25
          %s199 = smul.addr %s198, 64
          %s200 = scalar_lea.hbm %s1, %s199
          %s202 = sshll.u32 %s194, 4
          %s203 = int_to_ptr.vmem [resolvable:$true] %s202
          %205 = dma.hbm_to_vmem [thread:$0]  %s200, 64, %s203, %s191
        $region24: #{_lambda_.44} parent=15 // pred_fallthru
          _
        // Predicated region
        $region25: #{_lambda_.44} parent=15 // pred_check
          %p206 = pneg %p115
        $region26: #{_lambda_.44} parent=15 // pred_check_branch
          %208 = sbr.rel (%p206) target = $region28
        $region27: #{_lambda_.44} parent=15 // pred_region
          %s209 = sand.u32 %s18, 1
          %s210 = scalar_lea.sflag [#allocation9], %s209
          %s211 = sand.u32 %s105, 1
          %s212 = smul.addr %s211, 4
          %s213 = scalar_lea.vmem [#allocation10], %s212
          %s215 = ssub.s32 64, 64
          %216 = vsyncadd %s210, %s215
          %s217 = sadd.s32 %s27, %s25
          %s218 = sadd.s32 %s217, 8
          %s219 = smul.addr %s218, 64
          %s220 = scalar_lea.hbm %s2, %s219
          %s222 = sshll.u32 %s213, 4
          %s223 = int_to_ptr.vmem [resolvable:$true] %s222
          %225 = dma.hbm_to_vmem [thread:$0]  %s220, 64, %s223, %s210
        $region28: #{_lambda_.44} parent=15 // pred_fallthru
          _
      $region16: #{_lambda_.44} parent=5 // pred_fallthru
        _
      %p226 = scmp.le.s32.totalorder 1, %s18
      %p227 = scmp.lt.s32.totalorder %s18, 9
      %p228 = pnand %p226, %p227
      %p229 = pneg %p228
      // Predicated region
      $region29: #{_lambda_.44} parent=5 // pred_check
        _
      $region30: #{_lambda_.44} parent=5 // pred_check_branch
        %231 = sbr.rel (%p228) target = $region32
      $region31: #{_lambda_.44} parent=5 // pred_region
        %s232 = ssub.s32 %s18, 1
        %s233 = sand.u32 %s52, 1
        %s234 = scalar_lea.sflag [#allocation6], %s233
        %s235 = sand.u32 %s52, 1
        %s236 = smul.addr %s235, 4
        %s237 = scalar_lea.vmem [#allocation5], %s236
        // Predicated region
        $region33: #{_lambda_.44} parent=31 // pred_check
          %p238 = pneg %p65
        $region34: #{_lambda_.44} parent=31 // pred_check_branch
          %240 = sbr.rel (%p238) target = $region36
        $region35: #{_lambda_.44} parent=31 // pred_region
          %241 = dma.done %s234, 64
        $region36: #{_lambda_.44} parent=31 // pred_fallthru
          _
        %s242 = sand.u32 %s23, 1
        %s243 = scalar_lea.sflag [#allocation9], %s242
        %s244 = sand.u32 %s80, 1
        %s245 = smul.addr %s244, 4
        %s246 = scalar_lea.vmem [#allocation8], %s245
        // Predicated region
        $region37: #{_lambda_.44} parent=31 // pred_check
          %p247 = pneg %p93
        $region38: #{_lambda_.44} parent=31 // pred_check_branch
          %249 = sbr.rel (%p247) target = $region40
        $region39: #{_lambda_.44} parent=31 // pred_region
          %250 = dma.done %s243, 64
        $region40: #{_lambda_.44} parent=31 // pred_fallthru
          _
        %s251 = sand.u32 %s23, 1
        %s252 = scalar_lea.sflag [#allocation9], %s251
        %s253 = sand.u32 %s108, 1
        %s254 = smul.addr %s253, 4
        %s255 = scalar_lea.vmem [#allocation10], %s254
        // Predicated region
        $region41: #{_lambda_.44} parent=31 // pred_check
          %p256 = pneg %p121
        $region42: #{_lambda_.44} parent=31 // pred_check_branch
          %258 = sbr.rel (%p256) target = $region44
        $region43: #{_lambda_.44} parent=31 // pred_region
          %259 = dma.done %s252, 64
        $region44: #{_lambda_.44} parent=31 // pred_fallthru
          _
        %s260 = sand.u32 %s52, 1
        %s261 = scalar_lea.sflag [#allocation6], %s260
        %s262 = sand.u32 %s52, 1
        %s263 = smul.addr %s262, 4
        %s264 = scalar_lea.vmem [#allocation5], %s263
        %p265 = pneg %p65
        %p266 = pneg %p62
        %s267 = sand.u32 %s23, 1
        %s268 = scalar_lea.sflag [#allocation9], %s267
        %s269 = sand.u32 %s80, 1
        %s270 = smul.addr %s269, 4
        %s271 = scalar_lea.vmem [#allocation8], %s270
        %p272 = pneg %p93
        %p273 = pneg %p90
        %s274 = sand.u32 %s23, 1
        %s275 = scalar_lea.sflag [#allocation9], %s274
        %s276 = sand.u32 %s108, 1
        %s277 = smul.addr %s276, 4
        %s278 = scalar_lea.vmem [#allocation10], %s277
        %p279 = pneg %p121
        %p280 = pneg %p118
        %p281 = pneg %p149
        %p282 = pneg %p146
        %s283 = sand.u32 %s136, 1
        %s284 = scalar_lea.sflag [#allocation7], %s283
        %s285 = sand.u32 %s136, 1
        %s286 = smul.addr %s285, 4
        %s287 = scalar_lea.vmem [#allocation11], %s286
        %p289 = scmp.eq.s32.totalorder %s30, 0
        // Predicated region
        $region45: #{_lambda_.44} parent=31 // pred_check
          %p290 = pneg %p289
        $region46: #{_lambda_.44} parent=31 // pred_check_branch
          %292 = sbr.rel (%p290) target = $region48
        $region47: #{_lambda_.44} parent=31 // pred_region
          %vm293 = vcmask 7168
          %294 = vst.msk [vmem:[#allocation2] sm:$0xff] %vm293, -1e+30
          %295 = vst.msk [vmem:[#allocation3] sm:$0xff] %vm293, 0.0
          %vm296 = vcmask 64512
          %297 = vst.msk [vmem:[#allocation4] sm:$0xff] %vm296, 0.0
        $region48: #{_lambda_.44} parent=31 // pred_fallthru
          _
        %v298 = vld [vmem:[%s237] sm:$0xf]
        %v299 = vld [vmem:[%s246] sm:$0xf]
        %v300 = vld [vmem:[%s255] sm:$0xf]
        %vm301 = vcmask 64512
        %v303 = vsel %vm301, %v298, 0
        %v306 = vsel %vm301, %v299, 0
        %308 = vmatprep.subr.bf16.mxu0 0
        %309 = vmatpush1.bf16.xpose.msra.mxu0 %v306
        %310 = vmatprep.subr.bf16.mxu0 0
        %311 = vmatpush1.bf16.xpose.msra.mxu0 0
        %312 = vmatprep.subr.bf16.mxu0 0
        %313 = vmatpush1.bf16.xpose.msra.mxu0 0
        %314 = vmatprep.subr.bf16.mxu0 0
        %315 = vmatpush1.bf16.xpose.msra.mxu0 0
        %316 = vmatprep.subr.bf16.mxu0 0
        %317 = vmatpush1.bf16.xpose.msra.mxu0 0
        %318 = vmatprep.subr.bf16.mxu0 0
        %319 = vmatpush1.bf16.xpose.msra.mxu0 0
        %320 = vmatprep.subr.bf16.mxu0 0
        %321 = vmatpush1.bf16.xpose.msra.mxu0 0
        %322 = vmatprep.subr.bf16.mxu0 0
        %323 = vmatpush1.bf16.xpose.msra.mxu0 0
        %324 = vmatprep.subr.bf16.mxu0 0
        %325 = vmatpush1.bf16.xpose.msra.mxu0 0
        %326 = vmatprep.subr.bf16.mxu0 0
        %327 = vmatpush1.bf16.xpose.msra.mxu0 0
        %328 = vmatprep.subr.bf16.mxu0 0
        %329 = vmatpush1.bf16.xpose.msra.mxu0 0
        %330 = vmatprep.subr.bf16.mxu0 0
        %331 = vmatpush1.bf16.xpose.msra.mxu0 0
        %332 = vmatprep.subr.bf16.mxu0 0
        %333 = vmatpush1.bf16.xpose.msra.mxu0 0
        %334 = vmatprep.subr.bf16.mxu0 0
        %335 = vmatpush1.bf16.xpose.msra.mxu0 0
        %336 = vmatprep.subr.bf16.mxu0 0
        %337 = vmatpush1.bf16.xpose.msra.mxu0 0
        %338 = vmatprep.subr.bf16.mxu0 0
        %339 = vmatpush1.bf16.xpose.msra.mxu0 0
        %340 = vmatprep.mubr.bf16.mxu0 0
        %341 = vmatmul.mubr.bf16.gmra.mrb[0].mxu0 %v303
        %v342 = vpop.f32.mrb[0].mxu0
        %v343 = vadd.f32 0.0, %v342
        %v344 = vpop.f32.mrb[0].mxu0
        %v345 = vpop.f32.mrb[0].mxu0
        %v346 = vpop.f32.mrb[0].mxu0
        %347 = vdwg.mxu0
        %v348 = vmul.f32 %v343, 0.35355338
        %v349 = vld [vmem:[#allocation2] sm:$0xff]
        %v350 = vsel %vm301, %v348, -inf
        %351 = vmax.xlane.f32.xlu0 %v350
        %v352 = vpop.xlane.xlu0 %351
        %v353 = vmax.f32 %v349, %v352
        %v354 = vsub.f32 %v349, %v353
        %v355 = vmul.f32 %v354, 1.442695
        %v356 = vpow.pop %v355
        %358 = vset.pattern.permute.xlu0 0
        %359 = vperm.xlu0 %358, %v353
        %v360 = vpop.permute.xlu0 %359
        %v362 = vsub.f32 %v348, %v360
        %v363 = vmul.f32 %v362, 1.442695
        %v364 = vpow.pop %v363
        %v365 = vld [vmem:[#allocation3] sm:$0xff]
        %v366 = vmul.f32 %v356, %v365
        %v367 = vsel %vm301, %v364, 0.0
        %368 = vadd.xlane.f32.xlu0 %v367
        %v369 = vpop.xlane.xlu0 %368
        %v370 = vadd.f32 %v366, %v369
        %vm371 = vcmask 7168
        %372 = vst.msk [vmem:[#allocation3] sm:$0xff] %vm371, %v370
        %v373 = vld [vmem:[#allocation4] sm:$0xff]
        %375 = vset.pattern.permute.xlu0 0
        %376 = vperm.xlu0 %375, %v356
        %v377 = vpop.permute.xlu0 %376
        %v379 = vmul.f32 %v377, %v373
        %v380 = vpack.c.bf16 %v364, %v364
        %v382 = vsel %vm301, %v380, 0
        %vm384 = vcmask 1043456
        %v386 = vsel %vm384, %v300, 0
        %388 = vmatprep.subr.bf16.mxu0 0
        %389 = vmatpush1.bf16.msra.mxu0 %v386
        %390 = vmatprep.subr.bf16.mxu0 0
        %391 = vmatpush1.bf16.msra.mxu0 0
        %392 = vmatprep.subr.bf16.mxu0 0
        %393 = vmatpush1.bf16.msra.mxu0 0
        %394 = vmatprep.subr.bf16.mxu0 0
        %395 = vmatpush1.bf16.msra.mxu0 0
        %396 = vmatprep.subr.bf16.mxu0 0
        %397 = vmatpush1.bf16.msra.mxu0 0
        %398 = vmatprep.subr.bf16.mxu0 0
        %399 = vmatpush1.bf16.msra.mxu0 0
        %400 = vmatprep.subr.bf16.mxu0 0
        %401 = vmatpush1.bf16.msra.mxu0 0
        %402 = vmatprep.subr.bf16.mxu0 0
        %403 = vmatpush1.bf16.msra.mxu0 0
        %404 = vmatprep.subr.bf16.mxu0 0
        %405 = vmatpush1.bf16.msra.mxu0 0
        %406 = vmatprep.subr.bf16.mxu0 0
        %407 = vmatpush1.bf16.msra.mxu0 0
        %408 = vmatprep.subr.bf16.mxu0 0
        %409 = vmatpush1.bf16.msra.mxu0 0
        %410 = vmatprep.subr.bf16.mxu0 0
        %411 = vmatpush1.bf16.msra.mxu0 0
        %412 = vmatprep.subr.bf16.mxu0 0
        %413 = vmatpush1.bf16.msra.mxu0 0
        %414 = vmatprep.subr.bf16.mxu0 0
        %415 = vmatpush1.bf16.msra.mxu0 0
        %416 = vmatprep.subr.bf16.mxu0 0
        %417 = vmatpush1.bf16.msra.mxu0 0
        %418 = vmatprep.subr.bf16.mxu0 0
        %419 = vmatpush1.bf16.msra.mxu0 0
        %420 = vmatprep.mubr.bf16.mxu0 0
        %421 = vmatmul.mubr.bf16.gmra.mrb[0].mxu0 %v382
        %v422 = vpop.f32.mrb[0].mxu0
        %v423 = vadd.f32 0.0, %v422
        %v424 = vpop.f32.mrb[0].mxu0
        %v425 = vpop.f32.mrb[0].mxu0
        %v426 = vpop.f32.mrb[0].mxu0
        %427 = vdwg.mxu0
        %v428 = vadd.f32 %v379, %v423
        %429 = vst.msk [vmem:[#allocation4] sm:$0xff] %vm301, %v428
        %430 = vst.msk [vmem:[#allocation2] sm:$0xff] %vm371, %v353
        // Predicated region
        $region49: #{_lambda_.44} parent=31 // pred_check
          %p431 = pneg %p289
        $region50: #{_lambda_.44} parent=31 // pred_check_branch
          %433 = sbr.rel (%p431) target = $region52
        $region51: #{_lambda_.44} parent=31 // pred_region
          %v434 = vld [vmem:[#allocation3] sm:$0xff]
          %vm435 = vcmp.gt.f32.partialorder %v434, 0.0
          %v436 = vrcp.pop %v434
          %v437 = vsel %vm435, %v436, 0.0
          %v438 = vld [vmem:[#allocation4] sm:$0xff]
          %440 = vset.pattern.permute.xlu0 0
          %441 = vperm.xlu0 %440, %v437
          %v442 = vpop.permute.xlu0 %441
          %v444 = vmul.f32 %v438, %v442
          %v445 = vpack.c.bf16 %v444, %v444
          %vm446 = vcmask 60416
          %447 = vst.msk [vmem:[%s287] sm:$0xf] %vm446, %v445
        $region52: #{_lambda_.44} parent=31 // pred_fallthru
          _
        %s448 = sand.u32 %s136, 1
        %s449 = scalar_lea.sflag [#allocation7], %s448
        %s450 = sand.u32 %s136, 1
        %s451 = smul.addr %s450, 4
        %s452 = scalar_lea.vmem [#allocation11], %s451
        // Predicated region
        $region53: #{_lambda_.44} parent=31 // pred_check
          %p453 = pneg %p146
        $region54: #{_lambda_.44} parent=31 // pred_check_branch
          %455 = sbr.rel (%p453) target = $region56
        $region55: #{_lambda_.44} parent=31 // pred_region
          %s457 = ssub.s32 64, 64
          %458 = vsyncadd %s449, %s457
          %s459 = sadd.s32 %s29, %s28
          %s460 = smul.addr %s459, 64
          %s461 = scalar_lea.hbm %s3, %s460
          %s463 = sshll.u32 %s452, 4
          %s464 = int_to_ptr.vmem [resolvable:$true] %s463
          %466 = dma.vmem_to_hbm [thread:$0]  %s464, 64, %s461, %s449
        $region56: #{_lambda_.44} parent=31 // pred_fallthru
          _
      $region32: #{_lambda_.44} parent=5 // pred_fallthru
        _
      %p467 = scmp.le.s32.totalorder 2, %s18
      // Predicated region
      $region57: #{_lambda_.44} parent=5 // pred_check
        %p468 = pneg %p467
      $region58: #{_lambda_.44} parent=5 // pred_check_branch
        %470 = sbr.rel (%p468) target = $region60
      $region59: #{_lambda_.44} parent=5 // pred_region
        %s471 = ssub.s32 %s18, 2
        // Predicated region
        $region61: #{_lambda_.44} parent=59 // pred_check
          %p472 = pneg %p152
        $region62: #{_lambda_.44} parent=59 // pred_check_branch
          %474 = sbr.rel (%p472) target = $region64
        $region63: #{_lambda_.44} parent=59 // pred_region
          %s475 = sand.u32 %s137, 1
          %s476 = scalar_lea.sflag [#allocation7], %s475
          %s477 = sand.u32 %s137, 1
          %s478 = smul.addr %s477, 4
          %s479 = scalar_lea.vmem [#allocation11], %s478
          %480 = dma.done %s476, 64
        $region64: #{_lambda_.44} parent=59 // pred_fallthru
          _
      $region60: #{_lambda_.44} parent=5 // pred_fallthru
        _
    $region6: #{_lambda_.44} parent=1 // loop_footer
      %s22 = sadd.s32 1, %s18
    $region7: #{_lambda_.44} parent=1 // loop_footer_branch
      %17 = sbr.rel target = $region3
    $region8: #{_lambda_.44} parent=1 // loop_exit
      _
    %481 = vsyncpa [#allocation6], 1
    %s482 = scalar_lea.sflag [#allocation6], 1
    %483 = vsyncpa %s482, 1
    %484 = vsyncpa [#allocation9], 1
    %s485 = scalar_lea.sflag [#allocation9], 1
    %486 = vsyncpa %s485, 1
    %487 = vsyncpa [#allocation7], 1
    %s488 = scalar_lea.sflag [#allocation7], 1
    %489 = vsyncpa %s488, 1

</llo_original>
